<compile_context>
chip_gen: v7x
topology: tpu7x:2x2x1
jax: 0.10.0
libtpu: 0.0.40
codegen_flags: <defaults>
</compile_context>

<pallas_src>
import numpy as np

import jax
import jax.numpy as jnp
from jax import lax
from jax.experimental import pallas as pl
from jax.experimental.pallas import tpu as pltpu


LANE = 128            # pad channel / codebook dims to the TPU lane width
_BIG = 1e30           # distance sentinel for padded codebook rows


def _round_up(x, m):
    return (x + m - 1) // m * m


# ---------------------------------------------------------------------------
# Fused Pallas kernel: conv1 + LeakyReLU + conv2 + vector quantizer
# ---------------------------------------------------------------------------

def fused_enc_vq_kernel(x_ref, s1_ref, w1_ref, b1_ref, s2_ref, w2_ref, b2_ref,
                        cbt_ref, cb_ref, c2_ref, q_ref):
    """One batch element; everything stays in VMEM.

    x_ref:   (1, HW, CP)   bf16   flattened NHWC input pixels (channels padded)
    s1_ref:  (9, P1, HW)   bf16   conv1 tap-selection matrices (0/1, zero rows = pad)
    w1_ref:  (9, CP, HP)   bf16   conv1 per-tap weights
    b1_ref:  (1, HP)       f32
    s2_ref:  (9, P2, P1)   bf16   conv2 tap-selection matrices
    w2_ref:  (9, HP, DP)   bf16   conv2 per-tap weights
    b2_ref:  (1, DP)       f32
    cbt_ref: (DP, KP)      bf16   codebook transpose (bf16 distance matmul operand)
    cb_ref:  (KP, DP)      f32    codebook (exact gather operand)
    c2_ref:  (1, KP)       f32    ||codebook||^2, +BIG on padded rows
    q_ref:   (1, P2, DP)   f32    quantized output (straight-through forward value)
    """
    p1, hp = s1_ref.shape[1], w1_ref.shape[2]
    p2, dp = s2_ref.shape[1], w2_ref.shape[2]

    x = x_ref[0]                                            # (HW, CP) bf16

    # --- conv1: 9-tap accumulation.  (S_t @ x) copies bf16 pixel values (exact),
    # the second matmul applies the tap's (Cin, Cout) weight slice.
    acc1 = jnp.zeros((p1, hp), jnp.float32)
    for t in range(9):
        tap = jnp.dot(s1_ref[t], x, preferred_element_type=jnp.float32)
        acc1 += jnp.dot(tap.astype(jnp.bfloat16), w1_ref[t],
                        preferred_element_type=jnp.float32)
    h = acc1 + b1_ref[...]
    h = jnp.where(h > 0, h, 0.2 * h).astype(jnp.bfloat16)   # LeakyReLU(0.2)

    # --- conv2 (no activation): same structure, operating on the VMEM-resident h.
    acc2 = jnp.zeros((p2, dp), jnp.float32)
    for t in range(9):
        tap = jnp.dot(s2_ref[t], h, preferred_element_type=jnp.float32)
        acc2 += jnp.dot(tap.astype(jnp.bfloat16), w2_ref[t],
                        preferred_element_type=jnp.float32)
    z = acc2 + b2_ref[...]                                  # (P2, DP) f32

    # --- VQ: argmin_k ||z - c_k||^2 == argmin_k (||c_k||^2 - 2 z.c_k)
    # (||z||^2 is constant per row).  Distance matmul in bf16 per review.
    dots = jnp.dot(z.astype(jnp.bfloat16), cbt_ref[...],
                   preferred_element_type=jnp.float32)      # (P2, KP)
    d = c2_ref[...] - 2.0 * dots

    # argmin over KP with first-index tie-break
    dmin = jnp.min(d, axis=1, keepdims=True)
    kp = d.shape[1]
    iota = lax.broadcasted_iota(jnp.int32, d.shape, 1)
    idx = jnp.min(jnp.where(d <= dmin, iota, kp), axis=1, keepdims=True)
    onehot = (iota == idx).astype(jnp.float32)

    # exact codebook gather (0/1 onehot @ f32 codebook) -- kept f32 so the selected
    # code is emitted at full precision; MXU has slack here (HBM/launch bound).
    q_ref[0] = jnp.dot(onehot, cb_ref[...], preferred_element_type=jnp.float32)


# ---------------------------------------------------------------------------
# Plain-JAX glue (layout prep only; no im2col materialization)
# ---------------------------------------------------------------------------

def _conv_selection(hin, win, k=3, stride=2, pad=1):
    """0/1 tap-selection matrices for a kxk / stride / pad conv.

    S[t, oh*Wout+ow, r*Win+c] = 1  where (r, c) is tap t's input pixel for output
    (oh, ow); out-of-range taps (zero padding) leave the row all-zero.
    Shape-only -> built with numpy at trace time (baked as constants).
    """
    hout = (hin + 2 * pad - k) // stride + 1
    wout = (win + 2 * pad - k) // stride + 1
    s = np.zeros((k * k, hout * wout, hin * win), np.float32)
    for ki in range(k):
        for kj in range(k):
            t = ki * k + kj
            for oh in range(hout):
                r = stride * oh + ki - pad
                if r < 0 or r >= hin:
                    continue
                for ow in range(wout):
                    c = stride * ow + kj - pad
                    if c < 0 or c >= win:
                        continue
                    s[t, oh * wout + ow, r * win + c] = 1.0
    return s, hout, wout


def _tap_weights(w, cpad, opad):
    """PyTorch (Cout, Cin, KH, KW) -> per-tap (9, Cin_pad, Cout_pad) bf16."""
    cout, cin = w.shape[0], w.shape[1]
    wt = w.transpose(2, 3, 1, 0).reshape(9, cin, cout)
    wt = jnp.pad(wt, ((0, 0), (0, cpad - cin), (0, opad - cout)))
    return wt.astype(jnp.bfloat16)


# ---------------------------------------------------------------------------
# FeatureExtractor forward
# ---------------------------------------------------------------------------

def init_params(key, input_dim_a, hidden, embed_dim, codebook_size):
    """Deterministic init (mirrors networks.gaussian_weights_init, std=0.02)."""
    k1, k2, k3 = jax.random.split(key, 3)
    return {
        "conv1_w": 0.02 * jax.random.normal(k1, (hidden, input_dim_a, 3, 3), jnp.float32),
        "conv1_b": jnp.zeros((hidden,), jnp.float32),
        "conv2_w": 0.02 * jax.random.normal(k2, (embed_dim, hidden, 3, 3), jnp.float32),
        "conv2_b": jnp.zeros((embed_dim,), jnp.float32),
        # VectorQuantizer embedding: uniform(-1/K, 1/K) like standard VQ-VAE init
        "codebook": jax.random.uniform(
            k3, (codebook_size, embed_dim), jnp.float32,
            minval=-1.0 / codebook_size, maxval=1.0 / codebook_size),
    }


@jax.jit
def feature_extractor_forward(params, x_nchw):
    B, Cin, H, W = x_nchw.shape
    w1, b1 = params["conv1_w"], params["conv1_b"]
    w2, b2 = params["conv2_w"], params["conv2_b"]
    cb = params["codebook"]
    hidden, D, K = w1.shape[0], w2.shape[0], cb.shape[0]

    S1_np, Ho1, Wo1 = _conv_selection(H, W)          # conv1: stride 2, pad 1
    S2_np, Ho2, Wo2 = _conv_selection(Ho1, Wo1)      # conv2: stride 2, pad 1
    HW, P1, P2 = H * W, Ho1 * Wo1, Ho2 * Wo2

    CP = _round_up(Cin, 16)          # bf16 sublane packing for the weight blocks
    HP = _round_up(hidden, LANE)     # lane-dense intermediates
    DP = _round_up(D, LANE)
    KP = _round_up(K, LANE)

    # Input: NCHW -> NHWC once, flatten pixels, pad channels.  No im2col in HBM.
    x2 = x_nchw.transpose(0, 2, 3, 1).reshape(B, HW, Cin)
    x2 = jnp.pad(x2, ((0, 0), (0, 0), (0, CP - Cin))).astype(jnp.bfloat16)

    s1 = jnp.asarray(S1_np, jnp.bfloat16)            # (9, P1, HW) constant
    s2 = jnp.asarray(S2_np, jnp.bfloat16)            # (9, P2, P1) constant
    w1t = _tap_weights(w1, CP, HP)                   # (9, CP, HP)
    w2t = _tap_weights(w2, HP, DP)                   # (9, HP, DP)
    b1p = jnp.pad(b1.astype(jnp.float32), (0, HP - hidden)).reshape(1, HP)
    b2p = jnp.pad(b2.astype(jnp.float32), (0, DP - D)).reshape(1, DP)

    cbp = jnp.pad(cb.astype(jnp.float32), ((0, KP - K), (0, DP - D)))
    cbt = cbp.T.astype(jnp.bfloat16)
    c2 = jnp.sum(cbp * cbp, axis=1)                  # hoisted out of the kernel
    c2 = jnp.where(jnp.arange(KP) < K, c2, _BIG).reshape(1, KP)

    q = pl.pallas_call(
        fused_enc_vq_kernel,
        grid=(B,),                                   # >= 2 steps -> both v7x TCs busy
        in_specs=[
            pl.BlockSpec((1, HW, CP), lambda b: (b, 0, 0)),
            pl.BlockSpec((9, P1, HW), lambda b: (0, 0, 0)),   # resident constants
            pl.BlockSpec((9, CP, HP), lambda b: (0, 0, 0)),
            pl.BlockSpec((1, HP), lambda b: (0, 0)),
            pl.BlockSpec((9, P2, P1), lambda b: (0, 0, 0)),
            pl.BlockSpec((9, HP, DP), lambda b: (0, 0, 0)),
            pl.BlockSpec((1, DP), lambda b: (0, 0)),
            pl.BlockSpec((DP, KP), lambda b: (0, 0)),
            pl.BlockSpec((KP, DP), lambda b: (0, 0)),
            pl.BlockSpec((1, KP), lambda b: (0, 0)),
        ],
        out_specs=pl.BlockSpec((1, P2, DP), lambda b: (b, 0, 0)),
        out_shape=jax.ShapeDtypeStruct((B, P2, DP), jnp.float32),
        compiler_params=pltpu.CompilerParams(
            dimension_semantics=("parallel",),
            vmem_limit_bytes=32 * 1024 * 1024),
    )(x2, s1, w1t, b1p, s2, w2t, b2p, cbt, cbp, c2)

    # fe_output = z_codebook_output.view(-1, 1)   (PyTorch NCHW flatten order)
    q = q[:, :, :D].reshape(B, Ho2, Wo2, D).transpose(0, 3, 1, 2)
    return q.reshape(-1, 1)


if __name__ == "__main__":
    key = jax.random.PRNGKey(0)
    k_param, k_x = jax.random.split(key)

    # small shapes: batch=2, input_dim_a=3 channels, 16x16 spatial
    B, input_dim_a, H, W = 2, 3, 16, 16
    hidden, embed_dim, codebook_size = 16, 32, 64

    params = init_params(k_param, input_dim_a, hidden, embed_dim, codebook_size)
    x = jax.random.normal(k_x, (B, input_dim_a, H, W), jnp.float32)

    out = feature_extractor_forward(params, x)
    jax.block_until_ready(out)

    expected_rows = B * embed_dim * (H // 4) * (W // 4)
    assert out.shape == (expected_rows, 1), out.shape
    assert bool(jnp.all(jnp.isfinite(out)))

    # invariant: every quantized pixel vector must equal some codebook row exactly
    p2 = (H // 4) * (W // 4)
    q_pix = out.reshape(B, embed_dim, p2).transpose(0, 2, 1).reshape(-1, embed_dim)
    diff = jnp.min(jnp.max(jnp.abs(q_pix[:, None, :] - params["codebook"][None]),
                           axis=-1), axis=-1)
    assert bool(jnp.all(diff < 1e-5)), float(jnp.max(diff))

    print("KERNEL_OK")
</pallas_src>

<mosaic_0001>
module attributes {stable_mosaic.version = 11 : i64} {
  func.func @fused_enc_vq_kernel(%arg0: i32, %arg1: memref<1x256x16xbf16, #tpu.memory_space<vmem>>, %arg2: memref<9x64x256xbf16, #tpu.memory_space<vmem>>, %arg3: memref<9x16x128xbf16, #tpu.memory_space<vmem>>, %arg4: memref<1x128xf32, #tpu.memory_space<vmem>>, %arg5: memref<9x16x64xbf16, #tpu.memory_space<vmem>>, %arg6: memref<9x128x128xbf16, #tpu.memory_space<vmem>>, %arg7: memref<1x128xf32, #tpu.memory_space<vmem>>, %arg8: memref<128x128xbf16, #tpu.memory_space<vmem>>, %arg9: memref<128x128xf32, #tpu.memory_space<vmem>>, %arg10: memref<1x128xf32, #tpu.memory_space<vmem>>, %arg11: memref<1x16x128xf32, #tpu.memory_space<vmem>>) attributes {dimension_semantics = [#tpu.dimension_semantics<parallel>], iteration_bounds = array<i64: 2>, scalar_prefetch = 0 : i64, scratch_operands = 0 : i64, tpu.core_type = #tpu.core_type<tc>, window_params = [{transform_indices = @transform_0, window_bounds = array<i64: 1, 256, 16>}, {pipeline_mode = #tpu.pipeline_mode<synchronous>, transform_indices = @transform_1, window_bounds = array<i64: 9, 64, 256>}, {pipeline_mode = #tpu.pipeline_mode<synchronous>, transform_indices = @transform_2, window_bounds = array<i64: 9, 16, 128>}, {pipeline_mode = #tpu.pipeline_mode<synchronous>, transform_indices = @transform_3, window_bounds = array<i64: 1, 128>}, {pipeline_mode = #tpu.pipeline_mode<synchronous>, transform_indices = @transform_4, window_bounds = array<i64: 9, 16, 64>}, {pipeline_mode = #tpu.pipeline_mode<synchronous>, transform_indices = @transform_5, window_bounds = array<i64: 9, 128, 128>}, {pipeline_mode = #tpu.pipeline_mode<synchronous>, transform_indices = @transform_6, window_bounds = array<i64: 1, 128>}, {pipeline_mode = #tpu.pipeline_mode<synchronous>, transform_indices = @transform_7, window_bounds = array<i64: 128, 128>}, {pipeline_mode = #tpu.pipeline_mode<synchronous>, transform_indices = @transform_8, window_bounds = array<i64: 128, 128>}, {pipeline_mode = #tpu.pipeline_mode<synchronous>, transform_indices = @transform_9, window_bounds = array<i64: 1, 128>}, {transform_indices = @transform_10, window_bounds = array<i64: 1, 16, 128>}]} {
    %c0 = arith.constant 0 : index
    %c0_0 = arith.constant 0 : index
    %c0_1 = arith.constant 0 : index
    %0 = vector.load %arg1[%c0, %c0_0, %c0_1] : memref<1x256x16xbf16, #tpu.memory_space<vmem>>, vector<1x256x16xbf16>
    %1 = vector.shape_cast %0 : vector<1x256x16xbf16> to vector<256x16xbf16>
    %cst = arith.constant 0.000000e+00 : f32
    %2 = vector.broadcast %cst : f32 to vector<64x128xf32>
    %c0_2 = arith.constant 0 : index
    %c0_3 = arith.constant 0 : index
    %c0_4 = arith.constant 0 : index
    %3 = vector.load %arg2[%c0_2, %c0_3, %c0_4] : memref<9x64x256xbf16, #tpu.memory_space<vmem>>, vector<1x64x256xbf16>
    %4 = vector.shape_cast %3 : vector<1x64x256xbf16> to vector<64x256xbf16>
    %cst_5 = arith.constant dense<0.000000e+00> : vector<64x16xf32>
    %5 = tpu.matmul %4, %1, %cst_5 {dimension_numbers = #tpu.dot_dimension_numbers<[1], [0], [0], [1], [0, 0, 1, 1], [], []>} : vector<64x256xbf16>, vector<256x16xbf16>, vector<64x16xf32> -> vector<64x16xf32>
    %6 = arith.truncf %5 : vector<64x16xf32> to vector<64x16xbf16>
    %c0_6 = arith.constant 0 : index
    %c0_7 = arith.constant 0 : index
    %c0_8 = arith.constant 0 : index
    %7 = vector.load %arg3[%c0_6, %c0_7, %c0_8] : memref<9x16x128xbf16, #tpu.memory_space<vmem>>, vector<1x16x128xbf16>
    %8 = vector.shape_cast %7 : vector<1x16x128xbf16> to vector<16x128xbf16>
    %cst_9 = arith.constant dense<0.000000e+00> : vector<64x128xf32>
    %9 = tpu.matmul %6, %8, %cst_9 {dimension_numbers = #tpu.dot_dimension_numbers<[1], [0], [0], [1], [0, 0, 1, 1], [], []>} : vector<64x16xbf16>, vector<16x128xbf16>, vector<64x128xf32> -> vector<64x128xf32>
    %10 = arith.addf %2, %9 : vector<64x128xf32>
    %c1 = arith.constant 1 : index
    %c0_10 = arith.constant 0 : index
    %c0_11 = arith.constant 0 : index
    %11 = vector.load %arg2[%c1, %c0_10, %c0_11] : memref<9x64x256xbf16, #tpu.memory_space<vmem>>, vector<1x64x256xbf16>
    %12 = vector.shape_cast %11 : vector<1x64x256xbf16> to vector<64x256xbf16>
    %cst_12 = arith.constant dense<0.000000e+00> : vector<64x16xf32>
    %13 = tpu.matmul %12, %1, %cst_12 {dimension_numbers = #tpu.dot_dimension_numbers<[1], [0], [0], [1], [0, 0, 1, 1], [], []>} : vector<64x256xbf16>, vector<256x16xbf16>, vector<64x16xf32> -> vector<64x16xf32>
    %14 = arith.truncf %13 : vector<64x16xf32> to vector<64x16xbf16>
    %c1_13 = arith.constant 1 : index
    %c0_14 = arith.constant 0 : index
    %c0_15 = arith.constant 0 : index
    %15 = vector.load %arg3[%c1_13, %c0_14, %c0_15] : memref<9x16x128xbf16, #tpu.memory_space<vmem>>, vector<1x16x128xbf16>
    %16 = vector.shape_cast %15 : vector<1x16x128xbf16> to vector<16x128xbf16>
    %cst_16 = arith.constant dense<0.000000e+00> : vector<64x128xf32>
    %17 = tpu.matmul %14, %16, %cst_16 {dimension_numbers = #tpu.dot_dimension_numbers<[1], [0], [0], [1], [0, 0, 1, 1], [], []>} : vector<64x16xbf16>, vector<16x128xbf16>, vector<64x128xf32> -> vector<64x128xf32>
    %18 = arith.addf %10, %17 : vector<64x128xf32>
    %c2 = arith.constant 2 : index
    %c0_17 = arith.constant 0 : index
    %c0_18 = arith.constant 0 : index
    %19 = vector.load %arg2[%c2, %c0_17, %c0_18] : memref<9x64x256xbf16, #tpu.memory_space<vmem>>, vector<1x64x256xbf16>
    %20 = vector.shape_cast %19 : vector<1x64x256xbf16> to vector<64x256xbf16>
    %cst_19 = arith.constant dense<0.000000e+00> : vector<64x16xf32>
    %21 = tpu.matmul %20, %1, %cst_19 {dimension_numbers = #tpu.dot_dimension_numbers<[1], [0], [0], [1], [0, 0, 1, 1], [], []>} : vector<64x256xbf16>, vector<256x16xbf16>, vector<64x16xf32> -> vector<64x16xf32>
    %22 = arith.truncf %21 : vector<64x16xf32> to vector<64x16xbf16>
    %c2_20 = arith.constant 2 : index
    %c0_21 = arith.constant 0 : index
    %c0_22 = arith.constant 0 : index
    %23 = vector.load %arg3[%c2_20, %c0_21, %c0_22] : memref<9x16x128xbf16, #tpu.memory_space<vmem>>, vector<1x16x128xbf16>
    %24 = vector.shape_cast %23 : vector<1x16x128xbf16> to vector<16x128xbf16>
    %cst_23 = arith.constant dense<0.000000e+00> : vector<64x128xf32>
    %25 = tpu.matmul %22, %24, %cst_23 {dimension_numbers = #tpu.dot_dimension_numbers<[1], [0], [0], [1], [0, 0, 1, 1], [], []>} : vector<64x16xbf16>, vector<16x128xbf16>, vector<64x128xf32> -> vector<64x128xf32>
    %26 = arith.addf %18, %25 : vector<64x128xf32>
    %c3 = arith.constant 3 : index
    %c0_24 = arith.constant 0 : index
    %c0_25 = arith.constant 0 : index
    %27 = vector.load %arg2[%c3, %c0_24, %c0_25] : memref<9x64x256xbf16, #tpu.memory_space<vmem>>, vector<1x64x256xbf16>
    %28 = vector.shape_cast %27 : vector<1x64x256xbf16> to vector<64x256xbf16>
    %cst_26 = arith.constant dense<0.000000e+00> : vector<64x16xf32>
    %29 = tpu.matmul %28, %1, %cst_26 {dimension_numbers = #tpu.dot_dimension_numbers<[1], [0], [0], [1], [0, 0, 1, 1], [], []>} : vector<64x256xbf16>, vector<256x16xbf16>, vector<64x16xf32> -> vector<64x16xf32>
    %30 = arith.truncf %29 : vector<64x16xf32> to vector<64x16xbf16>
    %c3_27 = arith.constant 3 : index
    %c0_28 = arith.constant 0 : index
    %c0_29 = arith.constant 0 : index
    %31 = vector.load %arg3[%c3_27, %c0_28, %c0_29] : memref<9x16x128xbf16, #tpu.memory_space<vmem>>, vector<1x16x128xbf16>
    %32 = vector.shape_cast %31 : vector<1x16x128xbf16> to vector<16x128xbf16>
    %cst_30 = arith.constant dense<0.000000e+00> : vector<64x128xf32>
    %33 = tpu.matmul %30, %32, %cst_30 {dimension_numbers = #tpu.dot_dimension_numbers<[1], [0], [0], [1], [0, 0, 1, 1], [], []>} : vector<64x16xbf16>, vector<16x128xbf16>, vector<64x128xf32> -> vector<64x128xf32>
    %34 = arith.addf %26, %33 : vector<64x128xf32>
    %c4 = arith.constant 4 : index
    %c0_31 = arith.constant 0 : index
    %c0_32 = arith.constant 0 : index
    %35 = vector.load %arg2[%c4, %c0_31, %c0_32] : memref<9x64x256xbf16, #tpu.memory_space<vmem>>, vector<1x64x256xbf16>
    %36 = vector.shape_cast %35 : vector<1x64x256xbf16> to vector<64x256xbf16>
    %cst_33 = arith.constant dense<0.000000e+00> : vector<64x16xf32>
    %37 = tpu.matmul %36, %1, %cst_33 {dimension_numbers = #tpu.dot_dimension_numbers<[1], [0], [0], [1], [0, 0, 1, 1], [], []>} : vector<64x256xbf16>, vector<256x16xbf16>, vector<64x16xf32> -> vector<64x16xf32>
    %38 = arith.truncf %37 : vector<64x16xf32> to vector<64x16xbf16>
    %c4_34 = arith.constant 4 : index
    %c0_35 = arith.constant 0 : index
    %c0_36 = arith.constant 0 : index
    %39 = vector.load %arg3[%c4_34, %c0_35, %c0_36] : memref<9x16x128xbf16, #tpu.memory_space<vmem>>, vector<1x16x128xbf16>
    %40 = vector.shape_cast %39 : vector<1x16x128xbf16> to vector<16x128xbf16>
    %cst_37 = arith.constant dense<0.000000e+00> : vector<64x128xf32>
    %41 = tpu.matmul %38, %40, %cst_37 {dimension_numbers = #tpu.dot_dimension_numbers<[1], [0], [0], [1], [0, 0, 1, 1], [], []>} : vector<64x16xbf16>, vector<16x128xbf16>, vector<64x128xf32> -> vector<64x128xf32>
    %42 = arith.addf %34, %41 : vector<64x128xf32>
    %c5 = arith.constant 5 : index
    %c0_38 = arith.constant 0 : index
    %c0_39 = arith.constant 0 : index
    %43 = vector.load %arg2[%c5, %c0_38, %c0_39] : memref<9x64x256xbf16, #tpu.memory_space<vmem>>, vector<1x64x256xbf16>
    %44 = vector.shape_cast %43 : vector<1x64x256xbf16> to vector<64x256xbf16>
    %cst_40 = arith.constant dense<0.000000e+00> : vector<64x16xf32>
    %45 = tpu.matmul %44, %1, %cst_40 {dimension_numbers = #tpu.dot_dimension_numbers<[1], [0], [0], [1], [0, 0, 1, 1], [], []>} : vector<64x256xbf16>, vector<256x16xbf16>, vector<64x16xf32> -> vector<64x16xf32>
    %46 = arith.truncf %45 : vector<64x16xf32> to vector<64x16xbf16>
    %c5_41 = arith.constant 5 : index
    %c0_42 = arith.constant 0 : index
    %c0_43 = arith.constant 0 : index
    %47 = vector.load %arg3[%c5_41, %c0_42, %c0_43] : memref<9x16x128xbf16, #tpu.memory_space<vmem>>, vector<1x16x128xbf16>
    %48 = vector.shape_cast %47 : vector<1x16x128xbf16> to vector<16x128xbf16>
    %cst_44 = arith.constant dense<0.000000e+00> : vector<64x128xf32>
    %49 = tpu.matmul %46, %48, %cst_44 {dimension_numbers = #tpu.dot_dimension_numbers<[1], [0], [0], [1], [0, 0, 1, 1], [], []>} : vector<64x16xbf16>, vector<16x128xbf16>, vector<64x128xf32> -> vector<64x128xf32>
    %50 = arith.addf %42, %49 : vector<64x128xf32>
    %c6 = arith.constant 6 : index
    %c0_45 = arith.constant 0 : index
    %c0_46 = arith.constant 0 : index
    %51 = vector.load %arg2[%c6, %c0_45, %c0_46] : memref<9x64x256xbf16, #tpu.memory_space<vmem>>, vector<1x64x256xbf16>
    %52 = vector.shape_cast %51 : vector<1x64x256xbf16> to vector<64x256xbf16>
    %cst_47 = arith.constant dense<0.000000e+00> : vector<64x16xf32>
    %53 = tpu.matmul %52, %1, %cst_47 {dimension_numbers = #tpu.dot_dimension_numbers<[1], [0], [0], [1], [0, 0, 1, 1], [], []>} : vector<64x256xbf16>, vector<256x16xbf16>, vector<64x16xf32> -> vector<64x16xf32>
    %54 = arith.truncf %53 : vector<64x16xf32> to vector<64x16xbf16>
    %c6_48 = arith.constant 6 : index
    %c0_49 = arith.constant 0 : index
    %c0_50 = arith.constant 0 : index
    %55 = vector.load %arg3[%c6_48, %c0_49, %c0_50] : memref<9x16x128xbf16, #tpu.memory_space<vmem>>, vector<1x16x128xbf16>
    %56 = vector.shape_cast %55 : vector<1x16x128xbf16> to vector<16x128xbf16>
    %cst_51 = arith.constant dense<0.000000e+00> : vector<64x128xf32>
    %57 = tpu.matmul %54, %56, %cst_51 {dimension_numbers = #tpu.dot_dimension_numbers<[1], [0], [0], [1], [0, 0, 1, 1], [], []>} : vector<64x16xbf16>, vector<16x128xbf16>, vector<64x128xf32> -> vector<64x128xf32>
    %58 = arith.addf %50, %57 : vector<64x128xf32>
    %c7 = arith.constant 7 : index
    %c0_52 = arith.constant 0 : index
    %c0_53 = arith.constant 0 : index
    %59 = vector.load %arg2[%c7, %c0_52, %c0_53] : memref<9x64x256xbf16, #tpu.memory_space<vmem>>, vector<1x64x256xbf16>
    %60 = vector.shape_cast %59 : vector<1x64x256xbf16> to vector<64x256xbf16>
    %cst_54 = arith.constant dense<0.000000e+00> : vector<64x16xf32>
    %61 = tpu.matmul %60, %1, %cst_54 {dimension_numbers = #tpu.dot_dimension_numbers<[1], [0], [0], [1], [0, 0, 1, 1], [], []>} : vector<64x256xbf16>, vector<256x16xbf16>, vector<64x16xf32> -> vector<64x16xf32>
    %62 = arith.truncf %61 : vector<64x16xf32> to vector<64x16xbf16>
    %c7_55 = arith.constant 7 : index
    %c0_56 = arith.constant 0 : index
    %c0_57 = arith.constant 0 : index
    %63 = vector.load %arg3[%c7_55, %c0_56, %c0_57] : memref<9x16x128xbf16, #tpu.memory_space<vmem>>, vector<1x16x128xbf16>
    %64 = vector.shape_cast %63 : vector<1x16x128xbf16> to vector<16x128xbf16>
    %cst_58 = arith.constant dense<0.000000e+00> : vector<64x128xf32>
    %65 = tpu.matmul %62, %64, %cst_58 {dimension_numbers = #tpu.dot_dimension_numbers<[1], [0], [0], [1], [0, 0, 1, 1], [], []>} : vector<64x16xbf16>, vector<16x128xbf16>, vector<64x128xf32> -> vector<64x128xf32>
    %66 = arith.addf %58, %65 : vector<64x128xf32>
    %c8 = arith.constant 8 : index
    %c0_59 = arith.constant 0 : index
    %c0_60 = arith.constant 0 : index
    %67 = vector.load %arg2[%c8, %c0_59, %c0_60] : memref<9x64x256xbf16, #tpu.memory_space<vmem>>, vector<1x64x256xbf16>
    %68 = vector.shape_cast %67 : vector<1x64x256xbf16> to vector<64x256xbf16>
    %cst_61 = arith.constant dense<0.000000e+00> : vector<64x16xf32>
    %69 = tpu.matmul %68, %1, %cst_61 {dimension_numbers = #tpu.dot_dimension_numbers<[1], [0], [0], [1], [0, 0, 1, 1], [], []>} : vector<64x256xbf16>, vector<256x16xbf16>, vector<64x16xf32> -> vector<64x16xf32>
    %70 = arith.truncf %69 : vector<64x16xf32> to vector<64x16xbf16>
    %c8_62 = arith.constant 8 : index
    %c0_63 = arith.constant 0 : index
    %c0_64 = arith.constant 0 : index
    %71 = vector.load %arg3[%c8_62, %c0_63, %c0_64] : memref<9x16x128xbf16, #tpu.memory_space<vmem>>, vector<1x16x128xbf16>
    %72 = vector.shape_cast %71 : vector<1x16x128xbf16> to vector<16x128xbf16>
    %cst_65 = arith.constant dense<0.000000e+00> : vector<64x128xf32>
    %73 = tpu.matmul %70, %72, %cst_65 {dimension_numbers = #tpu.dot_dimension_numbers<[1], [0], [0], [1], [0, 0, 1, 1], [], []>} : vector<64x16xbf16>, vector<16x128xbf16>, vector<64x128xf32> -> vector<64x128xf32>
    %74 = arith.addf %66, %73 : vector<64x128xf32>
    %c0_66 = arith.constant 0 : index
    %c0_67 = arith.constant 0 : index
    %75 = vector.load %arg4[%c0_66, %c0_67] : memref<1x128xf32, #tpu.memory_space<vmem>>, vector<1x128xf32>
    %76 = vector.broadcast %75 : vector<1x128xf32> to vector<64x128xf32>
    %77 = arith.addf %74, %76 : vector<64x128xf32>
    %cst_68 = arith.constant 0.000000e+00 : f32
    %78 = vector.broadcast %cst_68 : f32 to vector<64x128xf32>
    %79 = arith.cmpf ogt, %77, %78 : vector<64x128xf32>
    %cst_69 = arith.constant 2.000000e-01 : f32
    %80 = vector.broadcast %cst_69 : f32 to vector<64x128xf32>
    %81 = arith.mulf %80, %77 : vector<64x128xf32>
    %82 = arith.select %79, %77, %81 : vector<64x128xi1>, vector<64x128xf32>
    %83 = arith.truncf %82 : vector<64x128xf32> to vector<64x128xbf16>
    %cst_70 = arith.constant 0.000000e+00 : f32
    %84 = vector.broadcast %cst_70 : f32 to vector<16x128xf32>
    %c0_71 = arith.constant 0 : index
    %c0_72 = arith.constant 0 : index
    %c0_73 = arith.constant 0 : index
    %85 = vector.load %arg5[%c0_71, %c0_72, %c0_73] : memref<9x16x64xbf16, #tpu.memory_space<vmem>>, vector<1x16x64xbf16>
    %86 = vector.shape_cast %85 : vector<1x16x64xbf16> to vector<16x64xbf16>
    %cst_74 = arith.constant dense<0.000000e+00> : vector<16x128xf32>
    %87 = tpu.matmul %86, %83, %cst_74 {dimension_numbers = #tpu.dot_dimension_numbers<[1], [0], [0], [1], [0, 0, 1, 1], [], []>} : vector<16x64xbf16>, vector<64x128xbf16>, vector<16x128xf32> -> vector<16x128xf32>
    %88 = arith.truncf %87 : vector<16x128xf32> to vector<16x128xbf16>
    %c0_75 = arith.constant 0 : index
    %c0_76 = arith.constant 0 : index
    %c0_77 = arith.constant 0 : index
    %89 = vector.load %arg6[%c0_75, %c0_76, %c0_77] : memref<9x128x128xbf16, #tpu.memory_space<vmem>>, vector<1x128x128xbf16>
    %90 = vector.shape_cast %89 : vector<1x128x128xbf16> to vector<128x128xbf16>
    %cst_78 = arith.constant dense<0.000000e+00> : vector<16x128xf32>
    %91 = tpu.matmul %88, %90, %cst_78 {dimension_numbers = #tpu.dot_dimension_numbers<[1], [0], [0], [1], [0, 0, 1, 1], [], []>} : vector<16x128xbf16>, vector<128x128xbf16>, vector<16x128xf32> -> vector<16x128xf32>
    %92 = arith.addf %84, %91 : vector<16x128xf32>
    %c1_79 = arith.constant 1 : index
    %c0_80 = arith.constant 0 : index
    %c0_81 = arith.constant 0 : index
    %93 = vector.load %arg5[%c1_79, %c0_80, %c0_81] : memref<9x16x64xbf16, #tpu.memory_space<vmem>>, vector<1x16x64xbf16>
    %94 = vector.shape_cast %93 : vector<1x16x64xbf16> to vector<16x64xbf16>
    %cst_82 = arith.constant dense<0.000000e+00> : vector<16x128xf32>
    %95 = tpu.matmul %94, %83, %cst_82 {dimension_numbers = #tpu.dot_dimension_numbers<[1], [0], [0], [1], [0, 0, 1, 1], [], []>} : vector<16x64xbf16>, vector<64x128xbf16>, vector<16x128xf32> -> vector<16x128xf32>
    %96 = arith.truncf %95 : vector<16x128xf32> to vector<16x128xbf16>
    %c1_83 = arith.constant 1 : index
    %c0_84 = arith.constant 0 : index
    %c0_85 = arith.constant 0 : index
    %97 = vector.load %arg6[%c1_83, %c0_84, %c0_85] : memref<9x128x128xbf16, #tpu.memory_space<vmem>>, vector<1x128x128xbf16>
    %98 = vector.shape_cast %97 : vector<1x128x128xbf16> to vector<128x128xbf16>
    %cst_86 = arith.constant dense<0.000000e+00> : vector<16x128xf32>
    %99 = tpu.matmul %96, %98, %cst_86 {dimension_numbers = #tpu.dot_dimension_numbers<[1], [0], [0], [1], [0, 0, 1, 1], [], []>} : vector<16x128xbf16>, vector<128x128xbf16>, vector<16x128xf32> -> vector<16x128xf32>
    %100 = arith.addf %92, %99 : vector<16x128xf32>
    %c2_87 = arith.constant 2 : index
    %c0_88 = arith.constant 0 : index
    %c0_89 = arith.constant 0 : index
    %101 = vector.load %arg5[%c2_87, %c0_88, %c0_89] : memref<9x16x64xbf16, #tpu.memory_space<vmem>>, vector<1x16x64xbf16>
    %102 = vector.shape_cast %101 : vector<1x16x64xbf16> to vector<16x64xbf16>
    %cst_90 = arith.constant dense<0.000000e+00> : vector<16x128xf32>
    %103 = tpu.matmul %102, %83, %cst_90 {dimension_numbers = #tpu.dot_dimension_numbers<[1], [0], [0], [1], [0, 0, 1, 1], [], []>} : vector<16x64xbf16>, vector<64x128xbf16>, vector<16x128xf32> -> vector<16x128xf32>
    %104 = arith.truncf %103 : vector<16x128xf32> to vector<16x128xbf16>
    %c2_91 = arith.constant 2 : index
    %c0_92 = arith.constant 0 : index
    %c0_93 = arith.constant 0 : index
    %105 = vector.load %arg6[%c2_91, %c0_92, %c0_93] : memref<9x128x128xbf16, #tpu.memory_space<vmem>>, vector<1x128x128xbf16>
    %106 = vector.shape_cast %105 : vector<1x128x128xbf16> to vector<128x128xbf16>
    %cst_94 = arith.constant dense<0.000000e+00> : vector<16x128xf32>
    %107 = tpu.matmul %104, %106, %cst_94 {dimension_numbers = #tpu.dot_dimension_numbers<[1], [0], [0], [1], [0, 0, 1, 1], [], []>} : vector<16x128xbf16>, vector<128x128xbf16>, vector<16x128xf32> -> vector<16x128xf32>
    %108 = arith.addf %100, %107 : vector<16x128xf32>
    %c3_95 = arith.constant 3 : index
    %c0_96 = arith.constant 0 : index
    %c0_97 = arith.constant 0 : index
    %109 = vector.load %arg5[%c3_95, %c0_96, %c0_97] : memref<9x16x64xbf16, #tpu.memory_space<vmem>>, vector<1x16x64xbf16>
    %110 = vector.shape_cast %109 : vector<1x16x64xbf16> to vector<16x64xbf16>
    %cst_98 = arith.constant dense<0.000000e+00> : vector<16x128xf32>
    %111 = tpu.matmul %110, %83, %cst_98 {dimension_numbers = #tpu.dot_dimension_numbers<[1], [0], [0], [1], [0, 0, 1, 1], [], []>} : vector<16x64xbf16>, vector<64x128xbf16>, vector<16x128xf32> -> vector<16x128xf32>
    %112 = arith.truncf %111 : vector<16x128xf32> to vector<16x128xbf16>
    %c3_99 = arith.constant 3 : index
    %c0_100 = arith.constant 0 : index
    %c0_101 = arith.constant 0 : index
    %113 = vector.load %arg6[%c3_99, %c0_100, %c0_101] : memref<9x128x128xbf16, #tpu.memory_space<vmem>>, vector<1x128x128xbf16>
    %114 = vector.shape_cast %113 : vector<1x128x128xbf16> to vector<128x128xbf16>
    %cst_102 = arith.constant dense<0.000000e+00> : vector<16x128xf32>
    %115 = tpu.matmul %112, %114, %cst_102 {dimension_numbers = #tpu.dot_dimension_numbers<[1], [0], [0], [1], [0, 0, 1, 1], [], []>} : vector<16x128xbf16>, vector<128x128xbf16>, vector<16x128xf32> -> vector<16x128xf32>
    %116 = arith.addf %108, %115 : vector<16x128xf32>
    %c4_103 = arith.constant 4 : index
    %c0_104 = arith.constant 0 : index
    %c0_105 = arith.constant 0 : index
    %117 = vector.load %arg5[%c4_103, %c0_104, %c0_105] : memref<9x16x64xbf16, #tpu.memory_space<vmem>>, vector<1x16x64xbf16>
    %118 = vector.shape_cast %117 : vector<1x16x64xbf16> to vector<16x64xbf16>
    %cst_106 = arith.constant dense<0.000000e+00> : vector<16x128xf32>
    %119 = tpu.matmul %118, %83, %cst_106 {dimension_numbers = #tpu.dot_dimension_numbers<[1], [0], [0], [1], [0, 0, 1, 1], [], []>} : vector<16x64xbf16>, vector<64x128xbf16>, vector<16x128xf32> -> vector<16x128xf32>
    %120 = arith.truncf %119 : vector<16x128xf32> to vector<16x128xbf16>
    %c4_107 = arith.constant 4 : index
    %c0_108 = arith.constant 0 : index
    %c0_109 = arith.constant 0 : index
    %121 = vector.load %arg6[%c4_107, %c0_108, %c0_109] : memref<9x128x128xbf16, #tpu.memory_space<vmem>>, vector<1x128x128xbf16>
    %122 = vector.shape_cast %121 : vector<1x128x128xbf16> to vector<128x128xbf16>
    %cst_110 = arith.constant dense<0.000000e+00> : vector<16x128xf32>
    %123 = tpu.matmul %120, %122, %cst_110 {dimension_numbers = #tpu.dot_dimension_numbers<[1], [0], [0], [1], [0, 0, 1, 1], [], []>} : vector<16x128xbf16>, vector<128x128xbf16>, vector<16x128xf32> -> vector<16x128xf32>
    %124 = arith.addf %116, %123 : vector<16x128xf32>
    %c5_111 = arith.constant 5 : index
    %c0_112 = arith.constant 0 : index
    %c0_113 = arith.constant 0 : index
    %125 = vector.load %arg5[%c5_111, %c0_112, %c0_113] : memref<9x16x64xbf16, #tpu.memory_space<vmem>>, vector<1x16x64xbf16>
    %126 = vector.shape_cast %125 : vector<1x16x64xbf16> to vector<16x64xbf16>
    %cst_114 = arith.constant dense<0.000000e+00> : vector<16x128xf32>
    %127 = tpu.matmul %126, %83, %cst_114 {dimension_numbers = #tpu.dot_dimension_numbers<[1], [0], [0], [1], [0, 0, 1, 1], [], []>} : vector<16x64xbf16>, vector<64x128xbf16>, vector<16x128xf32> -> vector<16x128xf32>
    %128 = arith.truncf %127 : vector<16x128xf32> to vector<16x128xbf16>
    %c5_115 = arith.constant 5 : index
    %c0_116 = arith.constant 0 : index
    %c0_117 = arith.constant 0 : index
    %129 = vector.load %arg6[%c5_115, %c0_116, %c0_117] : memref<9x128x128xbf16, #tpu.memory_space<vmem>>, vector<1x128x128xbf16>
    %130 = vector.shape_cast %129 : vector<1x128x128xbf16> to vector<128x128xbf16>
    %cst_118 = arith.constant dense<0.000000e+00> : vector<16x128xf32>
    %131 = tpu.matmul %128, %130, %cst_118 {dimension_numbers = #tpu.dot_dimension_numbers<[1], [0], [0], [1], [0, 0, 1, 1], [], []>} : vector<16x128xbf16>, vector<128x128xbf16>, vector<16x128xf32> -> vector<16x128xf32>
    %132 = arith.addf %124, %131 : vector<16x128xf32>
    %c6_119 = arith.constant 6 : index
    %c0_120 = arith.constant 0 : index
    %c0_121 = arith.constant 0 : index
    %133 = vector.load %arg5[%c6_119, %c0_120, %c0_121] : memref<9x16x64xbf16, #tpu.memory_space<vmem>>, vector<1x16x64xbf16>
    %134 = vector.shape_cast %133 : vector<1x16x64xbf16> to vector<16x64xbf16>
    %cst_122 = arith.constant dense<0.000000e+00> : vector<16x128xf32>
    %135 = tpu.matmul %134, %83, %cst_122 {dimension_numbers = #tpu.dot_dimension_numbers<[1], [0], [0], [1], [0, 0, 1, 1], [], []>} : vector<16x64xbf16>, vector<64x128xbf16>, vector<16x128xf32> -> vector<16x128xf32>
    %136 = arith.truncf %135 : vector<16x128xf32> to vector<16x128xbf16>
    %c6_123 = arith.constant 6 : index
    %c0_124 = arith.constant 0 : index
    %c0_125 = arith.constant 0 : index
    %137 = vector.load %arg6[%c6_123, %c0_124, %c0_125] : memref<9x128x128xbf16, #tpu.memory_space<vmem>>, vector<1x128x128xbf16>
    %138 = vector.shape_cast %137 : vector<1x128x128xbf16> to vector<128x128xbf16>
    %cst_126 = arith.constant dense<0.000000e+00> : vector<16x128xf32>
    %139 = tpu.matmul %136, %138, %cst_126 {dimension_numbers = #tpu.dot_dimension_numbers<[1], [0], [0], [1], [0, 0, 1, 1], [], []>} : vector<16x128xbf16>, vector<128x128xbf16>, vector<16x128xf32> -> vector<16x128xf32>
    %140 = arith.addf %132, %139 : vector<16x128xf32>
    %c7_127 = arith.constant 7 : index
    %c0_128 = arith.constant 0 : index
    %c0_129 = arith.constant 0 : index
    %141 = vector.load %arg5[%c7_127, %c0_128, %c0_129] : memref<9x16x64xbf16, #tpu.memory_space<vmem>>, vector<1x16x64xbf16>
    %142 = vector.shape_cast %141 : vector<1x16x64xbf16> to vector<16x64xbf16>
    %cst_130 = arith.constant dense<0.000000e+00> : vector<16x128xf32>
    %143 = tpu.matmul %142, %83, %cst_130 {dimension_numbers = #tpu.dot_dimension_numbers<[1], [0], [0], [1], [0, 0, 1, 1], [], []>} : vector<16x64xbf16>, vector<64x128xbf16>, vector<16x128xf32> -> vector<16x128xf32>
    %144 = arith.truncf %143 : vector<16x128xf32> to vector<16x128xbf16>
    %c7_131 = arith.constant 7 : index
    %c0_132 = arith.constant 0 : index
    %c0_133 = arith.constant 0 : index
    %145 = vector.load %arg6[%c7_131, %c0_132, %c0_133] : memref<9x128x128xbf16, #tpu.memory_space<vmem>>, vector<1x128x128xbf16>
    %146 = vector.shape_cast %145 : vector<1x128x128xbf16> to vector<128x128xbf16>
    %cst_134 = arith.constant dense<0.000000e+00> : vector<16x128xf32>
    %147 = tpu.matmul %144, %146, %cst_134 {dimension_numbers = #tpu.dot_dimension_numbers<[1], [0], [0], [1], [0, 0, 1, 1], [], []>} : vector<16x128xbf16>, vector<128x128xbf16>, vector<16x128xf32> -> vector<16x128xf32>
    %148 = arith.addf %140, %147 : vector<16x128xf32>
    %c8_135 = arith.constant 8 : index
    %c0_136 = arith.constant 0 : index
    %c0_137 = arith.constant 0 : index
    %149 = vector.load %arg5[%c8_135, %c0_136, %c0_137] : memref<9x16x64xbf16, #tpu.memory_space<vmem>>, vector<1x16x64xbf16>
    %150 = vector.shape_cast %149 : vector<1x16x64xbf16> to vector<16x64xbf16>
    %cst_138 = arith.constant dense<0.000000e+00> : vector<16x128xf32>
    %151 = tpu.matmul %150, %83, %cst_138 {dimension_numbers = #tpu.dot_dimension_numbers<[1], [0], [0], [1], [0, 0, 1, 1], [], []>} : vector<16x64xbf16>, vector<64x128xbf16>, vector<16x128xf32> -> vector<16x128xf32>
    %152 = arith.truncf %151 : vector<16x128xf32> to vector<16x128xbf16>
    %c8_139 = arith.constant 8 : index
    %c0_140 = arith.constant 0 : index
    %c0_141 = arith.constant 0 : index
    %153 = vector.load %arg6[%c8_139, %c0_140, %c0_141] : memref<9x128x128xbf16, #tpu.memory_space<vmem>>, vector<1x128x128xbf16>
    %154 = vector.shape_cast %153 : vector<1x128x128xbf16> to vector<128x128xbf16>
    %cst_142 = arith.constant dense<0.000000e+00> : vector<16x128xf32>
    %155 = tpu.matmul %152, %154, %cst_142 {dimension_numbers = #tpu.dot_dimension_numbers<[1], [0], [0], [1], [0, 0, 1, 1], [], []>} : vector<16x128xbf16>, vector<128x128xbf16>, vector<16x128xf32> -> vector<16x128xf32>
    %156 = arith.addf %148, %155 : vector<16x128xf32>
    %c0_143 = arith.constant 0 : index
    %c0_144 = arith.constant 0 : index
    %157 = vector.load %arg7[%c0_143, %c0_144] : memref<1x128xf32, #tpu.memory_space<vmem>>, vector<1x128xf32>
    %158 = vector.broadcast %157 : vector<1x128xf32> to vector<16x128xf32>
    %159 = arith.addf %156, %158 : vector<16x128xf32>
    %160 = arith.truncf %159 : vector<16x128xf32> to vector<16x128xbf16>
    %c0_145 = arith.constant 0 : index
    %c0_146 = arith.constant 0 : index
    %161 = vector.load %arg8[%c0_145, %c0_146] : memref<128x128xbf16, #tpu.memory_space<vmem>>, vector<128x128xbf16>
    %cst_147 = arith.constant dense<0.000000e+00> : vector<16x128xf32>
    %162 = tpu.matmul %160, %161, %cst_147 {dimension_numbers = #tpu.dot_dimension_numbers<[1], [0], [0], [1], [0, 0, 1, 1], [], []>} : vector<16x128xbf16>, vector<128x128xbf16>, vector<16x128xf32> -> vector<16x128xf32>
    %c0_148 = arith.constant 0 : index
    %c0_149 = arith.constant 0 : index
    %163 = vector.load %arg10[%c0_148, %c0_149] : memref<1x128xf32, #tpu.memory_space<vmem>>, vector<1x128xf32>
    %cst_150 = arith.constant 2.000000e+00 : f32
    %164 = vector.broadcast %cst_150 : f32 to vector<16x128xf32>
    %165 = arith.mulf %164, %162 : vector<16x128xf32>
    %166 = vector.broadcast %163 : vector<1x128xf32> to vector<16x128xf32>
    %167 = arith.subf %166, %165 : vector<16x128xf32>
    %cst_151 = arith.constant dense<0x7F800000> : vector<16xf32>
    %168 = vector.multi_reduction <minimumf>, %167, %cst_151 [1] : vector<16x128xf32> to vector<16xf32>
    %169 = vector.shape_cast %168 : vector<16xf32> to vector<16x1xf32>
    %170 = tpu.iota {dimensions = array<i32: 1>} : vector<16x128xi32>
    %171 = vector.broadcast %169 : vector<16x1xf32> to vector<16x128xf32>
    %172 = arith.cmpf ole, %167, %171 : vector<16x128xf32>
    %c128_i32 = arith.constant 128 : i32
    %173 = vector.broadcast %c128_i32 : i32 to vector<16x128xi32>
    %174 = arith.select %172, %170, %173 : vector<16x128xi1>, vector<16x128xi32>
    %cst_152 = arith.constant dense<2147483647> : vector<16xi32>
    %175 = vector.multi_reduction <minsi>, %174, %cst_152 [1] : vector<16x128xi32> to vector<16xi32>
    %176 = vector.shape_cast %175 : vector<16xi32> to vector<16x1xi32>
    %177 = vector.broadcast %176 : vector<16x1xi32> to vector<16x128xi32>
    %178 = arith.cmpi eq, %170, %177 : vector<16x128xi32>
    %179 = arith.extui %178 : vector<16x128xi1> to vector<16x128xi32>
    %180 = arith.sitofp %179 : vector<16x128xi32> to vector<16x128xf32>
    %c0_153 = arith.constant 0 : index
    %c0_154 = arith.constant 0 : index
    %181 = vector.load %arg9[%c0_153, %c0_154] : memref<128x128xf32, #tpu.memory_space<vmem>>, vector<128x128xf32>
    %cst_155 = arith.constant dense<0.000000e+00> : vector<16x128xf32>
    %182 = tpu.matmul %180, %181, %cst_155 {dimension_numbers = #tpu.dot_dimension_numbers<[1], [0], [0], [1], [0, 0, 1, 1], [], []>} : vector<16x128xf32>, vector<128x128xf32>, vector<16x128xf32> -> vector<16x128xf32>
    %c0_156 = arith.constant 0 : index
    %c0_157 = arith.constant 0 : index
    %c0_158 = arith.constant 0 : index
    %183 = vector.load %arg11[%c0_156, %c0_157, %c0_158] : memref<1x16x128xf32, #tpu.memory_space<vmem>>, vector<1x16x128xf32>
    %184 = vector.shape_cast %183 : vector<1x16x128xf32> to vector<16x128xf32>
    %185 = vector.shape_cast %182 : vector<16x128xf32> to vector<1x16x128xf32>
    tpu.vector_store %arg11[%c0_156, %c0_157, %c0_158], %185 {strides = array<i32>} : memref<1x16x128xf32, #tpu.memory_space<vmem>>, vector<1x16x128xf32>,
    return
  }
  func.func @transform_0(%arg0: i32) -> (i32, i32, i32) {
    %c0_i32 = arith.constant 0 : i32
    %c0_i32_0 = arith.constant 0 : i32
    %c0_i32_1 = arith.constant 0 : i32
    return %arg0, %c0_i32, %c0_i32_0 : i32, i32, i32
  }
  func.func @transform_1(%arg0: i32) -> (i32, i32, i32) {
    %c0_i32 = arith.constant 0 : i32
    %c0_i32_0 = arith.constant 0 : i32
    %c0_i32_1 = arith.constant 0 : i32
    %c0_i32_2 = arith.constant 0 : i32
    return %c0_i32, %c0_i32_0, %c0_i32_1 : i32, i32, i32
  }
  func.func @transform_2(%arg0: i32) -> (i32, i32, i32) {
    %c0_i32 = arith.constant 0 : i32
    %c0_i32_0 = arith.constant 0 : i32
    %c0_i32_1 = arith.constant 0 : i32
    %c0_i32_2 = arith.constant 0 : i32
    return %c0_i32, %c0_i32_0, %c0_i32_1 : i32, i32, i32
  }
  func.func @transform_3(%arg0: i32) -> (i32, i32) {
    %c0_i32 = arith.constant 0 : i32
    %c0_i32_0 = arith.constant 0 : i32
    %c0_i32_1 = arith.constant 0 : i32
    return %c0_i32, %c0_i32_0 : i32, i32
  }
  func.func @transform_4(%arg0: i32) -> (i32, i32, i32) {
    %c0_i32 = arith.constant 0 : i32
    %c0_i32_0 = arith.constant 0 : i32
    %c0_i32_1 = arith.constant 0 : i32
    %c0_i32_2 = arith.constant 0 : i32
    return %c0_i32, %c0_i32_0, %c0_i32_1 : i32, i32, i32
  }
  func.func @transform_5(%arg0: i32) -> (i32, i32, i32) {
    %c0_i32 = arith.constant 0 : i32
    %c0_i32_0 = arith.constant 0 : i32
    %c0_i32_1 = arith.constant 0 : i32
    %c0_i32_2 = arith.constant 0 : i32
    return %c0_i32, %c0_i32_0, %c0_i32_1 : i32, i32, i32
  }
  func.func @transform_6(%arg0: i32) -> (i32, i32) {
    %c0_i32 = arith.constant 0 : i32
    %c0_i32_0 = arith.constant 0 : i32
    %c0_i32_1 = arith.constant 0 : i32
    return %c0_i32, %c0_i32_0 : i32, i32
  }
  func.func @transform_7(%arg0: i32) -> (i32, i32) {
    %c0_i32 = arith.constant 0 : i32
    %c0_i32_0 = arith.constant 0 : i32
    %c0_i32_1 = arith.constant 0 : i32
    return %c0_i32, %c0_i32_0 : i32, i32
  }
  func.func @transform_8(%arg0: i32) -> (i32, i32) {
    %c0_i32 = arith.constant 0 : i32
    %c0_i32_0 = arith.constant 0 : i32
    %c0_i32_1 = arith.constant 0 : i32
    return %c0_i32, %c0_i32_0 : i32, i32
  }
  func.func @transform_9(%arg0: i32) -> (i32, i32) {
    %c0_i32 = arith.constant 0 : i32
    %c0_i32_0 = arith.constant 0 : i32
    %c0_i32_1 = arith.constant 0 : i32
    return %c0_i32, %c0_i32_0 : i32, i32
  }
  func.func @transform_10(%arg0: i32) -> (i32, i32, i32) {
    %c0_i32 = arith.constant 0 : i32
    %c0_i32_0 = arith.constant 0 : i32
    %c0_i32_1 = arith.constant 0 : i32
    return %arg0, %c0_i32, %c0_i32_0 : i32, i32, i32
  }
}

</mosaic_0001>

<llo_original>
// kernel: feature_extractor_forward.1
$region0: #{feature_extractor_forward.1}
  #allocation0 [shape = 'u32[]', space=smem, size = 0x4, offset = 0x4, fixed_abs, tag = 'smem constant byte address 0x4 - core index']
  #allocation1 [shape = 'u32[144,128]{1,0:T(1,128)}', space=vmem, size = 0x12000, scoped, tag = 'internal scratch']
  %s0 = inlined_call_operand.vmem [shape: bf16[2,256,16], index: 0, kind: input, shape index: {}]
  %s1 = inlined_call_operand.vmem [shape: bf16[9,64,256], index: 1, kind: input, shape index: {}]
  %s2 = inlined_call_operand.vmem [shape: bf16[9,16,128], index: 2, kind: input, shape index: {}]
  %s3 = inlined_call_operand.vmem [shape: f32[1,128], index: 3, kind: input, shape index: {}]
  %s4 = inlined_call_operand.vmem [shape: bf16[9,16,64], index: 4, kind: input, shape index: {}]
  %s5 = inlined_call_operand.vmem [shape: bf16[9,128,128], index: 5, kind: input, shape index: {}]
  %s6 = inlined_call_operand.vmem [shape: f32[1,128], index: 6, kind: input, shape index: {}]
  %s7 = inlined_call_operand.vmem [shape: bf16[128,128], index: 7, kind: input, shape index: {}]
  %s8 = inlined_call_operand.vmem [shape: f32[128,128], index: 8, kind: input, shape index: {}]
  %s9 = inlined_call_operand.vmem [shape: f32[1,128], index: 9, kind: input, shape index: {}]
  %s10 = inlined_call_operand.vmem [shape: f32[2,16,128], index: 10, kind: output, shape index: {}]
  %s11 = sld [smem:[#allocation0]]
  $region73: #{feature_extractor_forward.1} parent=0
    _
  %s13 = ssub.s32 1, %s11
  %s14 = scalar_select 0, %s13, %s11
  loop: start=0, step=1, limit=4
  $region2: #{feature_extractor_forward.1} parent=0 // loop_pre_header
    _
  $region3: #{feature_extractor_forward.1} parent=0 // loop_header
    %s16 = sphi 0, %s20
    %p17 = scmp.ge.s32.totalorder %s16, 4
    %s26 = sphi 0, %s28
    %s29 = sphi 0, %s26
    %s30 = sphi 0, %s29
    %s46 = sphi 0, %s30
    %s50 = sphi 0, %s50
    %s52 = sphi 0, %s50
    %s53 = sphi 0, %s52
    %s67 = sphi 0, %s53
    %s71 = sphi 0, %s71
    %s73 = sphi 0, %s71
    %s74 = sphi 0, %s73
    %s88 = sphi 0, %s74
    %s92 = sphi 0, %s92
    %s94 = sphi 0, %s92
    %s95 = sphi 0, %s94
    %s109 = sphi 0, %s95
    %s113 = sphi 0, %s113
    %s115 = sphi 0, %s113
    %s116 = sphi 0, %s115
    %s130 = sphi 0, %s116
    %s134 = sphi 0, %s134
    %s136 = sphi 0, %s134
    %s137 = sphi 0, %s136
    %s151 = sphi 0, %s137
    %s155 = sphi 0, %s155
    %s157 = sphi 0, %s155
    %s158 = sphi 0, %s157
    %s172 = sphi 0, %s158
    %s176 = sphi 0, %s176
    %s178 = sphi 0, %s176
    %s179 = sphi 0, %s178
    %s193 = sphi 0, %s179
    %s197 = sphi 0, %s197
    %s199 = sphi 0, %s197
    %s200 = sphi 0, %s199
    %s214 = sphi 0, %s200
    %s218 = sphi 0, %s218
    %s220 = sphi 0, %s218
    %s221 = sphi 0, %s220
    %s235 = sphi 0, %s221
    %s241 = sphi 0, %s243
    %s244 = sphi 0, %s241
    %s245 = sphi 0, %s244
    %s261 = sphi 0, %s245
  $region4: #{feature_extractor_forward.1} parent=0 // loop_header_branch
    %19 = sbr.rel (%p17) target = $region8
  $region5: #{feature_extractor_forward.1} parent=0 // loop_body
    %s21 = ssub.s32 %s16, 1
    %s22 = ssub.s32 %s16, 2
    %s23 = sadd.s32 %s16, 1
    %s24 = ssub.s32 %s16, %s23
    %p25 = scmp.eq.s32.totalorder %s24, 0
    %s27 = sadd.s32 %s26, 1
    %s28 = scalar_select %p25, %s26, %s27
    %p31 = pneg %p25
    %p32 = scmp.eq.s32.totalorder %s16, 1
    %p33 = por %p31, %p32
    %p34 = scmp.ne.s32.totalorder %s26, %s29
    %p35 = scmp.eq.s32.totalorder %s16, 0
    %p36 = por %p34, %p35
    %p37 = scmp.ne.s32.totalorder %s26, %s29
    %p38 = scmp.eq.s32.totalorder %s21, 1
    %p39 = por %p37, %p38
    %p40 = scmp.ne.s32.totalorder %s29, %s30
    %p41 = scmp.eq.s32.totalorder %s21, 0
    %p42 = por %p40, %p41
    %p43 = scmp.ne.s32.totalorder %s29, %s30
    %p44 = scmp.eq.s32.totalorder %s22, 1
    %p45 = por %p43, %p44
    %p47 = scmp.ne.s32.totalorder %s30, %s46
    %p48 = scmp.eq.s32.totalorder %s22, 0
    %p49 = por %p47, %p48
    %s51 = sadd.s32 %s50, 1
    %p54 = scmp.eq.s32.totalorder %s16, 1
    %p55 = scmp.ne.s32.totalorder %s50, %s52
    %p56 = scmp.eq.s32.totalorder %s16, 0
    %p57 = por %p55, %p56
    %p58 = scmp.ne.s32.totalorder %s50, %s52
    %p59 = scmp.eq.s32.totalorder %s21, 1
    %p60 = por %p58, %p59
    %p61 = scmp.ne.s32.totalorder %s52, %s53
    %p62 = scmp.eq.s32.totalorder %s21, 0
    %p63 = por %p61, %p62
    %p64 = scmp.ne.s32.totalorder %s52, %s53
    %p65 = scmp.eq.s32.totalorder %s22, 1
    %p66 = por %p64, %p65
    %p68 = scmp.ne.s32.totalorder %s53, %s67
    %p69 = scmp.eq.s32.totalorder %s22, 0
    %p70 = por %p68, %p69
    %s72 = sadd.s32 %s71, 1
    %p75 = scmp.eq.s32.totalorder %s16, 1
    %p76 = scmp.ne.s32.totalorder %s71, %s73
    %p77 = scmp.eq.s32.totalorder %s16, 0
    %p78 = por %p76, %p77
    %p79 = scmp.ne.s32.totalorder %s71, %s73
    %p80 = scmp.eq.s32.totalorder %s21, 1
    %p81 = por %p79, %p80
    %p82 = scmp.ne.s32.totalorder %s73, %s74
    %p83 = scmp.eq.s32.totalorder %s21, 0
    %p84 = por %p82, %p83
    %p85 = scmp.ne.s32.totalorder %s73, %s74
    %p86 = scmp.eq.s32.totalorder %s22, 1
    %p87 = por %p85, %p86
    %p89 = scmp.ne.s32.totalorder %s74, %s88
    %p90 = scmp.eq.s32.totalorder %s22, 0
    %p91 = por %p89, %p90
    %s93 = sadd.s32 %s92, 1
    %p96 = scmp.eq.s32.totalorder %s16, 1
    %p97 = scmp.ne.s32.totalorder %s92, %s94
    %p98 = scmp.eq.s32.totalorder %s16, 0
    %p99 = por %p97, %p98
    %p100 = scmp.ne.s32.totalorder %s92, %s94
    %p101 = scmp.eq.s32.totalorder %s21, 1
    %p102 = por %p100, %p101
    %p103 = scmp.ne.s32.totalorder %s94, %s95
    %p104 = scmp.eq.s32.totalorder %s21, 0
    %p105 = por %p103, %p104
    %p106 = scmp.ne.s32.totalorder %s94, %s95
    %p107 = scmp.eq.s32.totalorder %s22, 1
    %p108 = por %p106, %p107
    %p110 = scmp.ne.s32.totalorder %s95, %s109
    %p111 = scmp.eq.s32.totalorder %s22, 0
    %p112 = por %p110, %p111
    %s114 = sadd.s32 %s113, 1
    %p117 = scmp.eq.s32.totalorder %s16, 1
    %p118 = scmp.ne.s32.totalorder %s113, %s115
    %p119 = scmp.eq.s32.totalorder %s16, 0
    %p120 = por %p118, %p119
    %p121 = scmp.ne.s32.totalorder %s113, %s115
    %p122 = scmp.eq.s32.totalorder %s21, 1
    %p123 = por %p121, %p122
    %p124 = scmp.ne.s32.totalorder %s115, %s116
    %p125 = scmp.eq.s32.totalorder %s21, 0
    %p126 = por %p124, %p125
    %p127 = scmp.ne.s32.totalorder %s115, %s116
    %p128 = scmp.eq.s32.totalorder %s22, 1
    %p129 = por %p127, %p128
    %p131 = scmp.ne.s32.totalorder %s116, %s130
    %p132 = scmp.eq.s32.totalorder %s22, 0
    %p133 = por %p131, %p132
    %s135 = sadd.s32 %s134, 1
    %p138 = scmp.eq.s32.totalorder %s16, 1
    %p139 = scmp.ne.s32.totalorder %s134, %s136
    %p140 = scmp.eq.s32.totalorder %s16, 0
    %p141 = por %p139, %p140
    %p142 = scmp.ne.s32.totalorder %s134, %s136
    %p143 = scmp.eq.s32.totalorder %s21, 1
    %p144 = por %p142, %p143
    %p145 = scmp.ne.s32.totalorder %s136, %s137
    %p146 = scmp.eq.s32.totalorder %s21, 0
    %p147 = por %p145, %p146
    %p148 = scmp.ne.s32.totalorder %s136, %s137
    %p149 = scmp.eq.s32.totalorder %s22, 1
    %p150 = por %p148, %p149
    %p152 = scmp.ne.s32.totalorder %s137, %s151
    %p153 = scmp.eq.s32.totalorder %s22, 0
    %p154 = por %p152, %p153
    %s156 = sadd.s32 %s155, 1
    %p159 = scmp.eq.s32.totalorder %s16, 1
    %p160 = scmp.ne.s32.totalorder %s155, %s157
    %p161 = scmp.eq.s32.totalorder %s16, 0
    %p162 = por %p160, %p161
    %p163 = scmp.ne.s32.totalorder %s155, %s157
    %p164 = scmp.eq.s32.totalorder %s21, 1
    %p165 = por %p163, %p164
    %p166 = scmp.ne.s32.totalorder %s157, %s158
    %p167 = scmp.eq.s32.totalorder %s21, 0
    %p168 = por %p166, %p167
    %p169 = scmp.ne.s32.totalorder %s157, %s158
    %p170 = scmp.eq.s32.totalorder %s22, 1
    %p171 = por %p169, %p170
    %p173 = scmp.ne.s32.totalorder %s158, %s172
    %p174 = scmp.eq.s32.totalorder %s22, 0
    %p175 = por %p173, %p174
    %s177 = sadd.s32 %s176, 1
    %p180 = scmp.eq.s32.totalorder %s16, 1
    %p181 = scmp.ne.s32.totalorder %s176, %s178
    %p182 = scmp.eq.s32.totalorder %s16, 0
    %p183 = por %p181, %p182
    %p184 = scmp.ne.s32.totalorder %s176, %s178
    %p185 = scmp.eq.s32.totalorder %s21, 1
    %p186 = por %p184, %p185
    %p187 = scmp.ne.s32.totalorder %s178, %s179
    %p188 = scmp.eq.s32.totalorder %s21, 0
    %p189 = por %p187, %p188
    %p190 = scmp.ne.s32.totalorder %s178, %s179
    %p191 = scmp.eq.s32.totalorder %s22, 1
    %p192 = por %p190, %p191
    %p194 = scmp.ne.s32.totalorder %s179, %s193
    %p195 = scmp.eq.s32.totalorder %s22, 0
    %p196 = por %p194, %p195
    %s198 = sadd.s32 %s197, 1
    %p201 = scmp.eq.s32.totalorder %s16, 1
    %p202 = scmp.ne.s32.totalorder %s197, %s199
    %p203 = scmp.eq.s32.totalorder %s16, 0
    %p204 = por %p202, %p203
    %p205 = scmp.ne.s32.totalorder %s197, %s199
    %p206 = scmp.eq.s32.totalorder %s21, 1
    %p207 = por %p205, %p206
    %p208 = scmp.ne.s32.totalorder %s199, %s200
    %p209 = scmp.eq.s32.totalorder %s21, 0
    %p210 = por %p208, %p209
    %p211 = scmp.ne.s32.totalorder %s199, %s200
    %p212 = scmp.eq.s32.totalorder %s22, 1
    %p213 = por %p211, %p212
    %p215 = scmp.ne.s32.totalorder %s200, %s214
    %p216 = scmp.eq.s32.totalorder %s22, 0
    %p217 = por %p215, %p216
    %s219 = sadd.s32 %s218, 1
    %p222 = scmp.eq.s32.totalorder %s16, 1
    %p223 = scmp.ne.s32.totalorder %s218, %s220
    %p224 = scmp.eq.s32.totalorder %s16, 0
    %p225 = por %p223, %p224
    %p226 = scmp.ne.s32.totalorder %s218, %s220
    %p227 = scmp.eq.s32.totalorder %s21, 1
    %p228 = por %p226, %p227
    %p229 = scmp.ne.s32.totalorder %s220, %s221
    %p230 = scmp.eq.s32.totalorder %s21, 0
    %p231 = por %p229, %p230
    %p232 = scmp.ne.s32.totalorder %s220, %s221
    %p233 = scmp.eq.s32.totalorder %s22, 1
    %p234 = por %p232, %p233
    %p236 = scmp.ne.s32.totalorder %s221, %s235
    %p237 = scmp.eq.s32.totalorder %s22, 0
    %p238 = por %p236, %p237
    %s239 = ssub.s32 %s16, %s23
    %p240 = scmp.eq.s32.totalorder %s239, 0
    %s242 = sadd.s32 %s241, 1
    %s243 = scalar_select %p240, %s241, %s242
    %p246 = pneg %p240
    %p247 = scmp.eq.s32.totalorder %s16, 1
    %p248 = por %p246, %p247
    %p249 = scmp.ne.s32.totalorder %s241, %s244
    %p250 = scmp.eq.s32.totalorder %s16, 0
    %p251 = por %p249, %p250
    %p252 = scmp.ne.s32.totalorder %s241, %s244
    %p253 = scmp.eq.s32.totalorder %s21, 1
    %p254 = por %p252, %p253
    %p255 = scmp.ne.s32.totalorder %s244, %s245
    %p256 = scmp.eq.s32.totalorder %s21, 0
    %p257 = por %p255, %p256
    %p258 = scmp.ne.s32.totalorder %s244, %s245
    %p259 = scmp.eq.s32.totalorder %s22, 1
    %p260 = por %p258, %p259
    %p262 = scmp.ne.s32.totalorder %s245, %s261
    %p263 = scmp.eq.s32.totalorder %s22, 0
    %p264 = por %p262, %p263
    %p265 = scmp.le.s32.totalorder 1, %s16
    %p266 = scmp.lt.s32.totalorder %s16, 3
    %p267 = pnand %p265, %p266
    %p268 = pneg %p267
    // Predicated region
    $region9: #{feature_extractor_forward.1} parent=5 // pred_check
      _
    $region10: #{feature_extractor_forward.1} parent=5 // pred_check_branch
      %270 = sbr.rel (%p267) target = $region12
    $region11: #{feature_extractor_forward.1} parent=5 // pred_region
      %s271 = ssub.s32 %s16, 1
      // Predicated region
      $region13: #{feature_extractor_forward.1} parent=11 // pred_check
        %p272 = pneg %p63
      $region14: #{feature_extractor_forward.1} parent=11 // pred_check_branch
        %274 = sbr.rel (%p272) target = $region16
      $region15: #{feature_extractor_forward.1} parent=11 // pred_region
        _
      $region16: #{feature_extractor_forward.1} parent=11 // pred_fallthru
        _
      // Predicated region
      $region17: #{feature_extractor_forward.1} parent=11 // pred_check
        %p275 = pneg %p84
      $region18: #{feature_extractor_forward.1} parent=11 // pred_check_branch
        %277 = sbr.rel (%p275) target = $region20
      $region19: #{feature_extractor_forward.1} parent=11 // pred_region
        _
      $region20: #{feature_extractor_forward.1} parent=11 // pred_fallthru
        _
      // Predicated region
      $region21: #{feature_extractor_forward.1} parent=11 // pred_check
        %p278 = pneg %p105
      $region22: #{feature_extractor_forward.1} parent=11 // pred_check_branch
        %280 = sbr.rel (%p278) target = $region24
      $region23: #{feature_extractor_forward.1} parent=11 // pred_region
        _
      $region24: #{feature_extractor_forward.1} parent=11 // pred_fallthru
        _
      // Predicated region
      $region25: #{feature_extractor_forward.1} parent=11 // pred_check
        %p281 = pneg %p126
      $region26: #{feature_extractor_forward.1} parent=11 // pred_check_branch
        %283 = sbr.rel (%p281) target = $region28
      $region27: #{feature_extractor_forward.1} parent=11 // pred_region
        _
      $region28: #{feature_extractor_forward.1} parent=11 // pred_fallthru
        _
      // Predicated region
      $region29: #{feature_extractor_forward.1} parent=11 // pred_check
        %p284 = pneg %p147
      $region30: #{feature_extractor_forward.1} parent=11 // pred_check_branch
        %286 = sbr.rel (%p284) target = $region32
      $region31: #{feature_extractor_forward.1} parent=11 // pred_region
        _
      $region32: #{feature_extractor_forward.1} parent=11 // pred_fallthru
        _
      // Predicated region
      $region33: #{feature_extractor_forward.1} parent=11 // pred_check
        %p287 = pneg %p168
      $region34: #{feature_extractor_forward.1} parent=11 // pred_check_branch
        %289 = sbr.rel (%p287) target = $region36
      $region35: #{feature_extractor_forward.1} parent=11 // pred_region
        _
      $region36: #{feature_extractor_forward.1} parent=11 // pred_fallthru
        _
      // Predicated region
      $region37: #{feature_extractor_forward.1} parent=11 // pred_check
        %p290 = pneg %p189
      $region38: #{feature_extractor_forward.1} parent=11 // pred_check_branch
        %292 = sbr.rel (%p290) target = $region40
      $region39: #{feature_extractor_forward.1} parent=11 // pred_region
        _
      $region40: #{feature_extractor_forward.1} parent=11 // pred_fallthru
        _
      // Predicated region
      $region41: #{feature_extractor_forward.1} parent=11 // pred_check
        %p293 = pneg %p210
      $region42: #{feature_extractor_forward.1} parent=11 // pred_check_branch
        %295 = sbr.rel (%p293) target = $region44
      $region43: #{feature_extractor_forward.1} parent=11 // pred_region
        _
      $region44: #{feature_extractor_forward.1} parent=11 // pred_fallthru
        _
      // Predicated region
      $region45: #{feature_extractor_forward.1} parent=11 // pred_check
        %p296 = pneg %p231
      $region46: #{feature_extractor_forward.1} parent=11 // pred_check_branch
        %298 = sbr.rel (%p296) target = $region48
      $region47: #{feature_extractor_forward.1} parent=11 // pred_region
        _
      $region48: #{feature_extractor_forward.1} parent=11 // pred_fallthru
        _
    $region12: #{feature_extractor_forward.1} parent=5 // pred_fallthru
      _
    %p299 = scmp.lt.s32.totalorder %s16, 2
    // Predicated region
    $region49: #{feature_extractor_forward.1} parent=5 // pred_check
      %p300 = pneg %p299
    $region50: #{feature_extractor_forward.1} parent=5 // pred_check_branch
      %302 = sbr.rel (%p300) target = $region52
    $region51: #{feature_extractor_forward.1} parent=5 // pred_region
      // Predicated region
      $region53: #{feature_extractor_forward.1} parent=51 // pred_check
        %p303 = pneg %p36
      $region54: #{feature_extractor_forward.1} parent=51 // pred_check_branch
        %305 = sbr.rel (%p303) target = $region56
      $region55: #{feature_extractor_forward.1} parent=51 // pred_region
        %p306 = scmp.lt.s32.totalorder %s16, 1
        %s307 = scalar_select %p306, %s16, 1
        %s308 = smul.addr %s307, 32
        %s309 = smul.addr %s308, 4
        %s310 = scalar_lea.vmem %s0, %s309
      $region56: #{feature_extractor_forward.1} parent=51 // pred_fallthru
        _
    $region52: #{feature_extractor_forward.1} parent=5 // pred_fallthru
      _
    %p311 = scmp.le.s32.totalorder 1, %s16
    %p312 = scmp.lt.s32.totalorder %s16, 3
    %p313 = pnand %p311, %p312
    %p314 = pneg %p313
    // Predicated region
    $region57: #{feature_extractor_forward.1} parent=5 // pred_check
      _
    $region58: #{feature_extractor_forward.1} parent=5 // pred_check_branch
      %316 = sbr.rel (%p313) target = $region60
    $region59: #{feature_extractor_forward.1} parent=5 // pred_region
      %s317 = ssub.s32 %s16, 1
      %p318 = scmp.lt.s32.totalorder %s21, 1
      %s319 = scalar_select %p318, %s21, 1
      %s320 = smul.addr %s319, 32
      %s321 = smul.addr %s320, 4
      %s322 = scalar_lea.vmem %s0, %s321
      %p323 = pneg %p42
      %p324 = pneg %p39
      %p325 = pneg %p63
      %p326 = pneg %p60
      %p327 = pneg %p84
      %p328 = pneg %p81
      %p329 = pneg %p105
      %p330 = pneg %p102
      %p331 = pneg %p126
      %p332 = pneg %p123
      %p333 = pneg %p147
      %p334 = pneg %p144
      %p335 = pneg %p168
      %p336 = pneg %p165
      %p337 = pneg %p189
      %p338 = pneg %p186
      %p339 = pneg %p210
      %p340 = pneg %p207
      %p341 = pneg %p231
      %p342 = pneg %p228
      %p343 = pneg %p257
      %p344 = pneg %p254
      %p345 = scmp.lt.s32.totalorder %s21, 1
      %s346 = scalar_select %p345, %s21, 1
      %s347 = smul.addr %s346, 2
      %s348 = smul.addr %s347, 8
      %s349 = scalar_lea.vmem %s10, %s348
      %p350 = scmp.lt.s32.totalorder %s21, 1
      %s351 = scalar_select %p350, %s21, 1
      %s352 = smul.addr %s351, 32
      %s353 = smul.addr %s352, 4
      %s354 = scalar_lea.vmem %s0, %s353
      %p355 = scmp.lt.s32.totalorder %s21, 1
      %s356 = scalar_select %p355, %s21, 1
      %s357 = smul.addr %s356, 2
      %s358 = smul.addr %s357, 8
      %s359 = scalar_lea.vmem %s10, %s358
      %v361 = vld [vmem:[%s354] sm:$0xf]
      %v362 = vld [vmem:[%s354 + $0x4] sm:$0xf]
      %v363 = vld [vmem:[%s354 + $0x8] sm:$0xf]
      %v364 = vld [vmem:[%s354 + $0xc] sm:$0xf]
      %v365 = vld [vmem:[%s354 + $0x10] sm:$0xf]
      %v366 = vld [vmem:[%s354 + $0x14] sm:$0xf]
      %v367 = vld [vmem:[%s354 + $0x18] sm:$0xf]
      %v368 = vld [vmem:[%s354 + $0x1c] sm:$0xf]
      %v369 = vld [vmem:[%s354 + $0x20] sm:$0xf]
      %v370 = vld [vmem:[%s354 + $0x24] sm:$0xf]
      %v371 = vld [vmem:[%s354 + $0x28] sm:$0xf]
      %v372 = vld [vmem:[%s354 + $0x2c] sm:$0xf]
      %v373 = vld [vmem:[%s354 + $0x30] sm:$0xf]
      %v374 = vld [vmem:[%s354 + $0x34] sm:$0xf]
      %v375 = vld [vmem:[%s354 + $0x38] sm:$0xf]
      %v376 = vld [vmem:[%s354 + $0x3c] sm:$0xf]
      %v377 = vld [vmem:[%s354 + $0x40] sm:$0xf]
      %v378 = vld [vmem:[%s354 + $0x44] sm:$0xf]
      %v379 = vld [vmem:[%s354 + $0x48] sm:$0xf]
      %v380 = vld [vmem:[%s354 + $0x4c] sm:$0xf]
      %v381 = vld [vmem:[%s354 + $0x50] sm:$0xf]
      %v382 = vld [vmem:[%s354 + $0x54] sm:$0xf]
      %v383 = vld [vmem:[%s354 + $0x58] sm:$0xf]
      %v384 = vld [vmem:[%s354 + $0x5c] sm:$0xf]
      %v385 = vld [vmem:[%s354 + $0x60] sm:$0xf]
      %v386 = vld [vmem:[%s354 + $0x64] sm:$0xf]
      %v387 = vld [vmem:[%s354 + $0x68] sm:$0xf]
      %v388 = vld [vmem:[%s354 + $0x6c] sm:$0xf]
      %v389 = vld [vmem:[%s354 + $0x70] sm:$0xf]
      %v390 = vld [vmem:[%s354 + $0x74] sm:$0xf]
      %v391 = vld [vmem:[%s354 + $0x78] sm:$0xf]
      %v392 = vld [vmem:[%s354 + $0x7c] sm:$0xf]
      %v393 = vld [vmem:[%s1] sm:$0xff]
      %v394 = vld [vmem:[%s1 + $0x8] sm:$0xff]
      %v395 = vld [vmem:[%s1 + $0x10] sm:$0xff]
      %v396 = vld [vmem:[%s1 + $0x18] sm:$0xff]
      %v397 = vld [vmem:[%s1 + $0x20] sm:$0xff]
      %v398 = vld [vmem:[%s1 + $0x28] sm:$0xff]
      %v399 = vld [vmem:[%s1 + $0x30] sm:$0xff]
      %v400 = vld [vmem:[%s1 + $0x38] sm:$0xff]
      %v409 = vunpack.c.l.b16 %v393
      %v410 = vunpack.c.h.b16 %v393
      %v411 = vunpack.c.l.b16 %v394
      %v412 = vunpack.c.h.b16 %v394
      %v413 = vunpack.c.l.b16 %v395
      %v414 = vunpack.c.h.b16 %v395
      %v415 = vunpack.c.l.b16 %v396
      %v416 = vunpack.c.h.b16 %v396
      %v417 = vunpack.c.l.b16 %v397
      %v418 = vunpack.c.h.b16 %v397
      %v419 = vunpack.c.l.b16 %v398
      %v420 = vunpack.c.h.b16 %v398
      %v421 = vunpack.c.l.b16 %v399
      %v422 = vunpack.c.h.b16 %v399
      %v423 = vunpack.c.l.b16 %v400
      %v424 = vunpack.c.h.b16 %v400
      %v425 = vpack.c.b16 %v411, %v409
      %v426 = vpack.c.b16 %v412, %v410
      %v427 = vpack.c.b16 %v415, %v413
      %v428 = vpack.c.b16 %v416, %v414
      %v429 = vpack.c.b16 %v419, %v417
      %v430 = vpack.c.b16 %v420, %v418
      %v431 = vpack.c.b16 %v423, %v421
      %v432 = vpack.c.b16 %v424, %v422
      %v473 = vunpack.c.l.b16 %v361
      %v474 = vunpack.c.l.b16 %v362
      %v475 = vunpack.c.l.b16 %v363
      %v476 = vunpack.c.l.b16 %v364
      %v477 = vunpack.c.l.b16 %v365
      %v478 = vunpack.c.l.b16 %v366
      %v479 = vunpack.c.l.b16 %v367
      %v480 = vunpack.c.l.b16 %v368
      %v481 = vunpack.c.l.b16 %v369
      %v482 = vunpack.c.l.b16 %v370
      %v483 = vunpack.c.l.b16 %v371
      %v484 = vunpack.c.l.b16 %v372
      %v485 = vunpack.c.l.b16 %v373
      %v486 = vunpack.c.l.b16 %v374
      %v487 = vunpack.c.l.b16 %v375
      %v488 = vunpack.c.l.b16 %v376
      %v489 = vunpack.c.l.b16 %v377
      %v490 = vunpack.c.l.b16 %v378
      %v491 = vunpack.c.l.b16 %v379
      %v492 = vunpack.c.l.b16 %v380
      %v493 = vunpack.c.l.b16 %v381
      %v494 = vunpack.c.l.b16 %v382
      %v495 = vunpack.c.l.b16 %v383
      %v496 = vunpack.c.l.b16 %v384
      %v497 = vunpack.c.l.b16 %v385
      %v498 = vunpack.c.l.b16 %v386
      %v499 = vunpack.c.l.b16 %v387
      %v500 = vunpack.c.l.b16 %v388
      %v501 = vunpack.c.l.b16 %v389
      %v502 = vunpack.c.l.b16 %v390
      %v503 = vunpack.c.l.b16 %v391
      %v504 = vunpack.c.l.b16 %v392
      %v505 = vpack.c.b16 %v474, %v473
      %v506 = vpack.c.b16 %v476, %v475
      %v507 = vpack.c.b16 %v478, %v477
      %v508 = vpack.c.b16 %v480, %v479
      %v509 = vpack.c.b16 %v482, %v481
      %v510 = vpack.c.b16 %v484, %v483
      %v511 = vpack.c.b16 %v486, %v485
      %v512 = vpack.c.b16 %v488, %v487
      %v513 = vpack.c.b16 %v490, %v489
      %v514 = vpack.c.b16 %v492, %v491
      %v515 = vpack.c.b16 %v494, %v493
      %v516 = vpack.c.b16 %v496, %v495
      %v517 = vpack.c.b16 %v498, %v497
      %v518 = vpack.c.b16 %v500, %v499
      %v519 = vpack.c.b16 %v502, %v501
      %v520 = vpack.c.b16 %v504, %v503
      %537 = vmatprep.subr.bf16.mxu0 0
      %538 = vmatpush1.bf16.msra.mxu0 %v505
      %539 = vmatprep.subr.bf16.mxu0 0
      %540 = vmatpush1.bf16.msra.mxu0 %v506
      %541 = vmatprep.subr.bf16.mxu0 0
      %542 = vmatpush1.bf16.msra.mxu0 %v507
      %543 = vmatprep.subr.bf16.mxu0 0
      %544 = vmatpush1.bf16.msra.mxu0 %v508
      %545 = vmatprep.subr.bf16.mxu0 0
      %546 = vmatpush1.bf16.msra.mxu0 %v509
      %547 = vmatprep.subr.bf16.mxu0 0
      %548 = vmatpush1.bf16.msra.mxu0 %v510
      %549 = vmatprep.subr.bf16.mxu0 0
      %550 = vmatpush1.bf16.msra.mxu0 %v511
      %551 = vmatprep.subr.bf16.mxu0 0
      %552 = vmatpush1.bf16.msra.mxu0 %v512
      %553 = vmatprep.subr.bf16.mxu0 0
      %554 = vmatpush1.bf16.msra.mxu0 %v513
      %555 = vmatprep.subr.bf16.mxu0 0
      %556 = vmatpush1.bf16.msra.mxu0 %v514
      %557 = vmatprep.subr.bf16.mxu0 0
      %558 = vmatpush1.bf16.msra.mxu0 %v515
      %559 = vmatprep.subr.bf16.mxu0 0
      %560 = vmatpush1.bf16.msra.mxu0 %v516
      %561 = vmatprep.subr.bf16.mxu0 0
      %562 = vmatpush1.bf16.msra.mxu0 %v517
      %563 = vmatprep.subr.bf16.mxu0 0
      %564 = vmatpush1.bf16.msra.mxu0 %v518
      %565 = vmatprep.subr.bf16.mxu0 0
      %566 = vmatpush1.bf16.msra.mxu0 %v519
      %567 = vmatprep.subr.bf16.mxu0 0
      %568 = vmatpush1.bf16.msra.mxu0 %v520
      %569 = vmatprep.mubr.bf16.mxu0 %v426
      %570 = vmatmul.mubr.bf16.gmra.mrb[0].mxu0 %v425
      %v571 = vpop.f32.mrb[0].mxu0
      %v572 = vadd.f32 0.0, %v571
      %v573 = vpop.f32.mrb[0].mxu0
      %v574 = vpop.f32.mrb[0].mxu0
      %v575 = vadd.f32 0.0, %v574
      %v576 = vpop.f32.mrb[0].mxu0
      %577 = vmatprep.mubr.bf16.mxu0 %v428
      %578 = vmatmul.mubr.bf16.gmra.mrb[0].mxu0 %v427
      %v579 = vpop.f32.mrb[0].mxu0
      %v580 = vadd.f32 0.0, %v579
      %v581 = vpop.f32.mrb[0].mxu0
      %v582 = vpop.f32.mrb[0].mxu0
      %v583 = vadd.f32 0.0, %v582
      %v584 = vpop.f32.mrb[0].mxu0
      %585 = vmatprep.mubr.bf16.mxu0 %v430
      %586 = vmatmul.mubr.bf16.gmra.mrb[0].mxu0 %v429
      %v587 = vpop.f32.mrb[0].mxu0
      %v588 = vadd.f32 0.0, %v587
      %v589 = vpop.f32.mrb[0].mxu0
      %v590 = vpop.f32.mrb[0].mxu0
      %v591 = vadd.f32 0.0, %v590
      %v592 = vpop.f32.mrb[0].mxu0
      %593 = vmatprep.mubr.bf16.mxu0 %v432
      %594 = vmatmul.mubr.bf16.gmra.mrb[0].mxu0 %v431
      %v595 = vpop.f32.mrb[0].mxu0
      %v596 = vadd.f32 0.0, %v595
      %v597 = vpop.f32.mrb[0].mxu0
      %v598 = vpop.f32.mrb[0].mxu0
      %v599 = vadd.f32 0.0, %v598
      %v600 = vpop.f32.mrb[0].mxu0
      %601 = vdwg.mxu0
      %v602 = vpack.c.bf16 %v575, %v572
      %v603 = vpack.c.bf16 %v583, %v580
      %v604 = vpack.c.bf16 %v591, %v588
      %v605 = vpack.c.bf16 %v599, %v596
      %v606 = vld [vmem:[%s2] sm:$0xf]
      %v607 = vld [vmem:[%s2 + $0x4] sm:$0xf]
      %s608 = scalar_lea.vmem %s1, 64
      %v609 = vld [vmem:[%s608] sm:$0xff]
      %v610 = vld [vmem:[%s608 + $0x8] sm:$0xff]
      %v611 = vld [vmem:[%s608 + $0x10] sm:$0xff]
      %v612 = vld [vmem:[%s608 + $0x18] sm:$0xff]
      %v613 = vld [vmem:[%s608 + $0x20] sm:$0xff]
      %v614 = vld [vmem:[%s608 + $0x28] sm:$0xff]
      %v615 = vld [vmem:[%s608 + $0x30] sm:$0xff]
      %v616 = vld [vmem:[%s608 + $0x38] sm:$0xff]
      %v625 = vunpack.c.l.b16 %v609
      %v626 = vunpack.c.h.b16 %v609
      %v627 = vunpack.c.l.b16 %v610
      %v628 = vunpack.c.h.b16 %v610
      %v629 = vunpack.c.l.b16 %v611
      %v630 = vunpack.c.h.b16 %v611
      %v631 = vunpack.c.l.b16 %v612
      %v632 = vunpack.c.h.b16 %v612
      %v633 = vunpack.c.l.b16 %v613
      %v634 = vunpack.c.h.b16 %v613
      %v635 = vunpack.c.l.b16 %v614
      %v636 = vunpack.c.h.b16 %v614
      %v637 = vunpack.c.l.b16 %v615
      %v638 = vunpack.c.h.b16 %v615
      %v639 = vunpack.c.l.b16 %v616
      %v640 = vunpack.c.h.b16 %v616
      %v641 = vpack.c.b16 %v627, %v625
      %v642 = vpack.c.b16 %v628, %v626
      %v643 = vpack.c.b16 %v631, %v629
      %v644 = vpack.c.b16 %v632, %v630
      %v645 = vpack.c.b16 %v635, %v633
      %v646 = vpack.c.b16 %v636, %v634
      %v647 = vpack.c.b16 %v639, %v637
      %v648 = vpack.c.b16 %v640, %v638
      %657 = vmatprep.subr.bf16.mxu0 0
      %658 = vmatpush1.bf16.msra.mxu0 %v505
      %659 = vmatprep.subr.bf16.mxu0 0
      %660 = vmatpush1.bf16.msra.mxu0 %v506
      %661 = vmatprep.subr.bf16.mxu0 0
      %662 = vmatpush1.bf16.msra.mxu0 %v507
      %663 = vmatprep.subr.bf16.mxu0 0
      %664 = vmatpush1.bf16.msra.mxu0 %v508
      %665 = vmatprep.subr.bf16.mxu0 0
      %666 = vmatpush1.bf16.msra.mxu0 %v509
      %667 = vmatprep.subr.bf16.mxu0 0
      %668 = vmatpush1.bf16.msra.mxu0 %v510
      %669 = vmatprep.subr.bf16.mxu0 0
      %670 = vmatpush1.bf16.msra.mxu0 %v511
      %671 = vmatprep.subr.bf16.mxu0 0
      %672 = vmatpush1.bf16.msra.mxu0 %v512
      %673 = vmatprep.subr.bf16.mxu0 0
      %674 = vmatpush1.bf16.msra.mxu0 %v513
      %675 = vmatprep.subr.bf16.mxu0 0
      %676 = vmatpush1.bf16.msra.mxu0 %v514
      %677 = vmatprep.subr.bf16.mxu0 0
      %678 = vmatpush1.bf16.msra.mxu0 %v515
      %679 = vmatprep.subr.bf16.mxu0 0
      %680 = vmatpush1.bf16.msra.mxu0 %v516
      %681 = vmatprep.subr.bf16.mxu0 0
      %682 = vmatpush1.bf16.msra.mxu0 %v517
      %683 = vmatprep.subr.bf16.mxu0 0
      %684 = vmatpush1.bf16.msra.mxu0 %v518
      %685 = vmatprep.subr.bf16.mxu0 0
      %686 = vmatpush1.bf16.msra.mxu0 %v519
      %687 = vmatprep.subr.bf16.mxu0 0
      %688 = vmatpush1.bf16.msra.mxu0 %v520
      %689 = vmatprep.mubr.bf16.mxu0 %v642
      %690 = vmatmul.mubr.bf16.gmra.mrb[0].mxu0 %v641
      %v691 = vpop.f32.mrb[0].mxu0
      %v692 = vadd.f32 0.0, %v691
      %v693 = vpop.f32.mrb[0].mxu0
      %v694 = vpop.f32.mrb[0].mxu0
      %v695 = vadd.f32 0.0, %v694
      %v696 = vpop.f32.mrb[0].mxu0
      %697 = vmatprep.mubr.bf16.mxu0 %v644
      %698 = vmatmul.mubr.bf16.gmra.mrb[0].mxu0 %v643
      %v699 = vpop.f32.mrb[0].mxu0
      %v700 = vadd.f32 0.0, %v699
      %v701 = vpop.f32.mrb[0].mxu0
      %v702 = vpop.f32.mrb[0].mxu0
      %v703 = vadd.f32 0.0, %v702
      %v704 = vpop.f32.mrb[0].mxu0
      %705 = vmatprep.mubr.bf16.mxu0 %v646
      %706 = vmatmul.mubr.bf16.gmra.mrb[0].mxu0 %v645
      %v707 = vpop.f32.mrb[0].mxu0
      %v708 = vadd.f32 0.0, %v707
      %v709 = vpop.f32.mrb[0].mxu0
      %v710 = vpop.f32.mrb[0].mxu0
      %v711 = vadd.f32 0.0, %v710
      %v712 = vpop.f32.mrb[0].mxu0
      %713 = vmatprep.mubr.bf16.mxu0 %v648
      %714 = vmatmul.mubr.bf16.gmra.mrb[0].mxu0 %v647
      %v715 = vpop.f32.mrb[0].mxu0
      %v716 = vadd.f32 0.0, %v715
      %v717 = vpop.f32.mrb[0].mxu0
      %v718 = vpop.f32.mrb[0].mxu0
      %v719 = vadd.f32 0.0, %v718
      %v720 = vpop.f32.mrb[0].mxu0
      %721 = vdwg.mxu0
      %v722 = vpack.c.bf16 %v695, %v692
      %v723 = vpack.c.bf16 %v703, %v700
      %v724 = vpack.c.bf16 %v711, %v708
      %v725 = vpack.c.bf16 %v719, %v716
      %s726 = scalar_lea.vmem %s2, 8
      %v727 = vld [vmem:[%s726] sm:$0xf]
      %v728 = vld [vmem:[%s726 + $0x4] sm:$0xf]
      %v731 = vunpack.c.l.b16 %v727
      %v732 = vunpack.c.l.b16 %v728
      %v733 = vpack.c.b16 %v732, %v731
      %vm735 = vcmask 130048
      %v737 = vsel %vm735, %v722, 0
      %v740 = vsel %vm735, %v723, 0
      %v743 = vsel %vm735, %v724, 0
      %v746 = vsel %vm735, %v725, 0
      %748 = vmatprep.subr.bf16.mxu0 0
      %749 = vmatpush1.bf16.msra.mxu0 %v733
      %750 = vmatprep.subr.bf16.mxu0 0
      %751 = vmatpush1.bf16.msra.mxu0 0
      %752 = vmatprep.subr.bf16.mxu0 0
      %753 = vmatpush1.bf16.msra.mxu0 0
      %754 = vmatprep.subr.bf16.mxu0 0
      %755 = vmatpush1.bf16.msra.mxu0 0
      %756 = vmatprep.subr.bf16.mxu0 0
      %757 = vmatpush1.bf16.msra.mxu0 0
      %758 = vmatprep.subr.bf16.mxu0 0
      %759 = vmatpush1.bf16.msra.mxu0 0
      %760 = vmatprep.subr.bf16.mxu0 0
      %761 = vmatpush1.bf16.msra.mxu0 0
      %762 = vmatprep.subr.bf16.mxu0 0
      %763 = vmatpush1.bf16.msra.mxu0 0
      %764 = vmatprep.subr.bf16.mxu0 0
      %765 = vmatpush1.bf16.msra.mxu0 0
      %766 = vmatprep.subr.bf16.mxu0 0
      %767 = vmatpush1.bf16.msra.mxu0 0
      %768 = vmatprep.subr.bf16.mxu0 0
      %769 = vmatpush1.bf16.msra.mxu0 0
      %770 = vmatprep.subr.bf16.mxu0 0
      %771 = vmatpush1.bf16.msra.mxu0 0
      %772 = vmatprep.subr.bf16.mxu0 0
      %773 = vmatpush1.bf16.msra.mxu0 0
      %774 = vmatprep.subr.bf16.mxu0 0
      %775 = vmatpush1.bf16.msra.mxu0 0
      %776 = vmatprep.subr.bf16.mxu0 0
      %777 = vmatpush1.bf16.msra.mxu0 0
      %778 = vmatprep.subr.bf16.mxu0 0
      %779 = vmatpush1.bf16.msra.mxu0 0
      %780 = vmatprep.mubr.bf16.mxu0 0
      %781 = vmatmul.mubr.bf16.gmra.mrb[0].mxu0 %v737
      %v782 = vpop.f32.mrb[0].mxu0
      %v783 = vadd.f32 0.0, %v782
      %v784 = vpop.f32.mrb[0].mxu0
      %v785 = vpop.f32.mrb[0].mxu0
      %v786 = vadd.f32 0.0, %v785
      %v787 = vpop.f32.mrb[0].mxu0
      %788 = vmatprep.mubr.bf16.mxu0 0
      %789 = vmatmul.mubr.bf16.gmra.mrb[0].mxu0 %v740
      %v790 = vpop.f32.mrb[0].mxu0
      %v791 = vadd.f32 0.0, %v790
      %v792 = vpop.f32.mrb[0].mxu0
      %v793 = vpop.f32.mrb[0].mxu0
      %v794 = vadd.f32 0.0, %v793
      %v795 = vpop.f32.mrb[0].mxu0
      %796 = vmatprep.mubr.bf16.mxu0 0
      %797 = vmatmul.mubr.bf16.gmra.mrb[0].mxu0 %v743
      %v798 = vpop.f32.mrb[0].mxu0
      %v799 = vadd.f32 0.0, %v798
      %v800 = vpop.f32.mrb[0].mxu0
      %v801 = vpop.f32.mrb[0].mxu0
      %v802 = vadd.f32 0.0, %v801
      %v803 = vpop.f32.mrb[0].mxu0
      %804 = vmatprep.mubr.bf16.mxu0 0
      %805 = vmatmul.mubr.bf16.gmra.mrb[0].mxu0 %v746
      %v806 = vpop.f32.mrb[0].mxu0
      %v807 = vadd.f32 0.0, %v806
      %v808 = vpop.f32.mrb[0].mxu0
      %v809 = vpop.f32.mrb[0].mxu0
      %v810 = vadd.f32 0.0, %v809
      %v811 = vpop.f32.mrb[0].mxu0
      %812 = vdwg.mxu0
      %v815 = vunpack.c.l.b16 %v606
      %v816 = vunpack.c.l.b16 %v607
      %v817 = vpack.c.b16 %v816, %v815
      %v820 = vsel %vm735, %v602, 0
      %v823 = vsel %vm735, %v603, 0
      %v826 = vsel %vm735, %v604, 0
      %v829 = vsel %vm735, %v605, 0
      %831 = vmatprep.subr.bf16.mxu0 0
      %832 = vmatpush1.bf16.msra.mxu0 %v817
      %833 = vmatprep.subr.bf16.mxu0 0
      %834 = vmatpush1.bf16.msra.mxu0 0
      %835 = vmatprep.subr.bf16.mxu0 0
      %836 = vmatpush1.bf16.msra.mxu0 0
      %837 = vmatprep.subr.bf16.mxu0 0
      %838 = vmatpush1.bf16.msra.mxu0 0
      %839 = vmatprep.subr.bf16.mxu0 0
      %840 = vmatpush1.bf16.msra.mxu0 0
      %841 = vmatprep.subr.bf16.mxu0 0
      %842 = vmatpush1.bf16.msra.mxu0 0
      %843 = vmatprep.subr.bf16.mxu0 0
      %844 = vmatpush1.bf16.msra.mxu0 0
      %845 = vmatprep.subr.bf16.mxu0 0
      %846 = vmatpush1.bf16.msra.mxu0 0
      %847 = vmatprep.subr.bf16.mxu0 0
      %848 = vmatpush1.bf16.msra.mxu0 0
      %849 = vmatprep.subr.bf16.mxu0 0
      %850 = vmatpush1.bf16.msra.mxu0 0
      %851 = vmatprep.subr.bf16.mxu0 0
      %852 = vmatpush1.bf16.msra.mxu0 0
      %853 = vmatprep.subr.bf16.mxu0 0
      %854 = vmatpush1.bf16.msra.mxu0 0
      %855 = vmatprep.subr.bf16.mxu0 0
      %856 = vmatpush1.bf16.msra.mxu0 0
      %857 = vmatprep.subr.bf16.mxu0 0
      %858 = vmatpush1.bf16.msra.mxu0 0
      %859 = vmatprep.subr.bf16.mxu0 0
      %860 = vmatpush1.bf16.msra.mxu0 0
      %861 = vmatprep.subr.bf16.mxu0 0
      %862 = vmatpush1.bf16.msra.mxu0 0
      %863 = vmatprep.mubr.bf16.mxu0 0
      %864 = vmatmul.mubr.bf16.gmra.mrb[0].mxu0 %v820
      %v865 = vpop.f32.mrb[0].mxu0
      %v866 = vadd.f32 %v783, %v865
      %v867 = vpop.f32.mrb[0].mxu0
      %v868 = vpop.f32.mrb[0].mxu0
      %v869 = vadd.f32 %v786, %v868
      %v870 = vpop.f32.mrb[0].mxu0
      %871 = vmatprep.mubr.bf16.mxu0 0
      %872 = vmatmul.mubr.bf16.gmra.mrb[0].mxu0 %v823
      %v873 = vpop.f32.mrb[0].mxu0
      %v874 = vadd.f32 %v791, %v873
      %v875 = vpop.f32.mrb[0].mxu0
      %v876 = vpop.f32.mrb[0].mxu0
      %v877 = vadd.f32 %v794, %v876
      %v878 = vpop.f32.mrb[0].mxu0
      %879 = vmatprep.mubr.bf16.mxu0 0
      %880 = vmatmul.mubr.bf16.gmra.mrb[0].mxu0 %v826
      %v881 = vpop.f32.mrb[0].mxu0
      %v882 = vadd.f32 %v799, %v881
      %v883 = vpop.f32.mrb[0].mxu0
      %v884 = vpop.f32.mrb[0].mxu0
      %v885 = vadd.f32 %v802, %v884
      %v886 = vpop.f32.mrb[0].mxu0
      %887 = vmatprep.mubr.bf16.mxu0 0
      %888 = vmatmul.mubr.bf16.gmra.mrb[0].mxu0 %v829
      %v889 = vpop.f32.mrb[0].mxu0
      %v890 = vadd.f32 %v807, %v889
      %v891 = vpop.f32.mrb[0].mxu0
      %v892 = vpop.f32.mrb[0].mxu0
      %v893 = vadd.f32 %v810, %v892
      %v894 = vpop.f32.mrb[0].mxu0
      %895 = vdwg.mxu0
      %s896 = scalar_lea.vmem %s1, 128
      %v897 = vld [vmem:[%s896] sm:$0xff]
      %v898 = vld [vmem:[%s896 + $0x8] sm:$0xff]
      %v899 = vld [vmem:[%s896 + $0x10] sm:$0xff]
      %v900 = vld [vmem:[%s896 + $0x18] sm:$0xff]
      %v901 = vld [vmem:[%s896 + $0x20] sm:$0xff]
      %v902 = vld [vmem:[%s896 + $0x28] sm:$0xff]
      %v903 = vld [vmem:[%s896 + $0x30] sm:$0xff]
      %v904 = vld [vmem:[%s896 + $0x38] sm:$0xff]
      %v913 = vunpack.c.l.b16 %v897
      %v914 = vunpack.c.h.b16 %v897
      %v915 = vunpack.c.l.b16 %v898
      %v916 = vunpack.c.h.b16 %v898
      %v917 = vunpack.c.l.b16 %v899
      %v918 = vunpack.c.h.b16 %v899
      %v919 = vunpack.c.l.b16 %v900
      %v920 = vunpack.c.h.b16 %v900
      %v921 = vunpack.c.l.b16 %v901
      %v922 = vunpack.c.h.b16 %v901
      %v923 = vunpack.c.l.b16 %v902
      %v924 = vunpack.c.h.b16 %v902
      %v925 = vunpack.c.l.b16 %v903
      %v926 = vunpack.c.h.b16 %v903
      %v927 = vunpack.c.l.b16 %v904
      %v928 = vunpack.c.h.b16 %v904
      %v929 = vpack.c.b16 %v915, %v913
      %v930 = vpack.c.b16 %v916, %v914
      %v931 = vpack.c.b16 %v919, %v917
      %v932 = vpack.c.b16 %v920, %v918
      %v933 = vpack.c.b16 %v923, %v921
      %v934 = vpack.c.b16 %v924, %v922
      %v935 = vpack.c.b16 %v927, %v925
      %v936 = vpack.c.b16 %v928, %v926
      %945 = vmatprep.subr.bf16.mxu0 0
      %946 = vmatpush1.bf16.msra.mxu0 %v505
      %947 = vmatprep.subr.bf16.mxu0 0
      %948 = vmatpush1.bf16.msra.mxu0 %v506
      %949 = vmatprep.subr.bf16.mxu0 0
      %950 = vmatpush1.bf16.msra.mxu0 %v507
      %951 = vmatprep.subr.bf16.mxu0 0
      %952 = vmatpush1.bf16.msra.mxu0 %v508
      %953 = vmatprep.subr.bf16.mxu0 0
      %954 = vmatpush1.bf16.msra.mxu0 %v509
      %955 = vmatprep.subr.bf16.mxu0 0
      %956 = vmatpush1.bf16.msra.mxu0 %v510
      %957 = vmatprep.subr.bf16.mxu0 0
      %958 = vmatpush1.bf16.msra.mxu0 %v511
      %959 = vmatprep.subr.bf16.mxu0 0
      %960 = vmatpush1.bf16.msra.mxu0 %v512
      %961 = vmatprep.subr.bf16.mxu0 0
      %962 = vmatpush1.bf16.msra.mxu0 %v513
      %963 = vmatprep.subr.bf16.mxu0 0
      %964 = vmatpush1.bf16.msra.mxu0 %v514
      %965 = vmatprep.subr.bf16.mxu0 0
      %966 = vmatpush1.bf16.msra.mxu0 %v515
      %967 = vmatprep.subr.bf16.mxu0 0
      %968 = vmatpush1.bf16.msra.mxu0 %v516
      %969 = vmatprep.subr.bf16.mxu0 0
      %970 = vmatpush1.bf16.msra.mxu0 %v517
      %971 = vmatprep.subr.bf16.mxu0 0
      %972 = vmatpush1.bf16.msra.mxu0 %v518
      %973 = vmatprep.subr.bf16.mxu0 0
      %974 = vmatpush1.bf16.msra.mxu0 %v519
      %975 = vmatprep.subr.bf16.mxu0 0
      %976 = vmatpush1.bf16.msra.mxu0 %v520
      %977 = vmatprep.mubr.bf16.mxu0 %v930
      %978 = vmatmul.mubr.bf16.gmra.mrb[0].mxu0 %v929
      %v979 = vpop.f32.mrb[0].mxu0
      %v980 = vadd.f32 0.0, %v979
      %v981 = vpop.f32.mrb[0].mxu0
      %v982 = vpop.f32.mrb[0].mxu0
      %v983 = vadd.f32 0.0, %v982
      %v984 = vpop.f32.mrb[0].mxu0
      %985 = vmatprep.mubr.bf16.mxu0 %v932
      %986 = vmatmul.mubr.bf16.gmra.mrb[0].mxu0 %v931
      %v987 = vpop.f32.mrb[0].mxu0
      %v988 = vadd.f32 0.0, %v987
      %v989 = vpop.f32.mrb[0].mxu0
      %v990 = vpop.f32.mrb[0].mxu0
      %v991 = vadd.f32 0.0, %v990
      %v992 = vpop.f32.mrb[0].mxu0
      %993 = vmatprep.mubr.bf16.mxu0 %v934
      %994 = vmatmul.mubr.bf16.gmra.mrb[0].mxu0 %v933
      %v995 = vpop.f32.mrb[0].mxu0
      %v996 = vadd.f32 0.0, %v995
      %v997 = vpop.f32.mrb[0].mxu0
      %v998 = vpop.f32.mrb[0].mxu0
      %v999 = vadd.f32 0.0, %v998
      %v1000 = vpop.f32.mrb[0].mxu0
      %1001 = vmatprep.mubr.bf16.mxu0 %v936
      %1002 = vmatmul.mubr.bf16.gmra.mrb[0].mxu0 %v935
      %v1003 = vpop.f32.mrb[0].mxu0
      %v1004 = vadd.f32 0.0, %v1003
      %v1005 = vpop.f32.mrb[0].mxu0
      %v1006 = vpop.f32.mrb[0].mxu0
      %v1007 = vadd.f32 0.0, %v1006
      %v1008 = vpop.f32.mrb[0].mxu0
      %1009 = vdwg.mxu0
      %v1010 = vpack.c.bf16 %v983, %v980
      %v1011 = vpack.c.bf16 %v991, %v988
      %v1012 = vpack.c.bf16 %v999, %v996
      %v1013 = vpack.c.bf16 %v1007, %v1004
      %s1014 = scalar_lea.vmem %s2, 16
      %v1015 = vld [vmem:[%s1014] sm:$0xf]
      %v1016 = vld [vmem:[%s1014 + $0x4] sm:$0xf]
      %v1019 = vunpack.c.l.b16 %v1015
      %v1020 = vunpack.c.l.b16 %v1016
      %v1021 = vpack.c.b16 %v1020, %v1019
      %v1024 = vsel %vm735, %v1010, 0
      %v1027 = vsel %vm735, %v1011, 0
      %v1030 = vsel %vm735, %v1012, 0
      %v1033 = vsel %vm735, %v1013, 0
      %1035 = vmatprep.subr.bf16.mxu0 0
      %1036 = vmatpush1.bf16.msra.mxu0 %v1021
      %1037 = vmatprep.subr.bf16.mxu0 0
      %1038 = vmatpush1.bf16.msra.mxu0 0
      %1039 = vmatprep.subr.bf16.mxu0 0
      %1040 = vmatpush1.bf16.msra.mxu0 0
      %1041 = vmatprep.subr.bf16.mxu0 0
      %1042 = vmatpush1.bf16.msra.mxu0 0
      %1043 = vmatprep.subr.bf16.mxu0 0
      %1044 = vmatpush1.bf16.msra.mxu0 0
      %1045 = vmatprep.subr.bf16.mxu0 0
      %1046 = vmatpush1.bf16.msra.mxu0 0
      %1047 = vmatprep.subr.bf16.mxu0 0
      %1048 = vmatpush1.bf16.msra.mxu0 0
      %1049 = vmatprep.subr.bf16.mxu0 0
      %1050 = vmatpush1.bf16.msra.mxu0 0
      %1051 = vmatprep.subr.bf16.mxu0 0
      %1052 = vmatpush1.bf16.msra.mxu0 0
      %1053 = vmatprep.subr.bf16.mxu0 0
      %1054 = vmatpush1.bf16.msra.mxu0 0
      %1055 = vmatprep.subr.bf16.mxu0 0
      %1056 = vmatpush1.bf16.msra.mxu0 0
      %1057 = vmatprep.subr.bf16.mxu0 0
      %1058 = vmatpush1.bf16.msra.mxu0 0
      %1059 = vmatprep.subr.bf16.mxu0 0
      %1060 = vmatpush1.bf16.msra.mxu0 0
      %1061 = vmatprep.subr.bf16.mxu0 0
      %1062 = vmatpush1.bf16.msra.mxu0 0
      %1063 = vmatprep.subr.bf16.mxu0 0
      %1064 = vmatpush1.bf16.msra.mxu0 0
      %1065 = vmatprep.subr.bf16.mxu0 0
      %1066 = vmatpush1.bf16.msra.mxu0 0
      %1067 = vmatprep.mubr.bf16.mxu0 0
      %1068 = vmatmul.mubr.bf16.gmra.mrb[0].mxu0 %v1024
      %v1069 = vpop.f32.mrb[0].mxu0
      %v1070 = vadd.f32 0.0, %v1069
      %v1071 = vpop.f32.mrb[0].mxu0
      %v1072 = vpop.f32.mrb[0].mxu0
      %v1073 = vadd.f32 0.0, %v1072
      %v1074 = vpop.f32.mrb[0].mxu0
      %1075 = vmatprep.mubr.bf16.mxu0 0
      %1076 = vmatmul.mubr.bf16.gmra.mrb[0].mxu0 %v1027
      %v1077 = vpop.f32.mrb[0].mxu0
      %v1078 = vadd.f32 0.0, %v1077
      %v1079 = vpop.f32.mrb[0].mxu0
      %v1080 = vpop.f32.mrb[0].mxu0
      %v1081 = vadd.f32 0.0, %v1080
      %v1082 = vpop.f32.mrb[0].mxu0
      %1083 = vmatprep.mubr.bf16.mxu0 0
      %1084 = vmatmul.mubr.bf16.gmra.mrb[0].mxu0 %v1030
      %v1085 = vpop.f32.mrb[0].mxu0
      %v1086 = vadd.f32 0.0, %v1085
      %v1087 = vpop.f32.mrb[0].mxu0
      %v1088 = vpop.f32.mrb[0].mxu0
      %v1089 = vadd.f32 0.0, %v1088
      %v1090 = vpop.f32.mrb[0].mxu0
      %1091 = vmatprep.mubr.bf16.mxu0 0
      %1092 = vmatmul.mubr.bf16.gmra.mrb[0].mxu0 %v1033
      %v1093 = vpop.f32.mrb[0].mxu0
      %v1094 = vadd.f32 0.0, %v1093
      %v1095 = vpop.f32.mrb[0].mxu0
      %v1096 = vpop.f32.mrb[0].mxu0
      %v1097 = vadd.f32 0.0, %v1096
      %v1098 = vpop.f32.mrb[0].mxu0
      %1099 = vdwg.mxu0
      %v1100 = vadd.f32 %v866, %v1070
      %v1101 = vadd.f32 %v869, %v1073
      %v1102 = vadd.f32 %v874, %v1078
      %v1103 = vadd.f32 %v877, %v1081
      %v1104 = vadd.f32 %v882, %v1086
      %v1105 = vadd.f32 %v885, %v1089
      %v1106 = vadd.f32 %v890, %v1094
      %v1107 = vadd.f32 %v893, %v1097
      %s1108 = scalar_lea.vmem %s1, 192
      %v1109 = vld [vmem:[%s1108] sm:$0xff]
      %v1110 = vld [vmem:[%s1108 + $0x8] sm:$0xff]
      %v1111 = vld [vmem:[%s1108 + $0x10] sm:$0xff]
      %v1112 = vld [vmem:[%s1108 + $0x18] sm:$0xff]
      %v1113 = vld [vmem:[%s1108 + $0x20] sm:$0xff]
      %v1114 = vld [vmem:[%s1108 + $0x28] sm:$0xff]
      %v1115 = vld [vmem:[%s1108 + $0x30] sm:$0xff]
      %v1116 = vld [vmem:[%s1108 + $0x38] sm:$0xff]
      %v1125 = vunpack.c.l.b16 %v1109
      %v1126 = vunpack.c.h.b16 %v1109
      %v1127 = vunpack.c.l.b16 %v1110
      %v1128 = vunpack.c.h.b16 %v1110
      %v1129 = vunpack.c.l.b16 %v1111
      %v1130 = vunpack.c.h.b16 %v1111
      %v1131 = vunpack.c.l.b16 %v1112
      %v1132 = vunpack.c.h.b16 %v1112
      %v1133 = vunpack.c.l.b16 %v1113
      %v1134 = vunpack.c.h.b16 %v1113
      %v1135 = vunpack.c.l.b16 %v1114
      %v1136 = vunpack.c.h.b16 %v1114
      %v1137 = vunpack.c.l.b16 %v1115
      %v1138 = vunpack.c.h.b16 %v1115
      %v1139 = vunpack.c.l.b16 %v1116
      %v1140 = vunpack.c.h.b16 %v1116
      %v1141 = vpack.c.b16 %v1127, %v1125
      %v1142 = vpack.c.b16 %v1128, %v1126
      %v1143 = vpack.c.b16 %v1131, %v1129
      %v1144 = vpack.c.b16 %v1132, %v1130
      %v1145 = vpack.c.b16 %v1135, %v1133
      %v1146 = vpack.c.b16 %v1136, %v1134
      %v1147 = vpack.c.b16 %v1139, %v1137
      %v1148 = vpack.c.b16 %v1140, %v1138
      %1157 = vmatprep.subr.bf16.mxu0 0
      %1158 = vmatpush1.bf16.msra.mxu0 %v505
      %1159 = vmatprep.subr.bf16.mxu0 0
      %1160 = vmatpush1.bf16.msra.mxu0 %v506
      %1161 = vmatprep.subr.bf16.mxu0 0
      %1162 = vmatpush1.bf16.msra.mxu0 %v507
      %1163 = vmatprep.subr.bf16.mxu0 0
      %1164 = vmatpush1.bf16.msra.mxu0 %v508
      %1165 = vmatprep.subr.bf16.mxu0 0
      %1166 = vmatpush1.bf16.msra.mxu0 %v509
      %1167 = vmatprep.subr.bf16.mxu0 0
      %1168 = vmatpush1.bf16.msra.mxu0 %v510
      %1169 = vmatprep.subr.bf16.mxu0 0
      %1170 = vmatpush1.bf16.msra.mxu0 %v511
      %1171 = vmatprep.subr.bf16.mxu0 0
      %1172 = vmatpush1.bf16.msra.mxu0 %v512
      %1173 = vmatprep.subr.bf16.mxu0 0
      %1174 = vmatpush1.bf16.msra.mxu0 %v513
      %1175 = vmatprep.subr.bf16.mxu0 0
      %1176 = vmatpush1.bf16.msra.mxu0 %v514
      %1177 = vmatprep.subr.bf16.mxu0 0
      %1178 = vmatpush1.bf16.msra.mxu0 %v515
      %1179 = vmatprep.subr.bf16.mxu0 0
      %1180 = vmatpush1.bf16.msra.mxu0 %v516
      %1181 = vmatprep.subr.bf16.mxu0 0
      %1182 = vmatpush1.bf16.msra.mxu0 %v517
      %1183 = vmatprep.subr.bf16.mxu0 0
      %1184 = vmatpush1.bf16.msra.mxu0 %v518
      %1185 = vmatprep.subr.bf16.mxu0 0
      %1186 = vmatpush1.bf16.msra.mxu0 %v519
      %1187 = vmatprep.subr.bf16.mxu0 0
      %1188 = vmatpush1.bf16.msra.mxu0 %v520
      %1189 = vmatprep.mubr.bf16.mxu0 %v1142
      %1190 = vmatmul.mubr.bf16.gmra.mrb[0].mxu0 %v1141
      %v1191 = vpop.f32.mrb[0].mxu0
      %v1192 = vadd.f32 0.0, %v1191
      %v1193 = vpop.f32.mrb[0].mxu0
      %v1194 = vpop.f32.mrb[0].mxu0
      %v1195 = vadd.f32 0.0, %v1194
      %v1196 = vpop.f32.mrb[0].mxu0
      %1197 = vmatprep.mubr.bf16.mxu0 %v1144
      %1198 = vmatmul.mubr.bf16.gmra.mrb[0].mxu0 %v1143
      %v1199 = vpop.f32.mrb[0].mxu0
      %v1200 = vadd.f32 0.0, %v1199
      %v1201 = vpop.f32.mrb[0].mxu0
      %v1202 = vpop.f32.mrb[0].mxu0
      %v1203 = vadd.f32 0.0, %v1202
      %v1204 = vpop.f32.mrb[0].mxu0
      %1205 = vmatprep.mubr.bf16.mxu0 %v1146
      %1206 = vmatmul.mubr.bf16.gmra.mrb[0].mxu0 %v1145
      %v1207 = vpop.f32.mrb[0].mxu0
      %v1208 = vadd.f32 0.0, %v1207
      %v1209 = vpop.f32.mrb[0].mxu0
      %v1210 = vpop.f32.mrb[0].mxu0
      %v1211 = vadd.f32 0.0, %v1210
      %v1212 = vpop.f32.mrb[0].mxu0
      %1213 = vmatprep.mubr.bf16.mxu0 %v1148
      %1214 = vmatmul.mubr.bf16.gmra.mrb[0].mxu0 %v1147
      %v1215 = vpop.f32.mrb[0].mxu0
      %v1216 = vadd.f32 0.0, %v1215
      %v1217 = vpop.f32.mrb[0].mxu0
      %v1218 = vpop.f32.mrb[0].mxu0
      %v1219 = vadd.f32 0.0, %v1218
      %v1220 = vpop.f32.mrb[0].mxu0
      %1221 = vdwg.mxu0
      %v1222 = vpack.c.bf16 %v1195, %v1192
      %v1223 = vpack.c.bf16 %v1203, %v1200
      %v1224 = vpack.c.bf16 %v1211, %v1208
      %v1225 = vpack.c.bf16 %v1219, %v1216
      %s1226 = scalar_lea.vmem %s2, 24
      %v1227 = vld [vmem:[%s1226] sm:$0xf]
      %v1228 = vld [vmem:[%s1226 + $0x4] sm:$0xf]
      %v1231 = vunpack.c.l.b16 %v1227
      %v1232 = vunpack.c.l.b16 %v1228
      %v1233 = vpack.c.b16 %v1232, %v1231
      %v1236 = vsel %vm735, %v1222, 0
      %v1239 = vsel %vm735, %v1223, 0
      %v1242 = vsel %vm735, %v1224, 0
      %v1245 = vsel %vm735, %v1225, 0
      %1247 = vmatprep.subr.bf16.mxu0 0
      %1248 = vmatpush1.bf16.msra.mxu0 %v1233
      %1249 = vmatprep.subr.bf16.mxu0 0
      %1250 = vmatpush1.bf16.msra.mxu0 0
      %1251 = vmatprep.subr.bf16.mxu0 0
      %1252 = vmatpush1.bf16.msra.mxu0 0
      %1253 = vmatprep.subr.bf16.mxu0 0
      %1254 = vmatpush1.bf16.msra.mxu0 0
      %1255 = vmatprep.subr.bf16.mxu0 0
      %1256 = vmatpush1.bf16.msra.mxu0 0
      %1257 = vmatprep.subr.bf16.mxu0 0
      %1258 = vmatpush1.bf16.msra.mxu0 0
      %1259 = vmatprep.subr.bf16.mxu0 0
      %1260 = vmatpush1.bf16.msra.mxu0 0
      %1261 = vmatprep.subr.bf16.mxu0 0
      %1262 = vmatpush1.bf16.msra.mxu0 0
      %1263 = vmatprep.subr.bf16.mxu0 0
      %1264 = vmatpush1.bf16.msra.mxu0 0
      %1265 = vmatprep.subr.bf16.mxu0 0
      %1266 = vmatpush1.bf16.msra.mxu0 0
      %1267 = vmatprep.subr.bf16.mxu0 0
      %1268 = vmatpush1.bf16.msra.mxu0 0
      %1269 = vmatprep.subr.bf16.mxu0 0
      %1270 = vmatpush1.bf16.msra.mxu0 0
      %1271 = vmatprep.subr.bf16.mxu0 0
      %1272 = vmatpush1.bf16.msra.mxu0 0
      %1273 = vmatprep.subr.bf16.mxu0 0
      %1274 = vmatpush1.bf16.msra.mxu0 0
      %1275 = vmatprep.subr.bf16.mxu0 0
      %1276 = vmatpush1.bf16.msra.mxu0 0
      %1277 = vmatprep.subr.bf16.mxu0 0
      %1278 = vmatpush1.bf16.msra.mxu0 0
      %1279 = vmatprep.mubr.bf16.mxu0 0
      %1280 = vmatmul.mubr.bf16.gmra.mrb[0].mxu0 %v1236
      %v1281 = vpop.f32.mrb[0].mxu0
      %v1282 = vadd.f32 0.0, %v1281
      %v1283 = vpop.f32.mrb[0].mxu0
      %v1284 = vpop.f32.mrb[0].mxu0
      %v1285 = vadd.f32 0.0, %v1284
      %v1286 = vpop.f32.mrb[0].mxu0
      %1287 = vmatprep.mubr.bf16.mxu0 0
      %1288 = vmatmul.mubr.bf16.gmra.mrb[0].mxu0 %v1239
      %v1289 = vpop.f32.mrb[0].mxu0
      %v1290 = vadd.f32 0.0, %v1289
      %v1291 = vpop.f32.mrb[0].mxu0
      %v1292 = vpop.f32.mrb[0].mxu0
      %v1293 = vadd.f32 0.0, %v1292
      %v1294 = vpop.f32.mrb[0].mxu0
      %1295 = vmatprep.mubr.bf16.mxu0 0
      %1296 = vmatmul.mubr.bf16.gmra.mrb[0].mxu0 %v1242
      %v1297 = vpop.f32.mrb[0].mxu0
      %v1298 = vadd.f32 0.0, %v1297
      %v1299 = vpop.f32.mrb[0].mxu0
      %v1300 = vpop.f32.mrb[0].mxu0
      %v1301 = vadd.f32 0.0, %v1300
      %v1302 = vpop.f32.mrb[0].mxu0
      %1303 = vmatprep.mubr.bf16.mxu0 0
      %1304 = vmatmul.mubr.bf16.gmra.mrb[0].mxu0 %v1245
      %v1305 = vpop.f32.mrb[0].mxu0
      %v1306 = vadd.f32 0.0, %v1305
      %v1307 = vpop.f32.mrb[0].mxu0
      %v1308 = vpop.f32.mrb[0].mxu0
      %v1309 = vadd.f32 0.0, %v1308
      %v1310 = vpop.f32.mrb[0].mxu0
      %1311 = vdwg.mxu0
      %v1312 = vadd.f32 %v1100, %v1282
      %v1313 = vadd.f32 %v1101, %v1285
      %v1314 = vadd.f32 %v1102, %v1290
      %v1315 = vadd.f32 %v1103, %v1293
      %v1316 = vadd.f32 %v1104, %v1298
      %v1317 = vadd.f32 %v1105, %v1301
      %v1318 = vadd.f32 %v1106, %v1306
      %v1319 = vadd.f32 %v1107, %v1309
      %s1320 = scalar_lea.vmem %s1, 256
      %v1321 = vld [vmem:[%s1320] sm:$0xff]
      %v1322 = vld [vmem:[%s1320 + $0x8] sm:$0xff]
      %v1323 = vld [vmem:[%s1320 + $0x10] sm:$0xff]
      %v1324 = vld [vmem:[%s1320 + $0x18] sm:$0xff]
      %v1325 = vld [vmem:[%s1320 + $0x20] sm:$0xff]
      %v1326 = vld [vmem:[%s1320 + $0x28] sm:$0xff]
      %v1327 = vld [vmem:[%s1320 + $0x30] sm:$0xff]
      %v1328 = vld [vmem:[%s1320 + $0x38] sm:$0xff]
      %v1337 = vunpack.c.l.b16 %v1321
      %v1338 = vunpack.c.h.b16 %v1321
      %v1339 = vunpack.c.l.b16 %v1322
      %v1340 = vunpack.c.h.b16 %v1322
      %v1341 = vunpack.c.l.b16 %v1323
      %v1342 = vunpack.c.h.b16 %v1323
      %v1343 = vunpack.c.l.b16 %v1324
      %v1344 = vunpack.c.h.b16 %v1324
      %v1345 = vunpack.c.l.b16 %v1325
      %v1346 = vunpack.c.h.b16 %v1325
      %v1347 = vunpack.c.l.b16 %v1326
      %v1348 = vunpack.c.h.b16 %v1326
      %v1349 = vunpack.c.l.b16 %v1327
      %v1350 = vunpack.c.h.b16 %v1327
      %v1351 = vunpack.c.l.b16 %v1328
      %v1352 = vunpack.c.h.b16 %v1328
      %v1353 = vpack.c.b16 %v1339, %v1337
      %v1354 = vpack.c.b16 %v1340, %v1338
      %v1355 = vpack.c.b16 %v1343, %v1341
      %v1356 = vpack.c.b16 %v1344, %v1342
      %v1357 = vpack.c.b16 %v1347, %v1345
      %v1358 = vpack.c.b16 %v1348, %v1346
      %v1359 = vpack.c.b16 %v1351, %v1349
      %v1360 = vpack.c.b16 %v1352, %v1350
      %1369 = vmatprep.subr.bf16.mxu0 0
      %1370 = vmatpush1.bf16.msra.mxu0 %v505
      %1371 = vmatprep.subr.bf16.mxu0 0
      %1372 = vmatpush1.bf16.msra.mxu0 %v506
      %1373 = vmatprep.subr.bf16.mxu0 0
      %1374 = vmatpush1.bf16.msra.mxu0 %v507
      %1375 = vmatprep.subr.bf16.mxu0 0
      %1376 = vmatpush1.bf16.msra.mxu0 %v508
      %1377 = vmatprep.subr.bf16.mxu0 0
      %1378 = vmatpush1.bf16.msra.mxu0 %v509
      %1379 = vmatprep.subr.bf16.mxu0 0
      %1380 = vmatpush1.bf16.msra.mxu0 %v510
      %1381 = vmatprep.subr.bf16.mxu0 0
      %1382 = vmatpush1.bf16.msra.mxu0 %v511
      %1383 = vmatprep.subr.bf16.mxu0 0
      %1384 = vmatpush1.bf16.msra.mxu0 %v512
      %1385 = vmatprep.subr.bf16.mxu0 0
      %1386 = vmatpush1.bf16.msra.mxu0 %v513
      %1387 = vmatprep.subr.bf16.mxu0 0
      %1388 = vmatpush1.bf16.msra.mxu0 %v514
      %1389 = vmatprep.subr.bf16.mxu0 0
      %1390 = vmatpush1.bf16.msra.mxu0 %v515
      %1391 = vmatprep.subr.bf16.mxu0 0
      %1392 = vmatpush1.bf16.msra.mxu0 %v516
      %1393 = vmatprep.subr.bf16.mxu0 0
      %1394 = vmatpush1.bf16.msra.mxu0 %v517
      %1395 = vmatprep.subr.bf16.mxu0 0
      %1396 = vmatpush1.bf16.msra.mxu0 %v518
      %1397 = vmatprep.subr.bf16.mxu0 0
      %1398 = vmatpush1.bf16.msra.mxu0 %v519
      %1399 = vmatprep.subr.bf16.mxu0 0
      %1400 = vmatpush1.bf16.msra.mxu0 %v520
      %1401 = vmatprep.mubr.bf16.mxu0 %v1354
      %1402 = vmatmul.mubr.bf16.gmra.mrb[0].mxu0 %v1353
      %v1403 = vpop.f32.mrb[0].mxu0
      %v1404 = vadd.f32 0.0, %v1403
      %v1405 = vpop.f32.mrb[0].mxu0
      %v1406 = vpop.f32.mrb[0].mxu0
      %v1407 = vadd.f32 0.0, %v1406
      %v1408 = vpop.f32.mrb[0].mxu0
      %1409 = vmatprep.mubr.bf16.mxu0 %v1356
      %1410 = vmatmul.mubr.bf16.gmra.mrb[0].mxu0 %v1355
      %v1411 = vpop.f32.mrb[0].mxu0
      %v1412 = vadd.f32 0.0, %v1411
      %v1413 = vpop.f32.mrb[0].mxu0
      %v1414 = vpop.f32.mrb[0].mxu0
      %v1415 = vadd.f32 0.0, %v1414
      %v1416 = vpop.f32.mrb[0].mxu0
      %1417 = vmatprep.mubr.bf16.mxu0 %v1358
      %1418 = vmatmul.mubr.bf16.gmra.mrb[0].mxu0 %v1357
      %v1419 = vpop.f32.mrb[0].mxu0
      %v1420 = vadd.f32 0.0, %v1419
      %v1421 = vpop.f32.mrb[0].mxu0
      %v1422 = vpop.f32.mrb[0].mxu0
      %v1423 = vadd.f32 0.0, %v1422
      %v1424 = vpop.f32.mrb[0].mxu0
      %1425 = vmatprep.mubr.bf16.mxu0 %v1360
      %1426 = vmatmul.mubr.bf16.gmra.mrb[0].mxu0 %v1359
      %v1427 = vpop.f32.mrb[0].mxu0
      %v1428 = vadd.f32 0.0, %v1427
      %v1429 = vpop.f32.mrb[0].mxu0
      %v1430 = vpop.f32.mrb[0].mxu0
      %v1431 = vadd.f32 0.0, %v1430
      %v1432 = vpop.f32.mrb[0].mxu0
      %1433 = vdwg.mxu0
      %v1434 = vpack.c.bf16 %v1407, %v1404
      %v1435 = vpack.c.bf16 %v1415, %v1412
      %v1436 = vpack.c.bf16 %v1423, %v1420
      %v1437 = vpack.c.bf16 %v1431, %v1428
      %s1438 = scalar_lea.vmem %s2, 32
      %v1439 = vld [vmem:[%s1438] sm:$0xf]
      %v1440 = vld [vmem:[%s1438 + $0x4] sm:$0xf]
      %v1443 = vunpack.c.l.b16 %v1439
      %v1444 = vunpack.c.l.b16 %v1440
      %v1445 = vpack.c.b16 %v1444, %v1443
      %v1448 = vsel %vm735, %v1434, 0
      %v1451 = vsel %vm735, %v1435, 0
      %v1454 = vsel %vm735, %v1436, 0
      %v1457 = vsel %vm735, %v1437, 0
      %1459 = vmatprep.subr.bf16.mxu0 0
      %1460 = vmatpush1.bf16.msra.mxu0 %v1445
      %1461 = vmatprep.subr.bf16.mxu0 0
      %1462 = vmatpush1.bf16.msra.mxu0 0
      %1463 = vmatprep.subr.bf16.mxu0 0
      %1464 = vmatpush1.bf16.msra.mxu0 0
      %1465 = vmatprep.subr.bf16.mxu0 0
      %1466 = vmatpush1.bf16.msra.mxu0 0
      %1467 = vmatprep.subr.bf16.mxu0 0
      %1468 = vmatpush1.bf16.msra.mxu0 0
      %1469 = vmatprep.subr.bf16.mxu0 0
      %1470 = vmatpush1.bf16.msra.mxu0 0
      %1471 = vmatprep.subr.bf16.mxu0 0
      %1472 = vmatpush1.bf16.msra.mxu0 0
      %1473 = vmatprep.subr.bf16.mxu0 0
      %1474 = vmatpush1.bf16.msra.mxu0 0
      %1475 = vmatprep.subr.bf16.mxu0 0
      %1476 = vmatpush1.bf16.msra.mxu0 0
      %1477 = vmatprep.subr.bf16.mxu0 0
      %1478 = vmatpush1.bf16.msra.mxu0 0
      %1479 = vmatprep.subr.bf16.mxu0 0
      %1480 = vmatpush1.bf16.msra.mxu0 0
      %1481 = vmatprep.subr.bf16.mxu0 0
      %1482 = vmatpush1.bf16.msra.mxu0 0
      %1483 = vmatprep.subr.bf16.mxu0 0
      %1484 = vmatpush1.bf16.msra.mxu0 0
      %1485 = vmatprep.subr.bf16.mxu0 0
      %1486 = vmatpush1.bf16.msra.mxu0 0
      %1487 = vmatprep.subr.bf16.mxu0 0
      %1488 = vmatpush1.bf16.msra.mxu0 0
      %1489 = vmatprep.subr.bf16.mxu0 0
      %1490 = vmatpush1.bf16.msra.mxu0 0
      %1491 = vmatprep.mubr.bf16.mxu0 0
      %1492 = vmatmul.mubr.bf16.gmra.mrb[0].mxu0 %v1448
      %v1493 = vpop.f32.mrb[0].mxu0
      %v1494 = vadd.f32 0.0, %v1493
      %v1495 = vpop.f32.mrb[0].mxu0
      %v1496 = vpop.f32.mrb[0].mxu0
      %v1497 = vadd.f32 0.0, %v1496
      %v1498 = vpop.f32.mrb[0].mxu0
      %1499 = vmatprep.mubr.bf16.mxu0 0
      %1500 = vmatmul.mubr.bf16.gmra.mrb[0].mxu0 %v1451
      %v1501 = vpop.f32.mrb[0].mxu0
      %v1502 = vadd.f32 0.0, %v1501
      %v1503 = vpop.f32.mrb[0].mxu0
      %v1504 = vpop.f32.mrb[0].mxu0
      %v1505 = vadd.f32 0.0, %v1504
      %v1506 = vpop.f32.mrb[0].mxu0
      %1507 = vmatprep.mubr.bf16.mxu0 0
      %1508 = vmatmul.mubr.bf16.gmra.mrb[0].mxu0 %v1454
      %v1509 = vpop.f32.mrb[0].mxu0
      %v1510 = vadd.f32 0.0, %v1509
      %v1511 = vpop.f32.mrb[0].mxu0
      %v1512 = vpop.f32.mrb[0].mxu0
      %v1513 = vadd.f32 0.0, %v1512
      %v1514 = vpop.f32.mrb[0].mxu0
      %1515 = vmatprep.mubr.bf16.mxu0 0
      %1516 = vmatmul.mubr.bf16.gmra.mrb[0].mxu0 %v1457
      %v1517 = vpop.f32.mrb[0].mxu0
      %v1518 = vadd.f32 0.0, %v1517
      %v1519 = vpop.f32.mrb[0].mxu0
      %v1520 = vpop.f32.mrb[0].mxu0
      %v1521 = vadd.f32 0.0, %v1520
      %v1522 = vpop.f32.mrb[0].mxu0
      %1523 = vdwg.mxu0
      %v1524 = vadd.f32 %v1312, %v1494
      %v1525 = vadd.f32 %v1313, %v1497
      %v1526 = vadd.f32 %v1314, %v1502
      %v1527 = vadd.f32 %v1315, %v1505
      %v1528 = vadd.f32 %v1316, %v1510
      %v1529 = vadd.f32 %v1317, %v1513
      %v1530 = vadd.f32 %v1318, %v1518
      %v1531 = vadd.f32 %v1319, %v1521
      %s1532 = scalar_lea.vmem %s1, 320
      %v1533 = vld [vmem:[%s1532] sm:$0xff]
      %v1534 = vld [vmem:[%s1532 + $0x8] sm:$0xff]
      %v1535 = vld [vmem:[%s1532 + $0x10] sm:$0xff]
      %v1536 = vld [vmem:[%s1532 + $0x18] sm:$0xff]
      %v1537 = vld [vmem:[%s1532 + $0x20] sm:$0xff]
      %v1538 = vld [vmem:[%s1532 + $0x28] sm:$0xff]
      %v1539 = vld [vmem:[%s1532 + $0x30] sm:$0xff]
      %v1540 = vld [vmem:[%s1532 + $0x38] sm:$0xff]
      %v1549 = vunpack.c.l.b16 %v1533
      %v1550 = vunpack.c.h.b16 %v1533
      %v1551 = vunpack.c.l.b16 %v1534
      %v1552 = vunpack.c.h.b16 %v1534
      %v1553 = vunpack.c.l.b16 %v1535
      %v1554 = vunpack.c.h.b16 %v1535
      %v1555 = vunpack.c.l.b16 %v1536
      %v1556 = vunpack.c.h.b16 %v1536
      %v1557 = vunpack.c.l.b16 %v1537
      %v1558 = vunpack.c.h.b16 %v1537
      %v1559 = vunpack.c.l.b16 %v1538
      %v1560 = vunpack.c.h.b16 %v1538
      %v1561 = vunpack.c.l.b16 %v1539
      %v1562 = vunpack.c.h.b16 %v1539
      %v1563 = vunpack.c.l.b16 %v1540
      %v1564 = vunpack.c.h.b16 %v1540
      %v1565 = vpack.c.b16 %v1551, %v1549
      %v1566 = vpack.c.b16 %v1552, %v1550
      %v1567 = vpack.c.b16 %v1555, %v1553
      %v1568 = vpack.c.b16 %v1556, %v1554
      %v1569 = vpack.c.b16 %v1559, %v1557
      %v1570 = vpack.c.b16 %v1560, %v1558
      %v1571 = vpack.c.b16 %v1563, %v1561
      %v1572 = vpack.c.b16 %v1564, %v1562
      %1581 = vmatprep.subr.bf16.mxu0 0
      %1582 = vmatpush1.bf16.msra.mxu0 %v505
      %1583 = vmatprep.subr.bf16.mxu0 0
      %1584 = vmatpush1.bf16.msra.mxu0 %v506
      %1585 = vmatprep.subr.bf16.mxu0 0
      %1586 = vmatpush1.bf16.msra.mxu0 %v507
      %1587 = vmatprep.subr.bf16.mxu0 0
      %1588 = vmatpush1.bf16.msra.mxu0 %v508
      %1589 = vmatprep.subr.bf16.mxu0 0
      %1590 = vmatpush1.bf16.msra.mxu0 %v509
      %1591 = vmatprep.subr.bf16.mxu0 0
      %1592 = vmatpush1.bf16.msra.mxu0 %v510
      %1593 = vmatprep.subr.bf16.mxu0 0
      %1594 = vmatpush1.bf16.msra.mxu0 %v511
      %1595 = vmatprep.subr.bf16.mxu0 0
      %1596 = vmatpush1.bf16.msra.mxu0 %v512
      %1597 = vmatprep.subr.bf16.mxu0 0
      %1598 = vmatpush1.bf16.msra.mxu0 %v513
      %1599 = vmatprep.subr.bf16.mxu0 0
      %1600 = vmatpush1.bf16.msra.mxu0 %v514
      %1601 = vmatprep.subr.bf16.mxu0 0
      %1602 = vmatpush1.bf16.msra.mxu0 %v515
      %1603 = vmatprep.subr.bf16.mxu0 0
      %1604 = vmatpush1.bf16.msra.mxu0 %v516
      %1605 = vmatprep.subr.bf16.mxu0 0
      %1606 = vmatpush1.bf16.msra.mxu0 %v517
      %1607 = vmatprep.subr.bf16.mxu0 0
      %1608 = vmatpush1.bf16.msra.mxu0 %v518
      %1609 = vmatprep.subr.bf16.mxu0 0
      %1610 = vmatpush1.bf16.msra.mxu0 %v519
      %1611 = vmatprep.subr.bf16.mxu0 0
      %1612 = vmatpush1.bf16.msra.mxu0 %v520
      %1613 = vmatprep.mubr.bf16.mxu0 %v1566
      %1614 = vmatmul.mubr.bf16.gmra.mrb[0].mxu0 %v1565
      %v1615 = vpop.f32.mrb[0].mxu0
      %v1616 = vadd.f32 0.0, %v1615
      %v1617 = vpop.f32.mrb[0].mxu0
      %v1618 = vpop.f32.mrb[0].mxu0
      %v1619 = vadd.f32 0.0, %v1618
      %v1620 = vpop.f32.mrb[0].mxu0
      %1621 = vmatprep.mubr.bf16.mxu0 %v1568
      %1622 = vmatmul.mubr.bf16.gmra.mrb[0].mxu0 %v1567
      %v1623 = vpop.f32.mrb[0].mxu0
      %v1624 = vadd.f32 0.0, %v1623
      %v1625 = vpop.f32.mrb[0].mxu0
      %v1626 = vpop.f32.mrb[0].mxu0
      %v1627 = vadd.f32 0.0, %v1626
      %v1628 = vpop.f32.mrb[0].mxu0
      %1629 = vmatprep.mubr.bf16.mxu0 %v1570
      %1630 = vmatmul.mubr.bf16.gmra.mrb[0].mxu0 %v1569
      %v1631 = vpop.f32.mrb[0].mxu0
      %v1632 = vadd.f32 0.0, %v1631
      %v1633 = vpop.f32.mrb[0].mxu0
      %v1634 = vpop.f32.mrb[0].mxu0
      %v1635 = vadd.f32 0.0, %v1634
      %v1636 = vpop.f32.mrb[0].mxu0
      %1637 = vmatprep.mubr.bf16.mxu0 %v1572
      %1638 = vmatmul.mubr.bf16.gmra.mrb[0].mxu0 %v1571
      %v1639 = vpop.f32.mrb[0].mxu0
      %v1640 = vadd.f32 0.0, %v1639
      %v1641 = vpop.f32.mrb[0].mxu0
      %v1642 = vpop.f32.mrb[0].mxu0
      %v1643 = vadd.f32 0.0, %v1642
      %v1644 = vpop.f32.mrb[0].mxu0
      %1645 = vdwg.mxu0
      %v1646 = vpack.c.bf16 %v1619, %v1616
      %v1647 = vpack.c.bf16 %v1627, %v1624
      %v1648 = vpack.c.bf16 %v1635, %v1632
      %v1649 = vpack.c.bf16 %v1643, %v1640
      %s1650 = scalar_lea.vmem %s2, 40
      %v1651 = vld [vmem:[%s1650] sm:$0xf]
      %v1652 = vld [vmem:[%s1650 + $0x4] sm:$0xf]
      %v1655 = vunpack.c.l.b16 %v1651
      %v1656 = vunpack.c.l.b16 %v1652
      %v1657 = vpack.c.b16 %v1656, %v1655
      %v1660 = vsel %vm735, %v1646, 0
      %v1663 = vsel %vm735, %v1647, 0
      %v1666 = vsel %vm735, %v1648, 0
      %v1669 = vsel %vm735, %v1649, 0
      %1671 = vmatprep.subr.bf16.mxu0 0
      %1672 = vmatpush1.bf16.msra.mxu0 %v1657
      %1673 = vmatprep.subr.bf16.mxu0 0
      %1674 = vmatpush1.bf16.msra.mxu0 0
      %1675 = vmatprep.subr.bf16.mxu0 0
      %1676 = vmatpush1.bf16.msra.mxu0 0
      %1677 = vmatprep.subr.bf16.mxu0 0
      %1678 = vmatpush1.bf16.msra.mxu0 0
      %1679 = vmatprep.subr.bf16.mxu0 0
      %1680 = vmatpush1.bf16.msra.mxu0 0
      %1681 = vmatprep.subr.bf16.mxu0 0
      %1682 = vmatpush1.bf16.msra.mxu0 0
      %1683 = vmatprep.subr.bf16.mxu0 0
      %1684 = vmatpush1.bf16.msra.mxu0 0
      %1685 = vmatprep.subr.bf16.mxu0 0
      %1686 = vmatpush1.bf16.msra.mxu0 0
      %1687 = vmatprep.subr.bf16.mxu0 0
      %1688 = vmatpush1.bf16.msra.mxu0 0
      %1689 = vmatprep.subr.bf16.mxu0 0
      %1690 = vmatpush1.bf16.msra.mxu0 0
      %1691 = vmatprep.subr.bf16.mxu0 0
      %1692 = vmatpush1.bf16.msra.mxu0 0
      %1693 = vmatprep.subr.bf16.mxu0 0
      %1694 = vmatpush1.bf16.msra.mxu0 0
      %1695 = vmatprep.subr.bf16.mxu0 0
      %1696 = vmatpush1.bf16.msra.mxu0 0
      %1697 = vmatprep.subr.bf16.mxu0 0
      %1698 = vmatpush1.bf16.msra.mxu0 0
      %1699 = vmatprep.subr.bf16.mxu0 0
      %1700 = vmatpush1.bf16.msra.mxu0 0
      %1701 = vmatprep.subr.bf16.mxu0 0
      %1702 = vmatpush1.bf16.msra.mxu0 0
      %1703 = vmatprep.mubr.bf16.mxu0 0
      %1704 = vmatmul.mubr.bf16.gmra.mrb[0].mxu0 %v1660
      %v1705 = vpop.f32.mrb[0].mxu0
      %v1706 = vadd.f32 0.0, %v1705
      %v1707 = vpop.f32.mrb[0].mxu0
      %v1708 = vpop.f32.mrb[0].mxu0
      %v1709 = vadd.f32 0.0, %v1708
      %v1710 = vpop.f32.mrb[0].mxu0
      %1711 = vmatprep.mubr.bf16.mxu0 0
      %1712 = vmatmul.mubr.bf16.gmra.mrb[0].mxu0 %v1663
      %v1713 = vpop.f32.mrb[0].mxu0
      %v1714 = vadd.f32 0.0, %v1713
      %v1715 = vpop.f32.mrb[0].mxu0
      %v1716 = vpop.f32.mrb[0].mxu0
      %v1717 = vadd.f32 0.0, %v1716
      %v1718 = vpop.f32.mrb[0].mxu0
      %1719 = vmatprep.mubr.bf16.mxu0 0
      %1720 = vmatmul.mubr.bf16.gmra.mrb[0].mxu0 %v1666
      %v1721 = vpop.f32.mrb[0].mxu0
      %v1722 = vadd.f32 0.0, %v1721
      %v1723 = vpop.f32.mrb[0].mxu0
      %v1724 = vpop.f32.mrb[0].mxu0
      %v1725 = vadd.f32 0.0, %v1724
      %v1726 = vpop.f32.mrb[0].mxu0
      %1727 = vmatprep.mubr.bf16.mxu0 0
      %1728 = vmatmul.mubr.bf16.gmra.mrb[0].mxu0 %v1669
      %v1729 = vpop.f32.mrb[0].mxu0
      %v1730 = vadd.f32 0.0, %v1729
      %v1731 = vpop.f32.mrb[0].mxu0
      %v1732 = vpop.f32.mrb[0].mxu0
      %v1733 = vadd.f32 0.0, %v1732
      %v1734 = vpop.f32.mrb[0].mxu0
      %1735 = vdwg.mxu0
      %v1736 = vadd.f32 %v1524, %v1706
      %v1737 = vadd.f32 %v1525, %v1709
      %v1738 = vadd.f32 %v1526, %v1714
      %v1739 = vadd.f32 %v1527, %v1717
      %v1740 = vadd.f32 %v1528, %v1722
      %v1741 = vadd.f32 %v1529, %v1725
      %v1742 = vadd.f32 %v1530, %v1730
      %v1743 = vadd.f32 %v1531, %v1733
      %s1744 = scalar_lea.vmem %s1, 384
      %v1745 = vld [vmem:[%s1744] sm:$0xff]
      %v1746 = vld [vmem:[%s1744 + $0x8] sm:$0xff]
      %v1747 = vld [vmem:[%s1744 + $0x10] sm:$0xff]
      %v1748 = vld [vmem:[%s1744 + $0x18] sm:$0xff]
      %v1749 = vld [vmem:[%s1744 + $0x20] sm:$0xff]
      %v1750 = vld [vmem:[%s1744 + $0x28] sm:$0xff]
      %v1751 = vld [vmem:[%s1744 + $0x30] sm:$0xff]
      %v1752 = vld [vmem:[%s1744 + $0x38] sm:$0xff]
      %v1761 = vunpack.c.l.b16 %v1745
      %v1762 = vunpack.c.h.b16 %v1745
      %v1763 = vunpack.c.l.b16 %v1746
      %v1764 = vunpack.c.h.b16 %v1746
      %v1765 = vunpack.c.l.b16 %v1747
      %v1766 = vunpack.c.h.b16 %v1747
      %v1767 = vunpack.c.l.b16 %v1748
      %v1768 = vunpack.c.h.b16 %v1748
      %v1769 = vunpack.c.l.b16 %v1749
      %v1770 = vunpack.c.h.b16 %v1749
      %v1771 = vunpack.c.l.b16 %v1750
      %v1772 = vunpack.c.h.b16 %v1750
      %v1773 = vunpack.c.l.b16 %v1751
      %v1774 = vunpack.c.h.b16 %v1751
      %v1775 = vunpack.c.l.b16 %v1752
      %v1776 = vunpack.c.h.b16 %v1752
      %v1777 = vpack.c.b16 %v1763, %v1761
      %v1778 = vpack.c.b16 %v1764, %v1762
      %v1779 = vpack.c.b16 %v1767, %v1765
      %v1780 = vpack.c.b16 %v1768, %v1766
      %v1781 = vpack.c.b16 %v1771, %v1769
      %v1782 = vpack.c.b16 %v1772, %v1770
      %v1783 = vpack.c.b16 %v1775, %v1773
      %v1784 = vpack.c.b16 %v1776, %v1774
      %1793 = vmatprep.subr.bf16.mxu0 0
      %1794 = vmatpush1.bf16.msra.mxu0 %v505
      %1795 = vmatprep.subr.bf16.mxu0 0
      %1796 = vmatpush1.bf16.msra.mxu0 %v506
      %1797 = vmatprep.subr.bf16.mxu0 0
      %1798 = vmatpush1.bf16.msra.mxu0 %v507
      %1799 = vmatprep.subr.bf16.mxu0 0
      %1800 = vmatpush1.bf16.msra.mxu0 %v508
      %1801 = vmatprep.subr.bf16.mxu0 0
      %1802 = vmatpush1.bf16.msra.mxu0 %v509
      %1803 = vmatprep.subr.bf16.mxu0 0
      %1804 = vmatpush1.bf16.msra.mxu0 %v510
      %1805 = vmatprep.subr.bf16.mxu0 0
      %1806 = vmatpush1.bf16.msra.mxu0 %v511
      %1807 = vmatprep.subr.bf16.mxu0 0
      %1808 = vmatpush1.bf16.msra.mxu0 %v512
      %1809 = vmatprep.subr.bf16.mxu0 0
      %1810 = vmatpush1.bf16.msra.mxu0 %v513
      %1811 = vmatprep.subr.bf16.mxu0 0
      %1812 = vmatpush1.bf16.msra.mxu0 %v514
      %1813 = vmatprep.subr.bf16.mxu0 0
      %1814 = vmatpush1.bf16.msra.mxu0 %v515
      %1815 = vmatprep.subr.bf16.mxu0 0
      %1816 = vmatpush1.bf16.msra.mxu0 %v516
      %1817 = vmatprep.subr.bf16.mxu0 0
      %1818 = vmatpush1.bf16.msra.mxu0 %v517
      %1819 = vmatprep.subr.bf16.mxu0 0
      %1820 = vmatpush1.bf16.msra.mxu0 %v518
      %1821 = vmatprep.subr.bf16.mxu0 0
      %1822 = vmatpush1.bf16.msra.mxu0 %v519
      %1823 = vmatprep.subr.bf16.mxu0 0
      %1824 = vmatpush1.bf16.msra.mxu0 %v520
      %1825 = vmatprep.mubr.bf16.mxu0 %v1778
      %1826 = vmatmul.mubr.bf16.gmra.mrb[0].mxu0 %v1777
      %v1827 = vpop.f32.mrb[0].mxu0
      %v1828 = vadd.f32 0.0, %v1827
      %v1829 = vpop.f32.mrb[0].mxu0
      %v1830 = vpop.f32.mrb[0].mxu0
      %v1831 = vadd.f32 0.0, %v1830
      %v1832 = vpop.f32.mrb[0].mxu0
      %1833 = vmatprep.mubr.bf16.mxu0 %v1780
      %1834 = vmatmul.mubr.bf16.gmra.mrb[0].mxu0 %v1779
      %v1835 = vpop.f32.mrb[0].mxu0
      %v1836 = vadd.f32 0.0, %v1835
      %v1837 = vpop.f32.mrb[0].mxu0
      %v1838 = vpop.f32.mrb[0].mxu0
      %v1839 = vadd.f32 0.0, %v1838
      %v1840 = vpop.f32.mrb[0].mxu0
      %1841 = vmatprep.mubr.bf16.mxu0 %v1782
      %1842 = vmatmul.mubr.bf16.gmra.mrb[0].mxu0 %v1781
      %v1843 = vpop.f32.mrb[0].mxu0
      %v1844 = vadd.f32 0.0, %v1843
      %v1845 = vpop.f32.mrb[0].mxu0
      %v1846 = vpop.f32.mrb[0].mxu0
      %v1847 = vadd.f32 0.0, %v1846
      %v1848 = vpop.f32.mrb[0].mxu0
      %1849 = vmatprep.mubr.bf16.mxu0 %v1784
      %1850 = vmatmul.mubr.bf16.gmra.mrb[0].mxu0 %v1783
      %v1851 = vpop.f32.mrb[0].mxu0
      %v1852 = vadd.f32 0.0, %v1851
      %v1853 = vpop.f32.mrb[0].mxu0
      %v1854 = vpop.f32.mrb[0].mxu0
      %v1855 = vadd.f32 0.0, %v1854
      %v1856 = vpop.f32.mrb[0].mxu0
      %1857 = vdwg.mxu0
      %v1858 = vpack.c.bf16 %v1831, %v1828
      %v1859 = vpack.c.bf16 %v1839, %v1836
      %v1860 = vpack.c.bf16 %v1847, %v1844
      %v1861 = vpack.c.bf16 %v1855, %v1852
      %s1862 = scalar_lea.vmem %s2, 48
      %v1863 = vld [vmem:[%s1862] sm:$0xf]
      %v1864 = vld [vmem:[%s1862 + $0x4] sm:$0xf]
      %v1867 = vunpack.c.l.b16 %v1863
      %v1868 = vunpack.c.l.b16 %v1864
      %v1869 = vpack.c.b16 %v1868, %v1867
      %v1872 = vsel %vm735, %v1858, 0
      %v1875 = vsel %vm735, %v1859, 0
      %v1878 = vsel %vm735, %v1860, 0
      %v1881 = vsel %vm735, %v1861, 0
      %1883 = vmatprep.subr.bf16.mxu0 0
      %1884 = vmatpush1.bf16.msra.mxu0 %v1869
      %1885 = vmatprep.subr.bf16.mxu0 0
      %1886 = vmatpush1.bf16.msra.mxu0 0
      %1887 = vmatprep.subr.bf16.mxu0 0
      %1888 = vmatpush1.bf16.msra.mxu0 0
      %1889 = vmatprep.subr.bf16.mxu0 0
      %1890 = vmatpush1.bf16.msra.mxu0 0
      %1891 = vmatprep.subr.bf16.mxu0 0
      %1892 = vmatpush1.bf16.msra.mxu0 0
      %1893 = vmatprep.subr.bf16.mxu0 0
      %1894 = vmatpush1.bf16.msra.mxu0 0
      %1895 = vmatprep.subr.bf16.mxu0 0
      %1896 = vmatpush1.bf16.msra.mxu0 0
      %1897 = vmatprep.subr.bf16.mxu0 0
      %1898 = vmatpush1.bf16.msra.mxu0 0
      %1899 = vmatprep.subr.bf16.mxu0 0
      %1900 = vmatpush1.bf16.msra.mxu0 0
      %1901 = vmatprep.subr.bf16.mxu0 0
      %1902 = vmatpush1.bf16.msra.mxu0 0
      %1903 = vmatprep.subr.bf16.mxu0 0
      %1904 = vmatpush1.bf16.msra.mxu0 0
      %1905 = vmatprep.subr.bf16.mxu0 0
      %1906 = vmatpush1.bf16.msra.mxu0 0
      %1907 = vmatprep.subr.bf16.mxu0 0
      %1908 = vmatpush1.bf16.msra.mxu0 0
      %1909 = vmatprep.subr.bf16.mxu0 0
      %1910 = vmatpush1.bf16.msra.mxu0 0
      %1911 = vmatprep.subr.bf16.mxu0 0
      %1912 = vmatpush1.bf16.msra.mxu0 0
      %1913 = vmatprep.subr.bf16.mxu0 0
      %1914 = vmatpush1.bf16.msra.mxu0 0
      %1915 = vmatprep.mubr.bf16.mxu0 0
      %1916 = vmatmul.mubr.bf16.gmra.mrb[0].mxu0 %v1872
      %v1917 = vpop.f32.mrb[0].mxu0
      %v1918 = vadd.f32 0.0, %v1917
      %v1919 = vpop.f32.mrb[0].mxu0
      %v1920 = vpop.f32.mrb[0].mxu0
      %v1921 = vadd.f32 0.0, %v1920
      %v1922 = vpop.f32.mrb[0].mxu0
      %1923 = vmatprep.mubr.bf16.mxu0 0
      %1924 = vmatmul.mubr.bf16.gmra.mrb[0].mxu0 %v1875
      %v1925 = vpop.f32.mrb[0].mxu0
      %v1926 = vadd.f32 0.0, %v1925
      %v1927 = vpop.f32.mrb[0].mxu0
      %v1928 = vpop.f32.mrb[0].mxu0
      %v1929 = vadd.f32 0.0, %v1928
      %v1930 = vpop.f32.mrb[0].mxu0
      %1931 = vmatprep.mubr.bf16.mxu0 0
      %1932 = vmatmul.mubr.bf16.gmra.mrb[0].mxu0 %v1878
      %v1933 = vpop.f32.mrb[0].mxu0
      %v1934 = vadd.f32 0.0, %v1933
      %v1935 = vpop.f32.mrb[0].mxu0
      %v1936 = vpop.f32.mrb[0].mxu0
      %v1937 = vadd.f32 0.0, %v1936
      %v1938 = vpop.f32.mrb[0].mxu0
      %1939 = vmatprep.mubr.bf16.mxu0 0
      %1940 = vmatmul.mubr.bf16.gmra.mrb[0].mxu0 %v1881
      %v1941 = vpop.f32.mrb[0].mxu0
      %v1942 = vadd.f32 0.0, %v1941
      %v1943 = vpop.f32.mrb[0].mxu0
      %v1944 = vpop.f32.mrb[0].mxu0
      %v1945 = vadd.f32 0.0, %v1944
      %v1946 = vpop.f32.mrb[0].mxu0
      %1947 = vdwg.mxu0
      %v1948 = vadd.f32 %v1736, %v1918
      %v1949 = vadd.f32 %v1737, %v1921
      %v1950 = vadd.f32 %v1738, %v1926
      %v1951 = vadd.f32 %v1739, %v1929
      %v1952 = vadd.f32 %v1740, %v1934
      %v1953 = vadd.f32 %v1741, %v1937
      %v1954 = vadd.f32 %v1742, %v1942
      %v1955 = vadd.f32 %v1743, %v1945
      %s1956 = scalar_lea.vmem %s1, 448
      %v1957 = vld [vmem:[%s1956] sm:$0xff]
      %v1958 = vld [vmem:[%s1956 + $0x8] sm:$0xff]
      %v1959 = vld [vmem:[%s1956 + $0x10] sm:$0xff]
      %v1960 = vld [vmem:[%s1956 + $0x18] sm:$0xff]
      %v1961 = vld [vmem:[%s1956 + $0x20] sm:$0xff]
      %v1962 = vld [vmem:[%s1956 + $0x28] sm:$0xff]
      %v1963 = vld [vmem:[%s1956 + $0x30] sm:$0xff]
      %v1964 = vld [vmem:[%s1956 + $0x38] sm:$0xff]
      %v1973 = vunpack.c.l.b16 %v1957
      %v1974 = vunpack.c.h.b16 %v1957
      %v1975 = vunpack.c.l.b16 %v1958
      %v1976 = vunpack.c.h.b16 %v1958
      %v1977 = vunpack.c.l.b16 %v1959
      %v1978 = vunpack.c.h.b16 %v1959
      %v1979 = vunpack.c.l.b16 %v1960
      %v1980 = vunpack.c.h.b16 %v1960
      %v1981 = vunpack.c.l.b16 %v1961
      %v1982 = vunpack.c.h.b16 %v1961
      %v1983 = vunpack.c.l.b16 %v1962
      %v1984 = vunpack.c.h.b16 %v1962
      %v1985 = vunpack.c.l.b16 %v1963
      %v1986 = vunpack.c.h.b16 %v1963
      %v1987 = vunpack.c.l.b16 %v1964
      %v1988 = vunpack.c.h.b16 %v1964
      %v1989 = vpack.c.b16 %v1975, %v1973
      %v1990 = vpack.c.b16 %v1976, %v1974
      %v1991 = vpack.c.b16 %v1979, %v1977
      %v1992 = vpack.c.b16 %v1980, %v1978
      %v1993 = vpack.c.b16 %v1983, %v1981
      %v1994 = vpack.c.b16 %v1984, %v1982
      %v1995 = vpack.c.b16 %v1987, %v1985
      %v1996 = vpack.c.b16 %v1988, %v1986
      %2005 = vmatprep.subr.bf16.mxu0 0
      %2006 = vmatpush1.bf16.msra.mxu0 %v505
      %2007 = vmatprep.subr.bf16.mxu0 0
      %2008 = vmatpush1.bf16.msra.mxu0 %v506
      %2009 = vmatprep.subr.bf16.mxu0 0
      %2010 = vmatpush1.bf16.msra.mxu0 %v507
      %2011 = vmatprep.subr.bf16.mxu0 0
      %2012 = vmatpush1.bf16.msra.mxu0 %v508
      %2013 = vmatprep.subr.bf16.mxu0 0
      %2014 = vmatpush1.bf16.msra.mxu0 %v509
      %2015 = vmatprep.subr.bf16.mxu0 0
      %2016 = vmatpush1.bf16.msra.mxu0 %v510
      %2017 = vmatprep.subr.bf16.mxu0 0
      %2018 = vmatpush1.bf16.msra.mxu0 %v511
      %2019 = vmatprep.subr.bf16.mxu0 0
      %2020 = vmatpush1.bf16.msra.mxu0 %v512
      %2021 = vmatprep.subr.bf16.mxu0 0
      %2022 = vmatpush1.bf16.msra.mxu0 %v513
      %2023 = vmatprep.subr.bf16.mxu0 0
      %2024 = vmatpush1.bf16.msra.mxu0 %v514
      %2025 = vmatprep.subr.bf16.mxu0 0
      %2026 = vmatpush1.bf16.msra.mxu0 %v515
      %2027 = vmatprep.subr.bf16.mxu0 0
      %2028 = vmatpush1.bf16.msra.mxu0 %v516
      %2029 = vmatprep.subr.bf16.mxu0 0
      %2030 = vmatpush1.bf16.msra.mxu0 %v517
      %2031 = vmatprep.subr.bf16.mxu0 0
      %2032 = vmatpush1.bf16.msra.mxu0 %v518
      %2033 = vmatprep.subr.bf16.mxu0 0
      %2034 = vmatpush1.bf16.msra.mxu0 %v519
      %2035 = vmatprep.subr.bf16.mxu0 0
      %2036 = vmatpush1.bf16.msra.mxu0 %v520
      %2037 = vmatprep.mubr.bf16.mxu0 %v1990
      %2038 = vmatmul.mubr.bf16.gmra.mrb[0].mxu0 %v1989
      %v2039 = vpop.f32.mrb[0].mxu0
      %v2040 = vadd.f32 0.0, %v2039
      %v2041 = vpop.f32.mrb[0].mxu0
      %v2042 = vpop.f32.mrb[0].mxu0
      %v2043 = vadd.f32 0.0, %v2042
      %v2044 = vpop.f32.mrb[0].mxu0
      %2045 = vmatprep.mubr.bf16.mxu0 %v1992
      %2046 = vmatmul.mubr.bf16.gmra.mrb[0].mxu0 %v1991
      %v2047 = vpop.f32.mrb[0].mxu0
      %v2048 = vadd.f32 0.0, %v2047
      %v2049 = vpop.f32.mrb[0].mxu0
      %v2050 = vpop.f32.mrb[0].mxu0
      %v2051 = vadd.f32 0.0, %v2050
      %v2052 = vpop.f32.mrb[0].mxu0
      %2053 = vmatprep.mubr.bf16.mxu0 %v1994
      %2054 = vmatmul.mubr.bf16.gmra.mrb[0].mxu0 %v1993
      %v2055 = vpop.f32.mrb[0].mxu0
      %v2056 = vadd.f32 0.0, %v2055
      %v2057 = vpop.f32.mrb[0].mxu0
      %v2058 = vpop.f32.mrb[0].mxu0
      %v2059 = vadd.f32 0.0, %v2058
      %v2060 = vpop.f32.mrb[0].mxu0
      %2061 = vmatprep.mubr.bf16.mxu0 %v1996
      %2062 = vmatmul.mubr.bf16.gmra.mrb[0].mxu0 %v1995
      %v2063 = vpop.f32.mrb[0].mxu0
      %v2064 = vadd.f32 0.0, %v2063
      %v2065 = vpop.f32.mrb[0].mxu0
      %v2066 = vpop.f32.mrb[0].mxu0
      %v2067 = vadd.f32 0.0, %v2066
      %v2068 = vpop.f32.mrb[0].mxu0
      %2069 = vdwg.mxu0
      %v2070 = vpack.c.bf16 %v2043, %v2040
      %v2071 = vpack.c.bf16 %v2051, %v2048
      %v2072 = vpack.c.bf16 %v2059, %v2056
      %v2073 = vpack.c.bf16 %v2067, %v2064
      %s2074 = scalar_lea.vmem %s2, 56
      %v2075 = vld [vmem:[%s2074] sm:$0xf]
      %v2076 = vld [vmem:[%s2074 + $0x4] sm:$0xf]
      %v2079 = vunpack.c.l.b16 %v2075
      %v2080 = vunpack.c.l.b16 %v2076
      %v2081 = vpack.c.b16 %v2080, %v2079
      %v2084 = vsel %vm735, %v2070, 0
      %v2087 = vsel %vm735, %v2071, 0
      %v2090 = vsel %vm735, %v2072, 0
      %v2093 = vsel %vm735, %v2073, 0
      %2095 = vmatprep.subr.bf16.mxu0 0
      %2096 = vmatpush1.bf16.msra.mxu0 %v2081
      %2097 = vmatprep.subr.bf16.mxu0 0
      %2098 = vmatpush1.bf16.msra.mxu0 0
      %2099 = vmatprep.subr.bf16.mxu0 0
      %2100 = vmatpush1.bf16.msra.mxu0 0
      %2101 = vmatprep.subr.bf16.mxu0 0
      %2102 = vmatpush1.bf16.msra.mxu0 0
      %2103 = vmatprep.subr.bf16.mxu0 0
      %2104 = vmatpush1.bf16.msra.mxu0 0
      %2105 = vmatprep.subr.bf16.mxu0 0
      %2106 = vmatpush1.bf16.msra.mxu0 0
      %2107 = vmatprep.subr.bf16.mxu0 0
      %2108 = vmatpush1.bf16.msra.mxu0 0
      %2109 = vmatprep.subr.bf16.mxu0 0
      %2110 = vmatpush1.bf16.msra.mxu0 0
      %2111 = vmatprep.subr.bf16.mxu0 0
      %2112 = vmatpush1.bf16.msra.mxu0 0
      %2113 = vmatprep.subr.bf16.mxu0 0
      %2114 = vmatpush1.bf16.msra.mxu0 0
      %2115 = vmatprep.subr.bf16.mxu0 0
      %2116 = vmatpush1.bf16.msra.mxu0 0
      %2117 = vmatprep.subr.bf16.mxu0 0
      %2118 = vmatpush1.bf16.msra.mxu0 0
      %2119 = vmatprep.subr.bf16.mxu0 0
      %2120 = vmatpush1.bf16.msra.mxu0 0
      %2121 = vmatprep.subr.bf16.mxu0 0
      %2122 = vmatpush1.bf16.msra.mxu0 0
      %2123 = vmatprep.subr.bf16.mxu0 0
      %2124 = vmatpush1.bf16.msra.mxu0 0
      %2125 = vmatprep.subr.bf16.mxu0 0
      %2126 = vmatpush1.bf16.msra.mxu0 0
      %2127 = vmatprep.mubr.bf16.mxu0 0
      %2128 = vmatmul.mubr.bf16.gmra.mrb[0].mxu0 %v2084
      %v2129 = vpop.f32.mrb[0].mxu0
      %v2130 = vadd.f32 0.0, %v2129
      %v2131 = vpop.f32.mrb[0].mxu0
      %v2132 = vpop.f32.mrb[0].mxu0
      %v2133 = vadd.f32 0.0, %v2132
      %v2134 = vpop.f32.mrb[0].mxu0
      %2135 = vmatprep.mubr.bf16.mxu0 0
      %2136 = vmatmul.mubr.bf16.gmra.mrb[0].mxu0 %v2087
      %v2137 = vpop.f32.mrb[0].mxu0
      %v2138 = vadd.f32 0.0, %v2137
      %v2139 = vpop.f32.mrb[0].mxu0
      %v2140 = vpop.f32.mrb[0].mxu0
      %v2141 = vadd.f32 0.0, %v2140
      %v2142 = vpop.f32.mrb[0].mxu0
      %2143 = vmatprep.mubr.bf16.mxu0 0
      %2144 = vmatmul.mubr.bf16.gmra.mrb[0].mxu0 %v2090
      %v2145 = vpop.f32.mrb[0].mxu0
      %v2146 = vadd.f32 0.0, %v2145
      %v2147 = vpop.f32.mrb[0].mxu0
      %v2148 = vpop.f32.mrb[0].mxu0
      %v2149 = vadd.f32 0.0, %v2148
      %v2150 = vpop.f32.mrb[0].mxu0
      %2151 = vmatprep.mubr.bf16.mxu0 0
      %2152 = vmatmul.mubr.bf16.gmra.mrb[0].mxu0 %v2093
      %v2153 = vpop.f32.mrb[0].mxu0
      %v2154 = vadd.f32 0.0, %v2153
      %v2155 = vpop.f32.mrb[0].mxu0
      %v2156 = vpop.f32.mrb[0].mxu0
      %v2157 = vadd.f32 0.0, %v2156
      %v2158 = vpop.f32.mrb[0].mxu0
      %2159 = vdwg.mxu0
      %v2160 = vadd.f32 %v1948, %v2130
      %v2161 = vadd.f32 %v1949, %v2133
      %v2162 = vadd.f32 %v1950, %v2138
      %v2163 = vadd.f32 %v1951, %v2141
      %v2164 = vadd.f32 %v1952, %v2146
      %v2165 = vadd.f32 %v1953, %v2149
      %v2166 = vadd.f32 %v1954, %v2154
      %v2167 = vadd.f32 %v1955, %v2157
      %s2168 = scalar_lea.vmem %s1, 512
      %v2169 = vld [vmem:[%s2168] sm:$0xff]
      %v2170 = vld [vmem:[%s2168 + $0x8] sm:$0xff]
      %v2171 = vld [vmem:[%s2168 + $0x10] sm:$0xff]
      %v2172 = vld [vmem:[%s2168 + $0x18] sm:$0xff]
      %v2173 = vld [vmem:[%s2168 + $0x20] sm:$0xff]
      %v2174 = vld [vmem:[%s2168 + $0x28] sm:$0xff]
      %v2175 = vld [vmem:[%s2168 + $0x30] sm:$0xff]
      %v2176 = vld [vmem:[%s2168 + $0x38] sm:$0xff]
      %v2185 = vunpack.c.l.b16 %v2169
      %v2186 = vunpack.c.h.b16 %v2169
      %v2187 = vunpack.c.l.b16 %v2170
      %v2188 = vunpack.c.h.b16 %v2170
      %v2189 = vunpack.c.l.b16 %v2171
      %v2190 = vunpack.c.h.b16 %v2171
      %v2191 = vunpack.c.l.b16 %v2172
      %v2192 = vunpack.c.h.b16 %v2172
      %v2193 = vunpack.c.l.b16 %v2173
      %v2194 = vunpack.c.h.b16 %v2173
      %v2195 = vunpack.c.l.b16 %v2174
      %v2196 = vunpack.c.h.b16 %v2174
      %v2197 = vunpack.c.l.b16 %v2175
      %v2198 = vunpack.c.h.b16 %v2175
      %v2199 = vunpack.c.l.b16 %v2176
      %v2200 = vunpack.c.h.b16 %v2176
      %v2201 = vpack.c.b16 %v2187, %v2185
      %v2202 = vpack.c.b16 %v2188, %v2186
      %v2203 = vpack.c.b16 %v2191, %v2189
      %v2204 = vpack.c.b16 %v2192, %v2190
      %v2205 = vpack.c.b16 %v2195, %v2193
      %v2206 = vpack.c.b16 %v2196, %v2194
      %v2207 = vpack.c.b16 %v2199, %v2197
      %v2208 = vpack.c.b16 %v2200, %v2198
      %2217 = vmatprep.subr.bf16.mxu0 0
      %2218 = vmatpush1.bf16.msra.mxu0 %v505
      %2219 = vmatprep.subr.bf16.mxu0 0
      %2220 = vmatpush1.bf16.msra.mxu0 %v506
      %2221 = vmatprep.subr.bf16.mxu0 0
      %2222 = vmatpush1.bf16.msra.mxu0 %v507
      %2223 = vmatprep.subr.bf16.mxu0 0
      %2224 = vmatpush1.bf16.msra.mxu0 %v508
      %2225 = vmatprep.subr.bf16.mxu0 0
      %2226 = vmatpush1.bf16.msra.mxu0 %v509
      %2227 = vmatprep.subr.bf16.mxu0 0
      %2228 = vmatpush1.bf16.msra.mxu0 %v510
      %2229 = vmatprep.subr.bf16.mxu0 0
      %2230 = vmatpush1.bf16.msra.mxu0 %v511
      %2231 = vmatprep.subr.bf16.mxu0 0
      %2232 = vmatpush1.bf16.msra.mxu0 %v512
      %2233 = vmatprep.subr.bf16.mxu0 0
      %2234 = vmatpush1.bf16.msra.mxu0 %v513
      %2235 = vmatprep.subr.bf16.mxu0 0
      %2236 = vmatpush1.bf16.msra.mxu0 %v514
      %2237 = vmatprep.subr.bf16.mxu0 0
      %2238 = vmatpush1.bf16.msra.mxu0 %v515
      %2239 = vmatprep.subr.bf16.mxu0 0
      %2240 = vmatpush1.bf16.msra.mxu0 %v516
      %2241 = vmatprep.subr.bf16.mxu0 0
      %2242 = vmatpush1.bf16.msra.mxu0 %v517
      %2243 = vmatprep.subr.bf16.mxu0 0
      %2244 = vmatpush1.bf16.msra.mxu0 %v518
      %2245 = vmatprep.subr.bf16.mxu0 0
      %2246 = vmatpush1.bf16.msra.mxu0 %v519
      %2247 = vmatprep.subr.bf16.mxu0 0
      %2248 = vmatpush1.bf16.msra.mxu0 %v520
      %2249 = vmatprep.mubr.bf16.mxu0 %v2202
      %2250 = vmatmul.mubr.bf16.gmra.mrb[0].mxu0 %v2201
      %v2251 = vpop.f32.mrb[0].mxu0
      %v2252 = vadd.f32 0.0, %v2251
      %v2253 = vpop.f32.mrb[0].mxu0
      %v2254 = vpop.f32.mrb[0].mxu0
      %v2255 = vadd.f32 0.0, %v2254
      %v2256 = vpop.f32.mrb[0].mxu0
      %2257 = vmatprep.mubr.bf16.mxu0 %v2204
      %2258 = vmatmul.mubr.bf16.gmra.mrb[0].mxu0 %v2203
      %v2259 = vpop.f32.mrb[0].mxu0
      %v2260 = vadd.f32 0.0, %v2259
      %v2261 = vpop.f32.mrb[0].mxu0
      %v2262 = vpop.f32.mrb[0].mxu0
      %v2263 = vadd.f32 0.0, %v2262
      %v2264 = vpop.f32.mrb[0].mxu0
      %2265 = vmatprep.mubr.bf16.mxu0 %v2206
      %2266 = vmatmul.mubr.bf16.gmra.mrb[0].mxu0 %v2205
      %v2267 = vpop.f32.mrb[0].mxu0
      %v2268 = vadd.f32 0.0, %v2267
      %v2269 = vpop.f32.mrb[0].mxu0
      %v2270 = vpop.f32.mrb[0].mxu0
      %v2271 = vadd.f32 0.0, %v2270
      %v2272 = vpop.f32.mrb[0].mxu0
      %2273 = vmatprep.mubr.bf16.mxu0 %v2208
      %2274 = vmatmul.mubr.bf16.gmra.mrb[0].mxu0 %v2207
      %v2275 = vpop.f32.mrb[0].mxu0
      %v2276 = vadd.f32 0.0, %v2275
      %v2277 = vpop.f32.mrb[0].mxu0
      %v2278 = vpop.f32.mrb[0].mxu0
      %v2279 = vadd.f32 0.0, %v2278
      %v2280 = vpop.f32.mrb[0].mxu0
      %2281 = vdwg.mxu0
      %v2282 = vpack.c.bf16 %v2255, %v2252
      %v2283 = vpack.c.bf16 %v2263, %v2260
      %v2284 = vpack.c.bf16 %v2271, %v2268
      %v2285 = vpack.c.bf16 %v2279, %v2276
      %s2286 = scalar_lea.vmem %s2, 64
      %v2287 = vld [vmem:[%s2286] sm:$0xf]
      %v2288 = vld [vmem:[%s2286 + $0x4] sm:$0xf]
      %v2291 = vunpack.c.l.b16 %v2287
      %v2292 = vunpack.c.l.b16 %v2288
      %v2293 = vpack.c.b16 %v2292, %v2291
      %v2296 = vsel %vm735, %v2282, 0
      %v2299 = vsel %vm735, %v2283, 0
      %v2302 = vsel %vm735, %v2284, 0
      %v2305 = vsel %vm735, %v2285, 0
      %2307 = vmatprep.subr.bf16.mxu0 0
      %2308 = vmatpush1.bf16.msra.mxu0 %v2293
      %2309 = vmatprep.subr.bf16.mxu0 0
      %2310 = vmatpush1.bf16.msra.mxu0 0
      %2311 = vmatprep.subr.bf16.mxu0 0
      %2312 = vmatpush1.bf16.msra.mxu0 0
      %2313 = vmatprep.subr.bf16.mxu0 0
      %2314 = vmatpush1.bf16.msra.mxu0 0
      %2315 = vmatprep.subr.bf16.mxu0 0
      %2316 = vmatpush1.bf16.msra.mxu0 0
      %2317 = vmatprep.subr.bf16.mxu0 0
      %2318 = vmatpush1.bf16.msra.mxu0 0
      %2319 = vmatprep.subr.bf16.mxu0 0
      %2320 = vmatpush1.bf16.msra.mxu0 0
      %2321 = vmatprep.subr.bf16.mxu0 0
      %2322 = vmatpush1.bf16.msra.mxu0 0
      %2323 = vmatprep.subr.bf16.mxu0 0
      %2324 = vmatpush1.bf16.msra.mxu0 0
      %2325 = vmatprep.subr.bf16.mxu0 0
      %2326 = vmatpush1.bf16.msra.mxu0 0
      %2327 = vmatprep.subr.bf16.mxu0 0
      %2328 = vmatpush1.bf16.msra.mxu0 0
      %2329 = vmatprep.subr.bf16.mxu0 0
      %2330 = vmatpush1.bf16.msra.mxu0 0
      %2331 = vmatprep.subr.bf16.mxu0 0
      %2332 = vmatpush1.bf16.msra.mxu0 0
      %2333 = vmatprep.subr.bf16.mxu0 0
      %2334 = vmatpush1.bf16.msra.mxu0 0
      %2335 = vmatprep.subr.bf16.mxu0 0
      %2336 = vmatpush1.bf16.msra.mxu0 0
      %2337 = vmatprep.subr.bf16.mxu0 0
      %2338 = vmatpush1.bf16.msra.mxu0 0
      %2339 = vmatprep.mubr.bf16.mxu0 0
      %2340 = vmatmul.mubr.bf16.gmra.mrb[0].mxu0 %v2296
      %v2341 = vpop.f32.mrb[0].mxu0
      %v2342 = vadd.f32 0.0, %v2341
      %v2343 = vpop.f32.mrb[0].mxu0
      %v2344 = vpop.f32.mrb[0].mxu0
      %v2345 = vadd.f32 0.0, %v2344
      %v2346 = vpop.f32.mrb[0].mxu0
      %2347 = vmatprep.mubr.bf16.mxu0 0
      %2348 = vmatmul.mubr.bf16.gmra.mrb[0].mxu0 %v2299
      %v2349 = vpop.f32.mrb[0].mxu0
      %v2350 = vadd.f32 0.0, %v2349
      %v2351 = vpop.f32.mrb[0].mxu0
      %v2352 = vpop.f32.mrb[0].mxu0
      %v2353 = vadd.f32 0.0, %v2352
      %v2354 = vpop.f32.mrb[0].mxu0
      %2355 = vmatprep.mubr.bf16.mxu0 0
      %2356 = vmatmul.mubr.bf16.gmra.mrb[0].mxu0 %v2302
      %v2357 = vpop.f32.mrb[0].mxu0
      %v2358 = vadd.f32 0.0, %v2357
      %v2359 = vpop.f32.mrb[0].mxu0
      %v2360 = vpop.f32.mrb[0].mxu0
      %v2361 = vadd.f32 0.0, %v2360
      %v2362 = vpop.f32.mrb[0].mxu0
      %2363 = vmatprep.mubr.bf16.mxu0 0
      %2364 = vmatmul.mubr.bf16.gmra.mrb[0].mxu0 %v2305
      %v2365 = vpop.f32.mrb[0].mxu0
      %v2366 = vadd.f32 0.0, %v2365
      %v2367 = vpop.f32.mrb[0].mxu0
      %v2368 = vpop.f32.mrb[0].mxu0
      %v2369 = vadd.f32 0.0, %v2368
      %v2370 = vpop.f32.mrb[0].mxu0
      %2371 = vdwg.mxu0
      %v2372 = vadd.f32 %v2160, %v2342
      %v2373 = vadd.f32 %v2161, %v2345
      %v2374 = vadd.f32 %v2162, %v2350
      %v2375 = vadd.f32 %v2163, %v2353
      %v2376 = vadd.f32 %v2164, %v2358
      %v2377 = vadd.f32 %v2165, %v2361
      %v2378 = vadd.f32 %v2166, %v2366
      %v2379 = vadd.f32 %v2167, %v2369
      %v2380 = vld [vmem:[%s3] sm:$0x1]
      %v2382 = vlaneseq
      %v2383 = vshrl.u32 %v2382, 7
      %v2384 = vsub.s32 0, %v2383
      %v2385 = vrot.slane %v2380, %v2384
      %v2387 = vadd.f32 %v2372, %v2385
      %v2388 = vadd.f32 %v2373, %v2385
      %v2389 = vadd.f32 %v2374, %v2385
      %v2390 = vadd.f32 %v2375, %v2385
      %v2391 = vadd.f32 %v2376, %v2385
      %v2392 = vadd.f32 %v2377, %v2385
      %v2393 = vadd.f32 %v2378, %v2385
      %v2394 = vadd.f32 %v2379, %v2385
      %vm2395 = vcmp.gt.f32.partialorder %v2387, 0.0
      %vm2396 = vcmp.gt.f32.partialorder %v2388, 0.0
      %vm2397 = vcmp.gt.f32.partialorder %v2389, 0.0
      %vm2398 = vcmp.gt.f32.partialorder %v2390, 0.0
      %vm2399 = vcmp.gt.f32.partialorder %v2391, 0.0
      %vm2400 = vcmp.gt.f32.partialorder %v2392, 0.0
      %vm2401 = vcmp.gt.f32.partialorder %v2393, 0.0
      %vm2402 = vcmp.gt.f32.partialorder %v2394, 0.0
      %v2403 = vmul.f32 %v2387, 0.2
      %v2404 = vmul.f32 %v2388, 0.2
      %v2405 = vmul.f32 %v2389, 0.2
      %v2406 = vmul.f32 %v2390, 0.2
      %v2407 = vmul.f32 %v2391, 0.2
      %v2408 = vmul.f32 %v2392, 0.2
      %v2409 = vmul.f32 %v2393, 0.2
      %v2410 = vmul.f32 %v2394, 0.2
      %v2411 = vsel %vm2395, %v2387, %v2403
      %v2412 = vsel %vm2396, %v2388, %v2404
      %v2413 = vsel %vm2397, %v2389, %v2405
      %v2414 = vsel %vm2398, %v2390, %v2406
      %v2415 = vsel %vm2399, %v2391, %v2407
      %v2416 = vsel %vm2400, %v2392, %v2408
      %v2417 = vsel %vm2401, %v2393, %v2409
      %v2418 = vsel %vm2402, %v2394, %v2410
      %v2419 = vpack.c.bf16 %v2412, %v2411
      %v2420 = vpack.c.bf16 %v2414, %v2413
      %v2421 = vpack.c.bf16 %v2416, %v2415
      %v2422 = vpack.c.bf16 %v2418, %v2417
      %v2423 = vld [vmem:[%s4] sm:$0xf]
      %v2424 = vld [vmem:[%s4 + $0x4] sm:$0xf]
      %v2427 = vunpack.c.l.b16 %v2423
      %v2428 = vunpack.c.l.b16 %v2424
      %v2429 = vpack.c.b16 %v2428, %v2427
      %vm2430 = vcmask 523264
      %v2432 = vsel %vm2430, %v2429, 0
      %2434 = vmatprep.subr.bf16.mxu0 0
      %2435 = vmatpush1.bf16.msra.mxu0 %v2419
      %2436 = vmatprep.subr.bf16.mxu0 0
      %2437 = vmatpush1.bf16.msra.mxu0 %v2420
      %2438 = vmatprep.subr.bf16.mxu0 0
      %2439 = vmatpush1.bf16.msra.mxu0 %v2421
      %2440 = vmatprep.subr.bf16.mxu0 0
      %2441 = vmatpush1.bf16.msra.mxu0 %v2422
      %2442 = vmatprep.subr.bf16.mxu0 0
      %2443 = vmatpush1.bf16.msra.mxu0 0
      %2444 = vmatprep.subr.bf16.mxu0 0
      %2445 = vmatpush1.bf16.msra.mxu0 0
      %2446 = vmatprep.subr.bf16.mxu0 0
      %2447 = vmatpush1.bf16.msra.mxu0 0
      %2448 = vmatprep.subr.bf16.mxu0 0
      %2449 = vmatpush1.bf16.msra.mxu0 0
      %2450 = vmatprep.subr.bf16.mxu0 0
      %2451 = vmatpush1.bf16.msra.mxu0 0
      %2452 = vmatprep.subr.bf16.mxu0 0
      %2453 = vmatpush1.bf16.msra.mxu0 0
      %2454 = vmatprep.subr.bf16.mxu0 0
      %2455 = vmatpush1.bf16.msra.mxu0 0
      %2456 = vmatprep.subr.bf16.mxu0 0
      %2457 = vmatpush1.bf16.msra.mxu0 0
      %2458 = vmatprep.subr.bf16.mxu0 0
      %2459 = vmatpush1.bf16.msra.mxu0 0
      %2460 = vmatprep.subr.bf16.mxu0 0
      %2461 = vmatpush1.bf16.msra.mxu0 0
      %2462 = vmatprep.subr.bf16.mxu0 0
      %2463 = vmatpush1.bf16.msra.mxu0 0
      %2464 = vmatprep.subr.bf16.mxu0 0
      %2465 = vmatpush1.bf16.msra.mxu0 0
      %2466 = vmatprep.mubr.bf16.mxu0 0
      %2467 = vmatmul.mubr.bf16.gmra.mrb[0].mxu0 %v2432
      %v2468 = vpop.f32.mrb[0].mxu0
      %v2469 = vadd.f32 0.0, %v2468
      %v2470 = vpop.f32.mrb[0].mxu0
      %v2471 = vpop.f32.mrb[0].mxu0
      %v2472 = vadd.f32 0.0, %v2471
      %v2473 = vpop.f32.mrb[0].mxu0
      %2474 = vdwg.mxu0
      %v2475 = vpack.c.bf16 %v2472, %v2469
      %v2476 = vld [vmem:[%s5] sm:$0xf]
      %v2477 = vld [vmem:[%s5 + $0x4] sm:$0xf]
      %v2478 = vld [vmem:[%s5 + $0x8] sm:$0xf]
      %v2479 = vld [vmem:[%s5 + $0xc] sm:$0xf]
      %v2480 = vld [vmem:[%s5 + $0x10] sm:$0xf]
      %v2481 = vld [vmem:[%s5 + $0x14] sm:$0xf]
      %v2482 = vld [vmem:[%s5 + $0x18] sm:$0xf]
      %v2483 = vld [vmem:[%s5 + $0x1c] sm:$0xf]
      %v2484 = vld [vmem:[%s5 + $0x20] sm:$0xf]
      %v2485 = vld [vmem:[%s5 + $0x24] sm:$0xf]
      %v2486 = vld [vmem:[%s5 + $0x28] sm:$0xf]
      %v2487 = vld [vmem:[%s5 + $0x2c] sm:$0xf]
      %v2488 = vld [vmem:[%s5 + $0x30] sm:$0xf]
      %v2489 = vld [vmem:[%s5 + $0x34] sm:$0xf]
      %v2490 = vld [vmem:[%s5 + $0x38] sm:$0xf]
      %v2491 = vld [vmem:[%s5 + $0x3c] sm:$0xf]
      %s2492 = scalar_lea.vmem %s4, 8
      %v2493 = vld [vmem:[%s2492] sm:$0xf]
      %v2494 = vld [vmem:[%s2492 + $0x4] sm:$0xf]
      %v2497 = vunpack.c.l.b16 %v2493
      %v2498 = vunpack.c.l.b16 %v2494
      %v2499 = vpack.c.b16 %v2498, %v2497
      %v2501 = vsel %vm2430, %v2499, 0
      %2503 = vmatprep.subr.bf16.mxu0 0
      %2504 = vmatpush1.bf16.msra.mxu0 %v2419
      %2505 = vmatprep.subr.bf16.mxu0 0
      %2506 = vmatpush1.bf16.msra.mxu0 %v2420
      %2507 = vmatprep.subr.bf16.mxu0 0
      %2508 = vmatpush1.bf16.msra.mxu0 %v2421
      %2509 = vmatprep.subr.bf16.mxu0 0
      %2510 = vmatpush1.bf16.msra.mxu0 %v2422
      %2511 = vmatprep.subr.bf16.mxu0 0
      %2512 = vmatpush1.bf16.msra.mxu0 0
      %2513 = vmatprep.subr.bf16.mxu0 0
      %2514 = vmatpush1.bf16.msra.mxu0 0
      %2515 = vmatprep.subr.bf16.mxu0 0
      %2516 = vmatpush1.bf16.msra.mxu0 0
      %2517 = vmatprep.subr.bf16.mxu0 0
      %2518 = vmatpush1.bf16.msra.mxu0 0
      %2519 = vmatprep.subr.bf16.mxu0 0
      %2520 = vmatpush1.bf16.msra.mxu0 0
      %2521 = vmatprep.subr.bf16.mxu0 0
      %2522 = vmatpush1.bf16.msra.mxu0 0
      %2523 = vmatprep.subr.bf16.mxu0 0
      %2524 = vmatpush1.bf16.msra.mxu0 0
      %2525 = vmatprep.subr.bf16.mxu0 0
      %2526 = vmatpush1.bf16.msra.mxu0 0
      %2527 = vmatprep.subr.bf16.mxu0 0
      %2528 = vmatpush1.bf16.msra.mxu0 0
      %2529 = vmatprep.subr.bf16.mxu0 0
      %2530 = vmatpush1.bf16.msra.mxu0 0
      %2531 = vmatprep.subr.bf16.mxu0 0
      %2532 = vmatpush1.bf16.msra.mxu0 0
      %2533 = vmatprep.subr.bf16.mxu0 0
      %2534 = vmatpush1.bf16.msra.mxu0 0
      %2535 = vmatprep.mubr.bf16.mxu0 0
      %2536 = vmatmul.mubr.bf16.gmra.mrb[0].mxu0 %v2501
      %v2537 = vpop.f32.mrb[0].mxu0
      %v2538 = vadd.f32 0.0, %v2537
      %v2539 = vpop.f32.mrb[0].mxu0
      %v2540 = vpop.f32.mrb[0].mxu0
      %v2541 = vadd.f32 0.0, %v2540
      %v2542 = vpop.f32.mrb[0].mxu0
      %2543 = vdwg.mxu0
      %v2544 = vpack.c.bf16 %v2541, %v2538
      %s2545 = scalar_lea.vmem %s5, 64
      %v2546 = vld [vmem:[%s2545] sm:$0xf]
      %v2547 = vld [vmem:[%s2545 + $0x4] sm:$0xf]
      %v2548 = vld [vmem:[%s2545 + $0x8] sm:$0xf]
      %v2549 = vld [vmem:[%s2545 + $0xc] sm:$0xf]
      %v2550 = vld [vmem:[%s2545 + $0x10] sm:$0xf]
      %v2551 = vld [vmem:[%s2545 + $0x14] sm:$0xf]
      %v2552 = vld [vmem:[%s2545 + $0x18] sm:$0xf]
      %v2553 = vld [vmem:[%s2545 + $0x1c] sm:$0xf]
      %v2554 = vld [vmem:[%s2545 + $0x20] sm:$0xf]
      %v2555 = vld [vmem:[%s2545 + $0x24] sm:$0xf]
      %v2556 = vld [vmem:[%s2545 + $0x28] sm:$0xf]
      %v2557 = vld [vmem:[%s2545 + $0x2c] sm:$0xf]
      %v2558 = vld [vmem:[%s2545 + $0x30] sm:$0xf]
      %v2559 = vld [vmem:[%s2545 + $0x34] sm:$0xf]
      %v2560 = vld [vmem:[%s2545 + $0x38] sm:$0xf]
      %v2561 = vld [vmem:[%s2545 + $0x3c] sm:$0xf]
      %v2578 = vunpack.c.l.b16 %v2546
      %v2579 = vunpack.c.l.b16 %v2547
      %v2580 = vunpack.c.l.b16 %v2548
      %v2581 = vunpack.c.l.b16 %v2549
      %v2582 = vunpack.c.l.b16 %v2550
      %v2583 = vunpack.c.l.b16 %v2551
      %v2584 = vunpack.c.l.b16 %v2552
      %v2585 = vunpack.c.l.b16 %v2553
      %v2586 = vunpack.c.l.b16 %v2554
      %v2587 = vunpack.c.l.b16 %v2555
      %v2588 = vunpack.c.l.b16 %v2556
      %v2589 = vunpack.c.l.b16 %v2557
      %v2590 = vunpack.c.l.b16 %v2558
      %v2591 = vunpack.c.l.b16 %v2559
      %v2592 = vunpack.c.l.b16 %v2560
      %v2593 = vunpack.c.l.b16 %v2561
      %v2594 = vpack.c.b16 %v2579, %v2578
      %v2595 = vpack.c.b16 %v2581, %v2580
      %v2596 = vpack.c.b16 %v2583, %v2582
      %v2597 = vpack.c.b16 %v2585, %v2584
      %v2598 = vpack.c.b16 %v2587, %v2586
      %v2599 = vpack.c.b16 %v2589, %v2588
      %v2600 = vpack.c.b16 %v2591, %v2590
      %v2601 = vpack.c.b16 %v2593, %v2592
      %2610 = vmatprep.subr.bf16.mxu0 0
      %2611 = vmatpush1.bf16.msra.mxu0 %v2594
      %2612 = vmatprep.subr.bf16.mxu0 0
      %2613 = vmatpush1.bf16.msra.mxu0 %v2595
      %2614 = vmatprep.subr.bf16.mxu0 0
      %2615 = vmatpush1.bf16.msra.mxu0 %v2596
      %2616 = vmatprep.subr.bf16.mxu0 0
      %2617 = vmatpush1.bf16.msra.mxu0 %v2597
      %2618 = vmatprep.subr.bf16.mxu0 0
      %2619 = vmatpush1.bf16.msra.mxu0 %v2598
      %2620 = vmatprep.subr.bf16.mxu0 0
      %2621 = vmatpush1.bf16.msra.mxu0 %v2599
      %2622 = vmatprep.subr.bf16.mxu0 0
      %2623 = vmatpush1.bf16.msra.mxu0 %v2600
      %2624 = vmatprep.subr.bf16.mxu0 0
      %2625 = vmatpush1.bf16.msra.mxu0 %v2601
      %2626 = vmatprep.subr.bf16.mxu0 0
      %2627 = vmatpush1.bf16.msra.mxu0 0
      %2628 = vmatprep.subr.bf16.mxu0 0
      %2629 = vmatpush1.bf16.msra.mxu0 0
      %2630 = vmatprep.subr.bf16.mxu0 0
      %2631 = vmatpush1.bf16.msra.mxu0 0
      %2632 = vmatprep.subr.bf16.mxu0 0
      %2633 = vmatpush1.bf16.msra.mxu0 0
      %2634 = vmatprep.subr.bf16.mxu0 0
      %2635 = vmatpush1.bf16.msra.mxu0 0
      %2636 = vmatprep.subr.bf16.mxu0 0
      %2637 = vmatpush1.bf16.msra.mxu0 0
      %2638 = vmatprep.subr.bf16.mxu0 0
      %2639 = vmatpush1.bf16.msra.mxu0 0
      %2640 = vmatprep.subr.bf16.mxu0 0
      %2641 = vmatpush1.bf16.msra.mxu0 0
      %2642 = vmatprep.mubr.bf16.mxu0 0
      %2643 = vmatmul.mubr.bf16.gmra.mrb[0].mxu0 %v2544
      %v2644 = vpop.f32.mrb[0].mxu0
      %v2645 = vadd.f32 0.0, %v2644
      %v2646 = vpop.f32.mrb[0].mxu0
      %v2647 = vpop.f32.mrb[0].mxu0
      %v2648 = vadd.f32 0.0, %v2647
      %v2649 = vpop.f32.mrb[0].mxu0
      %2650 = vdwg.mxu0
      %v2667 = vunpack.c.l.b16 %v2476
      %v2668 = vunpack.c.l.b16 %v2477
      %v2669 = vunpack.c.l.b16 %v2478
      %v2670 = vunpack.c.l.b16 %v2479
      %v2671 = vunpack.c.l.b16 %v2480
      %v2672 = vunpack.c.l.b16 %v2481
      %v2673 = vunpack.c.l.b16 %v2482
      %v2674 = vunpack.c.l.b16 %v2483
      %v2675 = vunpack.c.l.b16 %v2484
      %v2676 = vunpack.c.l.b16 %v2485
      %v2677 = vunpack.c.l.b16 %v2486
      %v2678 = vunpack.c.l.b16 %v2487
      %v2679 = vunpack.c.l.b16 %v2488
      %v2680 = vunpack.c.l.b16 %v2489
      %v2681 = vunpack.c.l.b16 %v2490
      %v2682 = vunpack.c.l.b16 %v2491
      %v2683 = vpack.c.b16 %v2668, %v2667
      %v2684 = vpack.c.b16 %v2670, %v2669
      %v2685 = vpack.c.b16 %v2672, %v2671
      %v2686 = vpack.c.b16 %v2674, %v2673
      %v2687 = vpack.c.b16 %v2676, %v2675
      %v2688 = vpack.c.b16 %v2678, %v2677
      %v2689 = vpack.c.b16 %v2680, %v2679
      %v2690 = vpack.c.b16 %v2682, %v2681
      %2699 = vmatprep.subr.bf16.mxu0 0
      %2700 = vmatpush1.bf16.msra.mxu0 %v2683
      %2701 = vmatprep.subr.bf16.mxu0 0
      %2702 = vmatpush1.bf16.msra.mxu0 %v2684
      %2703 = vmatprep.subr.bf16.mxu0 0
      %2704 = vmatpush1.bf16.msra.mxu0 %v2685
      %2705 = vmatprep.subr.bf16.mxu0 0
      %2706 = vmatpush1.bf16.msra.mxu0 %v2686
      %2707 = vmatprep.subr.bf16.mxu0 0
      %2708 = vmatpush1.bf16.msra.mxu0 %v2687
      %2709 = vmatprep.subr.bf16.mxu0 0
      %2710 = vmatpush1.bf16.msra.mxu0 %v2688
      %2711 = vmatprep.subr.bf16.mxu0 0
      %2712 = vmatpush1.bf16.msra.mxu0 %v2689
      %2713 = vmatprep.subr.bf16.mxu0 0
      %2714 = vmatpush1.bf16.msra.mxu0 %v2690
      %2715 = vmatprep.subr.bf16.mxu0 0
      %2716 = vmatpush1.bf16.msra.mxu0 0
      %2717 = vmatprep.subr.bf16.mxu0 0
      %2718 = vmatpush1.bf16.msra.mxu0 0
      %2719 = vmatprep.subr.bf16.mxu0 0
      %2720 = vmatpush1.bf16.msra.mxu0 0
      %2721 = vmatprep.subr.bf16.mxu0 0
      %2722 = vmatpush1.bf16.msra.mxu0 0
      %2723 = vmatprep.subr.bf16.mxu0 0
      %2724 = vmatpush1.bf16.msra.mxu0 0
      %2725 = vmatprep.subr.bf16.mxu0 0
      %2726 = vmatpush1.bf16.msra.mxu0 0
      %2727 = vmatprep.subr.bf16.mxu0 0
      %2728 = vmatpush1.bf16.msra.mxu0 0
      %2729 = vmatprep.subr.bf16.mxu0 0
      %2730 = vmatpush1.bf16.msra.mxu0 0
      %2731 = vmatprep.mubr.bf16.mxu0 0
      %2732 = vmatmul.mubr.bf16.gmra.mrb[0].mxu0 %v2475
      %v2733 = vpop.f32.mrb[0].mxu0
      %v2734 = vadd.f32 %v2645, %v2733
      %v2735 = vpop.f32.mrb[0].mxu0
      %v2736 = vpop.f32.mrb[0].mxu0
      %v2737 = vadd.f32 %v2648, %v2736
      %v2738 = vpop.f32.mrb[0].mxu0
      %2739 = vdwg.mxu0
      %s2740 = scalar_lea.vmem %s4, 16
      %v2741 = vld [vmem:[%s2740] sm:$0xf]
      %v2742 = vld [vmem:[%s2740 + $0x4] sm:$0xf]
      %v2745 = vunpack.c.l.b16 %v2741
      %v2746 = vunpack.c.l.b16 %v2742
      %v2747 = vpack.c.b16 %v2746, %v2745
      %v2749 = vsel %vm2430, %v2747, 0
      %2751 = vmatprep.subr.bf16.mxu0 0
      %2752 = vmatpush1.bf16.msra.mxu0 %v2419
      %2753 = vmatprep.subr.bf16.mxu0 0
      %2754 = vmatpush1.bf16.msra.mxu0 %v2420
      %2755 = vmatprep.subr.bf16.mxu0 0
      %2756 = vmatpush1.bf16.msra.mxu0 %v2421
      %2757 = vmatprep.subr.bf16.mxu0 0
      %2758 = vmatpush1.bf16.msra.mxu0 %v2422
      %2759 = vmatprep.subr.bf16.mxu0 0
      %2760 = vmatpush1.bf16.msra.mxu0 0
      %2761 = vmatprep.subr.bf16.mxu0 0
      %2762 = vmatpush1.bf16.msra.mxu0 0
      %2763 = vmatprep.subr.bf16.mxu0 0
      %2764 = vmatpush1.bf16.msra.mxu0 0
      %2765 = vmatprep.subr.bf16.mxu0 0
      %2766 = vmatpush1.bf16.msra.mxu0 0
      %2767 = vmatprep.subr.bf16.mxu0 0
      %2768 = vmatpush1.bf16.msra.mxu0 0
      %2769 = vmatprep.subr.bf16.mxu0 0
      %2770 = vmatpush1.bf16.msra.mxu0 0
      %2771 = vmatprep.subr.bf16.mxu0 0
      %2772 = vmatpush1.bf16.msra.mxu0 0
      %2773 = vmatprep.subr.bf16.mxu0 0
      %2774 = vmatpush1.bf16.msra.mxu0 0
      %2775 = vmatprep.subr.bf16.mxu0 0
      %2776 = vmatpush1.bf16.msra.mxu0 0
      %2777 = vmatprep.subr.bf16.mxu0 0
      %2778 = vmatpush1.bf16.msra.mxu0 0
      %2779 = vmatprep.subr.bf16.mxu0 0
      %2780 = vmatpush1.bf16.msra.mxu0 0
      %2781 = vmatprep.subr.bf16.mxu0 0
      %2782 = vmatpush1.bf16.msra.mxu0 0
      %2783 = vmatprep.mubr.bf16.mxu0 0
      %2784 = vmatmul.mubr.bf16.gmra.mrb[0].mxu0 %v2749
      %v2785 = vpop.f32.mrb[0].mxu0
      %v2786 = vadd.f32 0.0, %v2785
      %v2787 = vpop.f32.mrb[0].mxu0
      %v2788 = vpop.f32.mrb[0].mxu0
      %v2789 = vadd.f32 0.0, %v2788
      %v2790 = vpop.f32.mrb[0].mxu0
      %2791 = vdwg.mxu0
      %v2792 = vpack.c.bf16 %v2789, %v2786
      %s2793 = scalar_lea.vmem %s5, 128
      %v2794 = vld [vmem:[%s2793] sm:$0xf]
      %v2795 = vld [vmem:[%s2793 + $0x4] sm:$0xf]
      %v2796 = vld [vmem:[%s2793 + $0x8] sm:$0xf]
      %v2797 = vld [vmem:[%s2793 + $0xc] sm:$0xf]
      %v2798 = vld [vmem:[%s2793 + $0x10] sm:$0xf]
      %v2799 = vld [vmem:[%s2793 + $0x14] sm:$0xf]
      %v2800 = vld [vmem:[%s2793 + $0x18] sm:$0xf]
      %v2801 = vld [vmem:[%s2793 + $0x1c] sm:$0xf]
      %v2802 = vld [vmem:[%s2793 + $0x20] sm:$0xf]
      %v2803 = vld [vmem:[%s2793 + $0x24] sm:$0xf]
      %v2804 = vld [vmem:[%s2793 + $0x28] sm:$0xf]
      %v2805 = vld [vmem:[%s2793 + $0x2c] sm:$0xf]
      %v2806 = vld [vmem:[%s2793 + $0x30] sm:$0xf]
      %v2807 = vld [vmem:[%s2793 + $0x34] sm:$0xf]
      %v2808 = vld [vmem:[%s2793 + $0x38] sm:$0xf]
      %v2809 = vld [vmem:[%s2793 + $0x3c] sm:$0xf]
      %v2826 = vunpack.c.l.b16 %v2794
      %v2827 = vunpack.c.l.b16 %v2795
      %v2828 = vunpack.c.l.b16 %v2796
      %v2829 = vunpack.c.l.b16 %v2797
      %v2830 = vunpack.c.l.b16 %v2798
      %v2831 = vunpack.c.l.b16 %v2799
      %v2832 = vunpack.c.l.b16 %v2800
      %v2833 = vunpack.c.l.b16 %v2801
      %v2834 = vunpack.c.l.b16 %v2802
      %v2835 = vunpack.c.l.b16 %v2803
      %v2836 = vunpack.c.l.b16 %v2804
      %v2837 = vunpack.c.l.b16 %v2805
      %v2838 = vunpack.c.l.b16 %v2806
      %v2839 = vunpack.c.l.b16 %v2807
      %v2840 = vunpack.c.l.b16 %v2808
      %v2841 = vunpack.c.l.b16 %v2809
      %v2842 = vpack.c.b16 %v2827, %v2826
      %v2843 = vpack.c.b16 %v2829, %v2828
      %v2844 = vpack.c.b16 %v2831, %v2830
      %v2845 = vpack.c.b16 %v2833, %v2832
      %v2846 = vpack.c.b16 %v2835, %v2834
      %v2847 = vpack.c.b16 %v2837, %v2836
      %v2848 = vpack.c.b16 %v2839, %v2838
      %v2849 = vpack.c.b16 %v2841, %v2840
      %2858 = vmatprep.subr.bf16.mxu0 0
      %2859 = vmatpush1.bf16.msra.mxu0 %v2842
      %2860 = vmatprep.subr.bf16.mxu0 0
      %2861 = vmatpush1.bf16.msra.mxu0 %v2843
      %2862 = vmatprep.subr.bf16.mxu0 0
      %2863 = vmatpush1.bf16.msra.mxu0 %v2844
      %2864 = vmatprep.subr.bf16.mxu0 0
      %2865 = vmatpush1.bf16.msra.mxu0 %v2845
      %2866 = vmatprep.subr.bf16.mxu0 0
      %2867 = vmatpush1.bf16.msra.mxu0 %v2846
      %2868 = vmatprep.subr.bf16.mxu0 0
      %2869 = vmatpush1.bf16.msra.mxu0 %v2847
      %2870 = vmatprep.subr.bf16.mxu0 0
      %2871 = vmatpush1.bf16.msra.mxu0 %v2848
      %2872 = vmatprep.subr.bf16.mxu0 0
      %2873 = vmatpush1.bf16.msra.mxu0 %v2849
      %2874 = vmatprep.subr.bf16.mxu0 0
      %2875 = vmatpush1.bf16.msra.mxu0 0
      %2876 = vmatprep.subr.bf16.mxu0 0
      %2877 = vmatpush1.bf16.msra.mxu0 0
      %2878 = vmatprep.subr.bf16.mxu0 0
      %2879 = vmatpush1.bf16.msra.mxu0 0
      %2880 = vmatprep.subr.bf16.mxu0 0
      %2881 = vmatpush1.bf16.msra.mxu0 0
      %2882 = vmatprep.subr.bf16.mxu0 0
      %2883 = vmatpush1.bf16.msra.mxu0 0
      %2884 = vmatprep.subr.bf16.mxu0 0
      %2885 = vmatpush1.bf16.msra.mxu0 0
      %2886 = vmatprep.subr.bf16.mxu0 0
      %2887 = vmatpush1.bf16.msra.mxu0 0
      %2888 = vmatprep.subr.bf16.mxu0 0
      %2889 = vmatpush1.bf16.msra.mxu0 0
      %2890 = vmatprep.mubr.bf16.mxu0 0
      %2891 = vmatmul.mubr.bf16.gmra.mrb[0].mxu0 %v2792
      %v2892 = vpop.f32.mrb[0].mxu0
      %v2893 = vadd.f32 0.0, %v2892
      %v2894 = vpop.f32.mrb[0].mxu0
      %v2895 = vpop.f32.mrb[0].mxu0
      %v2896 = vadd.f32 0.0, %v2895
      %v2897 = vpop.f32.mrb[0].mxu0
      %2898 = vdwg.mxu0
      %v2899 = vadd.f32 %v2734, %v2893
      %v2900 = vadd.f32 %v2737, %v2896
      %s2901 = scalar_lea.vmem %s4, 24
      %v2902 = vld [vmem:[%s2901] sm:$0xf]
      %v2903 = vld [vmem:[%s2901 + $0x4] sm:$0xf]
      %v2906 = vunpack.c.l.b16 %v2902
      %v2907 = vunpack.c.l.b16 %v2903
      %v2908 = vpack.c.b16 %v2907, %v2906
      %v2910 = vsel %vm2430, %v2908, 0
      %2912 = vmatprep.subr.bf16.mxu0 0
      %2913 = vmatpush1.bf16.msra.mxu0 %v2419
      %2914 = vmatprep.subr.bf16.mxu0 0
      %2915 = vmatpush1.bf16.msra.mxu0 %v2420
      %2916 = vmatprep.subr.bf16.mxu0 0
      %2917 = vmatpush1.bf16.msra.mxu0 %v2421
      %2918 = vmatprep.subr.bf16.mxu0 0
      %2919 = vmatpush1.bf16.msra.mxu0 %v2422
      %2920 = vmatprep.subr.bf16.mxu0 0
      %2921 = vmatpush1.bf16.msra.mxu0 0
      %2922 = vmatprep.subr.bf16.mxu0 0
      %2923 = vmatpush1.bf16.msra.mxu0 0
      %2924 = vmatprep.subr.bf16.mxu0 0
      %2925 = vmatpush1.bf16.msra.mxu0 0
      %2926 = vmatprep.subr.bf16.mxu0 0
      %2927 = vmatpush1.bf16.msra.mxu0 0
      %2928 = vmatprep.subr.bf16.mxu0 0
      %2929 = vmatpush1.bf16.msra.mxu0 0
      %2930 = vmatprep.subr.bf16.mxu0 0
      %2931 = vmatpush1.bf16.msra.mxu0 0
      %2932 = vmatprep.subr.bf16.mxu0 0
      %2933 = vmatpush1.bf16.msra.mxu0 0
      %2934 = vmatprep.subr.bf16.mxu0 0
      %2935 = vmatpush1.bf16.msra.mxu0 0
      %2936 = vmatprep.subr.bf16.mxu0 0
      %2937 = vmatpush1.bf16.msra.mxu0 0
      %2938 = vmatprep.subr.bf16.mxu0 0
      %2939 = vmatpush1.bf16.msra.mxu0 0
      %2940 = vmatprep.subr.bf16.mxu0 0
      %2941 = vmatpush1.bf16.msra.mxu0 0
      %2942 = vmatprep.subr.bf16.mxu0 0
      %2943 = vmatpush1.bf16.msra.mxu0 0
      %2944 = vmatprep.mubr.bf16.mxu0 0
      %2945 = vmatmul.mubr.bf16.gmra.mrb[0].mxu0 %v2910
      %v2946 = vpop.f32.mrb[0].mxu0
      %v2947 = vadd.f32 0.0, %v2946
      %v2948 = vpop.f32.mrb[0].mxu0
      %v2949 = vpop.f32.mrb[0].mxu0
      %v2950 = vadd.f32 0.0, %v2949
      %v2951 = vpop.f32.mrb[0].mxu0
      %2952 = vdwg.mxu0
      %v2953 = vpack.c.bf16 %v2950, %v2947
      %s2954 = scalar_lea.vmem %s5, 192
      %v2955 = vld [vmem:[%s2954] sm:$0xf]
      %v2956 = vld [vmem:[%s2954 + $0x4] sm:$0xf]
      %v2957 = vld [vmem:[%s2954 + $0x8] sm:$0xf]
      %v2958 = vld [vmem:[%s2954 + $0xc] sm:$0xf]
      %v2959 = vld [vmem:[%s2954 + $0x10] sm:$0xf]
      %v2960 = vld [vmem:[%s2954 + $0x14] sm:$0xf]
      %v2961 = vld [vmem:[%s2954 + $0x18] sm:$0xf]
      %v2962 = vld [vmem:[%s2954 + $0x1c] sm:$0xf]
      %v2963 = vld [vmem:[%s2954 + $0x20] sm:$0xf]
      %v2964 = vld [vmem:[%s2954 + $0x24] sm:$0xf]
      %v2965 = vld [vmem:[%s2954 + $0x28] sm:$0xf]
      %v2966 = vld [vmem:[%s2954 + $0x2c] sm:$0xf]
      %v2967 = vld [vmem:[%s2954 + $0x30] sm:$0xf]
      %v2968 = vld [vmem:[%s2954 + $0x34] sm:$0xf]
      %v2969 = vld [vmem:[%s2954 + $0x38] sm:$0xf]
      %v2970 = vld [vmem:[%s2954 + $0x3c] sm:$0xf]
      %v2987 = vunpack.c.l.b16 %v2955
      %v2988 = vunpack.c.l.b16 %v2956
      %v2989 = vunpack.c.l.b16 %v2957
      %v2990 = vunpack.c.l.b16 %v2958
      %v2991 = vunpack.c.l.b16 %v2959
      %v2992 = vunpack.c.l.b16 %v2960
      %v2993 = vunpack.c.l.b16 %v2961
      %v2994 = vunpack.c.l.b16 %v2962
      %v2995 = vunpack.c.l.b16 %v2963
      %v2996 = vunpack.c.l.b16 %v2964
      %v2997 = vunpack.c.l.b16 %v2965
      %v2998 = vunpack.c.l.b16 %v2966
      %v2999 = vunpack.c.l.b16 %v2967
      %v3000 = vunpack.c.l.b16 %v2968
      %v3001 = vunpack.c.l.b16 %v2969
      %v3002 = vunpack.c.l.b16 %v2970
      %v3003 = vpack.c.b16 %v2988, %v2987
      %v3004 = vpack.c.b16 %v2990, %v2989
      %v3005 = vpack.c.b16 %v2992, %v2991
      %v3006 = vpack.c.b16 %v2994, %v2993
      %v3007 = vpack.c.b16 %v2996, %v2995
      %v3008 = vpack.c.b16 %v2998, %v2997
      %v3009 = vpack.c.b16 %v3000, %v2999
      %v3010 = vpack.c.b16 %v3002, %v3001
      %3019 = vmatprep.subr.bf16.mxu0 0
      %3020 = vmatpush1.bf16.msra.mxu0 %v3003
      %3021 = vmatprep.subr.bf16.mxu0 0
      %3022 = vmatpush1.bf16.msra.mxu0 %v3004
      %3023 = vmatprep.subr.bf16.mxu0 0
      %3024 = vmatpush1.bf16.msra.mxu0 %v3005
      %3025 = vmatprep.subr.bf16.mxu0 0
      %3026 = vmatpush1.bf16.msra.mxu0 %v3006
      %3027 = vmatprep.subr.bf16.mxu0 0
      %3028 = vmatpush1.bf16.msra.mxu0 %v3007
      %3029 = vmatprep.subr.bf16.mxu0 0
      %3030 = vmatpush1.bf16.msra.mxu0 %v3008
      %3031 = vmatprep.subr.bf16.mxu0 0
      %3032 = vmatpush1.bf16.msra.mxu0 %v3009
      %3033 = vmatprep.subr.bf16.mxu0 0
      %3034 = vmatpush1.bf16.msra.mxu0 %v3010
      %3035 = vmatprep.subr.bf16.mxu0 0
      %3036 = vmatpush1.bf16.msra.mxu0 0
      %3037 = vmatprep.subr.bf16.mxu0 0
      %3038 = vmatpush1.bf16.msra.mxu0 0
      %3039 = vmatprep.subr.bf16.mxu0 0
      %3040 = vmatpush1.bf16.msra.mxu0 0
      %3041 = vmatprep.subr.bf16.mxu0 0
      %3042 = vmatpush1.bf16.msra.mxu0 0
      %3043 = vmatprep.subr.bf16.mxu0 0
      %3044 = vmatpush1.bf16.msra.mxu0 0
      %3045 = vmatprep.subr.bf16.mxu0 0
      %3046 = vmatpush1.bf16.msra.mxu0 0
      %3047 = vmatprep.subr.bf16.mxu0 0
      %3048 = vmatpush1.bf16.msra.mxu0 0
      %3049 = vmatprep.subr.bf16.mxu0 0
      %3050 = vmatpush1.bf16.msra.mxu0 0
      %3051 = vmatprep.mubr.bf16.mxu0 0
      %3052 = vmatmul.mubr.bf16.gmra.mrb[0].mxu0 %v2953
      %v3053 = vpop.f32.mrb[0].mxu0
      %v3054 = vadd.f32 0.0, %v3053
      %v3055 = vpop.f32.mrb[0].mxu0
      %v3056 = vpop.f32.mrb[0].mxu0
      %v3057 = vadd.f32 0.0, %v3056
      %v3058 = vpop.f32.mrb[0].mxu0
      %3059 = vdwg.mxu0
      %v3060 = vadd.f32 %v2899, %v3054
      %v3061 = vadd.f32 %v2900, %v3057
      %s3062 = scalar_lea.vmem %s4, 32
      %v3063 = vld [vmem:[%s3062] sm:$0xf]
      %v3064 = vld [vmem:[%s3062 + $0x4] sm:$0xf]
      %v3067 = vunpack.c.l.b16 %v3063
      %v3068 = vunpack.c.l.b16 %v3064
      %v3069 = vpack.c.b16 %v3068, %v3067
      %v3071 = vsel %vm2430, %v3069, 0
      %3073 = vmatprep.subr.bf16.mxu0 0
      %3074 = vmatpush1.bf16.msra.mxu0 %v2419
      %3075 = vmatprep.subr.bf16.mxu0 0
      %3076 = vmatpush1.bf16.msra.mxu0 %v2420
      %3077 = vmatprep.subr.bf16.mxu0 0
      %3078 = vmatpush1.bf16.msra.mxu0 %v2421
      %3079 = vmatprep.subr.bf16.mxu0 0
      %3080 = vmatpush1.bf16.msra.mxu0 %v2422
      %3081 = vmatprep.subr.bf16.mxu0 0
      %3082 = vmatpush1.bf16.msra.mxu0 0
      %3083 = vmatprep.subr.bf16.mxu0 0
      %3084 = vmatpush1.bf16.msra.mxu0 0
      %3085 = vmatprep.subr.bf16.mxu0 0
      %3086 = vmatpush1.bf16.msra.mxu0 0
      %3087 = vmatprep.subr.bf16.mxu0 0
      %3088 = vmatpush1.bf16.msra.mxu0 0
      %3089 = vmatprep.subr.bf16.mxu0 0
      %3090 = vmatpush1.bf16.msra.mxu0 0
      %3091 = vmatprep.subr.bf16.mxu0 0
      %3092 = vmatpush1.bf16.msra.mxu0 0
      %3093 = vmatprep.subr.bf16.mxu0 0
      %3094 = vmatpush1.bf16.msra.mxu0 0
      %3095 = vmatprep.subr.bf16.mxu0 0
      %3096 = vmatpush1.bf16.msra.mxu0 0
      %3097 = vmatprep.subr.bf16.mxu0 0
      %3098 = vmatpush1.bf16.msra.mxu0 0
      %3099 = vmatprep.subr.bf16.mxu0 0
      %3100 = vmatpush1.bf16.msra.mxu0 0
      %3101 = vmatprep.subr.bf16.mxu0 0
      %3102 = vmatpush1.bf16.msra.mxu0 0
      %3103 = vmatprep.subr.bf16.mxu0 0
      %3104 = vmatpush1.bf16.msra.mxu0 0
      %3105 = vmatprep.mubr.bf16.mxu0 0
      %3106 = vmatmul.mubr.bf16.gmra.mrb[0].mxu0 %v3071
      %v3107 = vpop.f32.mrb[0].mxu0
      %v3108 = vadd.f32 0.0, %v3107
      %v3109 = vpop.f32.mrb[0].mxu0
      %v3110 = vpop.f32.mrb[0].mxu0
      %v3111 = vadd.f32 0.0, %v3110
      %v3112 = vpop.f32.mrb[0].mxu0
      %3113 = vdwg.mxu0
      %v3114 = vpack.c.bf16 %v3111, %v3108
      %s3115 = scalar_lea.vmem %s5, 256
      %v3116 = vld [vmem:[%s3115] sm:$0xf]
      %v3117 = vld [vmem:[%s3115 + $0x4] sm:$0xf]
      %v3118 = vld [vmem:[%s3115 + $0x8] sm:$0xf]
      %v3119 = vld [vmem:[%s3115 + $0xc] sm:$0xf]
      %v3120 = vld [vmem:[%s3115 + $0x10] sm:$0xf]
      %v3121 = vld [vmem:[%s3115 + $0x14] sm:$0xf]
      %v3122 = vld [vmem:[%s3115 + $0x18] sm:$0xf]
      %v3123 = vld [vmem:[%s3115 + $0x1c] sm:$0xf]
      %v3124 = vld [vmem:[%s3115 + $0x20] sm:$0xf]
      %v3125 = vld [vmem:[%s3115 + $0x24] sm:$0xf]
      %v3126 = vld [vmem:[%s3115 + $0x28] sm:$0xf]
      %v3127 = vld [vmem:[%s3115 + $0x2c] sm:$0xf]
      %v3128 = vld [vmem:[%s3115 + $0x30] sm:$0xf]
      %v3129 = vld [vmem:[%s3115 + $0x34] sm:$0xf]
      %v3130 = vld [vmem:[%s3115 + $0x38] sm:$0xf]
      %v3131 = vld [vmem:[%s3115 + $0x3c] sm:$0xf]
      %v3148 = vunpack.c.l.b16 %v3116
      %v3149 = vunpack.c.l.b16 %v3117
      %v3150 = vunpack.c.l.b16 %v3118
      %v3151 = vunpack.c.l.b16 %v3119
      %v3152 = vunpack.c.l.b16 %v3120
      %v3153 = vunpack.c.l.b16 %v3121
      %v3154 = vunpack.c.l.b16 %v3122
      %v3155 = vunpack.c.l.b16 %v3123
      %v3156 = vunpack.c.l.b16 %v3124
      %v3157 = vunpack.c.l.b16 %v3125
      %v3158 = vunpack.c.l.b16 %v3126
      %v3159 = vunpack.c.l.b16 %v3127
      %v3160 = vunpack.c.l.b16 %v3128
      %v3161 = vunpack.c.l.b16 %v3129
      %v3162 = vunpack.c.l.b16 %v3130
      %v3163 = vunpack.c.l.b16 %v3131
      %v3164 = vpack.c.b16 %v3149, %v3148
      %v3165 = vpack.c.b16 %v3151, %v3150
      %v3166 = vpack.c.b16 %v3153, %v3152
      %v3167 = vpack.c.b16 %v3155, %v3154
      %v3168 = vpack.c.b16 %v3157, %v3156
      %v3169 = vpack.c.b16 %v3159, %v3158
      %v3170 = vpack.c.b16 %v3161, %v3160
      %v3171 = vpack.c.b16 %v3163, %v3162
      %3180 = vmatprep.subr.bf16.mxu0 0
      %3181 = vmatpush1.bf16.msra.mxu0 %v3164
      %3182 = vmatprep.subr.bf16.mxu0 0
      %3183 = vmatpush1.bf16.msra.mxu0 %v3165
      %3184 = vmatprep.subr.bf16.mxu0 0
      %3185 = vmatpush1.bf16.msra.mxu0 %v3166
      %3186 = vmatprep.subr.bf16.mxu0 0
      %3187 = vmatpush1.bf16.msra.mxu0 %v3167
      %3188 = vmatprep.subr.bf16.mxu0 0
      %3189 = vmatpush1.bf16.msra.mxu0 %v3168
      %3190 = vmatprep.subr.bf16.mxu0 0
      %3191 = vmatpush1.bf16.msra.mxu0 %v3169
      %3192 = vmatprep.subr.bf16.mxu0 0
      %3193 = vmatpush1.bf16.msra.mxu0 %v3170
      %3194 = vmatprep.subr.bf16.mxu0 0
      %3195 = vmatpush1.bf16.msra.mxu0 %v3171
      %3196 = vmatprep.subr.bf16.mxu0 0
      %3197 = vmatpush1.bf16.msra.mxu0 0
      %3198 = vmatprep.subr.bf16.mxu0 0
      %3199 = vmatpush1.bf16.msra.mxu0 0
      %3200 = vmatprep.subr.bf16.mxu0 0
      %3201 = vmatpush1.bf16.msra.mxu0 0
      %3202 = vmatprep.subr.bf16.mxu0 0
      %3203 = vmatpush1.bf16.msra.mxu0 0
      %3204 = vmatprep.subr.bf16.mxu0 0
      %3205 = vmatpush1.bf16.msra.mxu0 0
      %3206 = vmatprep.subr.bf16.mxu0 0
      %3207 = vmatpush1.bf16.msra.mxu0 0
      %3208 = vmatprep.subr.bf16.mxu0 0
      %3209 = vmatpush1.bf16.msra.mxu0 0
      %3210 = vmatprep.subr.bf16.mxu0 0
      %3211 = vmatpush1.bf16.msra.mxu0 0
      %3212 = vmatprep.mubr.bf16.mxu0 0
      %3213 = vmatmul.mubr.bf16.gmra.mrb[0].mxu0 %v3114
      %v3214 = vpop.f32.mrb[0].mxu0
      %v3215 = vadd.f32 0.0, %v3214
      %v3216 = vpop.f32.mrb[0].mxu0
      %v3217 = vpop.f32.mrb[0].mxu0
      %v3218 = vadd.f32 0.0, %v3217
      %v3219 = vpop.f32.mrb[0].mxu0
      %3220 = vdwg.mxu0
      %v3221 = vadd.f32 %v3060, %v3215
      %v3222 = vadd.f32 %v3061, %v3218
      %s3223 = scalar_lea.vmem %s4, 40
      %v3224 = vld [vmem:[%s3223] sm:$0xf]
      %v3225 = vld [vmem:[%s3223 + $0x4] sm:$0xf]
      %v3228 = vunpack.c.l.b16 %v3224
      %v3229 = vunpack.c.l.b16 %v3225
      %v3230 = vpack.c.b16 %v3229, %v3228
      %v3232 = vsel %vm2430, %v3230, 0
      %3234 = vmatprep.subr.bf16.mxu0 0
      %3235 = vmatpush1.bf16.msra.mxu0 %v2419
      %3236 = vmatprep.subr.bf16.mxu0 0
      %3237 = vmatpush1.bf16.msra.mxu0 %v2420
      %3238 = vmatprep.subr.bf16.mxu0 0
      %3239 = vmatpush1.bf16.msra.mxu0 %v2421
      %3240 = vmatprep.subr.bf16.mxu0 0
      %3241 = vmatpush1.bf16.msra.mxu0 %v2422
      %3242 = vmatprep.subr.bf16.mxu0 0
      %3243 = vmatpush1.bf16.msra.mxu0 0
      %3244 = vmatprep.subr.bf16.mxu0 0
      %3245 = vmatpush1.bf16.msra.mxu0 0
      %3246 = vmatprep.subr.bf16.mxu0 0
      %3247 = vmatpush1.bf16.msra.mxu0 0
      %3248 = vmatprep.subr.bf16.mxu0 0
      %3249 = vmatpush1.bf16.msra.mxu0 0
      %3250 = vmatprep.subr.bf16.mxu0 0
      %3251 = vmatpush1.bf16.msra.mxu0 0
      %3252 = vmatprep.subr.bf16.mxu0 0
      %3253 = vmatpush1.bf16.msra.mxu0 0
      %3254 = vmatprep.subr.bf16.mxu0 0
      %3255 = vmatpush1.bf16.msra.mxu0 0
      %3256 = vmatprep.subr.bf16.mxu0 0
      %3257 = vmatpush1.bf16.msra.mxu0 0
      %3258 = vmatprep.subr.bf16.mxu0 0
      %3259 = vmatpush1.bf16.msra.mxu0 0
      %3260 = vmatprep.subr.bf16.mxu0 0
      %3261 = vmatpush1.bf16.msra.mxu0 0
      %3262 = vmatprep.subr.bf16.mxu0 0
      %3263 = vmatpush1.bf16.msra.mxu0 0
      %3264 = vmatprep.subr.bf16.mxu0 0
      %3265 = vmatpush1.bf16.msra.mxu0 0
      %3266 = vmatprep.mubr.bf16.mxu0 0
      %3267 = vmatmul.mubr.bf16.gmra.mrb[0].mxu0 %v3232
      %v3268 = vpop.f32.mrb[0].mxu0
      %v3269 = vadd.f32 0.0, %v3268
      %v3270 = vpop.f32.mrb[0].mxu0
      %v3271 = vpop.f32.mrb[0].mxu0
      %v3272 = vadd.f32 0.0, %v3271
      %v3273 = vpop.f32.mrb[0].mxu0
      %3274 = vdwg.mxu0
      %v3275 = vpack.c.bf16 %v3272, %v3269
      %s3276 = scalar_lea.vmem %s5, 320
      %v3277 = vld [vmem:[%s3276] sm:$0xf]
      %v3278 = vld [vmem:[%s3276 + $0x4] sm:$0xf]
      %v3279 = vld [vmem:[%s3276 + $0x8] sm:$0xf]
      %v3280 = vld [vmem:[%s3276 + $0xc] sm:$0xf]
      %v3281 = vld [vmem:[%s3276 + $0x10] sm:$0xf]
      %v3282 = vld [vmem:[%s3276 + $0x14] sm:$0xf]
      %v3283 = vld [vmem:[%s3276 + $0x18] sm:$0xf]
      %v3284 = vld [vmem:[%s3276 + $0x1c] sm:$0xf]
      %v3285 = vld [vmem:[%s3276 + $0x20] sm:$0xf]
      %v3286 = vld [vmem:[%s3276 + $0x24] sm:$0xf]
      %v3287 = vld [vmem:[%s3276 + $0x28] sm:$0xf]
      %v3288 = vld [vmem:[%s3276 + $0x2c] sm:$0xf]
      %v3289 = vld [vmem:[%s3276 + $0x30] sm:$0xf]
      %v3290 = vld [vmem:[%s3276 + $0x34] sm:$0xf]
      %v3291 = vld [vmem:[%s3276 + $0x38] sm:$0xf]
      %v3292 = vld [vmem:[%s3276 + $0x3c] sm:$0xf]
      %v3309 = vunpack.c.l.b16 %v3277
      %v3310 = vunpack.c.l.b16 %v3278
      %v3311 = vunpack.c.l.b16 %v3279
      %v3312 = vunpack.c.l.b16 %v3280
      %v3313 = vunpack.c.l.b16 %v3281
      %v3314 = vunpack.c.l.b16 %v3282
      %v3315 = vunpack.c.l.b16 %v3283
      %v3316 = vunpack.c.l.b16 %v3284
      %v3317 = vunpack.c.l.b16 %v3285
      %v3318 = vunpack.c.l.b16 %v3286
      %v3319 = vunpack.c.l.b16 %v3287
      %v3320 = vunpack.c.l.b16 %v3288
      %v3321 = vunpack.c.l.b16 %v3289
      %v3322 = vunpack.c.l.b16 %v3290
      %v3323 = vunpack.c.l.b16 %v3291
      %v3324 = vunpack.c.l.b16 %v3292
      %v3325 = vpack.c.b16 %v3310, %v3309
      %v3326 = vpack.c.b16 %v3312, %v3311
      %v3327 = vpack.c.b16 %v3314, %v3313
      %v3328 = vpack.c.b16 %v3316, %v3315
      %v3329 = vpack.c.b16 %v3318, %v3317
      %v3330 = vpack.c.b16 %v3320, %v3319
      %v3331 = vpack.c.b16 %v3322, %v3321
      %v3332 = vpack.c.b16 %v3324, %v3323
      %3341 = vmatprep.subr.bf16.mxu0 0
      %3342 = vmatpush1.bf16.msra.mxu0 %v3325
      %3343 = vmatprep.subr.bf16.mxu0 0
      %3344 = vmatpush1.bf16.msra.mxu0 %v3326
      %3345 = vmatprep.subr.bf16.mxu0 0
      %3346 = vmatpush1.bf16.msra.mxu0 %v3327
      %3347 = vmatprep.subr.bf16.mxu0 0
      %3348 = vmatpush1.bf16.msra.mxu0 %v3328
      %3349 = vmatprep.subr.bf16.mxu0 0
      %3350 = vmatpush1.bf16.msra.mxu0 %v3329
      %3351 = vmatprep.subr.bf16.mxu0 0
      %3352 = vmatpush1.bf16.msra.mxu0 %v3330
      %3353 = vmatprep.subr.bf16.mxu0 0
      %3354 = vmatpush1.bf16.msra.mxu0 %v3331
      %3355 = vmatprep.subr.bf16.mxu0 0
      %3356 = vmatpush1.bf16.msra.mxu0 %v3332
      %3357 = vmatprep.subr.bf16.mxu0 0
      %3358 = vmatpush1.bf16.msra.mxu0 0
      %3359 = vmatprep.subr.bf16.mxu0 0
      %3360 = vmatpush1.bf16.msra.mxu0 0
      %3361 = vmatprep.subr.bf16.mxu0 0
      %3362 = vmatpush1.bf16.msra.mxu0 0
      %3363 = vmatprep.subr.bf16.mxu0 0
      %3364 = vmatpush1.bf16.msra.mxu0 0
      %3365 = vmatprep.subr.bf16.mxu0 0
      %3366 = vmatpush1.bf16.msra.mxu0 0
      %3367 = vmatprep.subr.bf16.mxu0 0
      %3368 = vmatpush1.bf16.msra.mxu0 0
      %3369 = vmatprep.subr.bf16.mxu0 0
      %3370 = vmatpush1.bf16.msra.mxu0 0
      %3371 = vmatprep.subr.bf16.mxu0 0
      %3372 = vmatpush1.bf16.msra.mxu0 0
      %3373 = vmatprep.mubr.bf16.mxu0 0
      %3374 = vmatmul.mubr.bf16.gmra.mrb[0].mxu0 %v3275
      %v3375 = vpop.f32.mrb[0].mxu0
      %v3376 = vadd.f32 0.0, %v3375
      %v3377 = vpop.f32.mrb[0].mxu0
      %v3378 = vpop.f32.mrb[0].mxu0
      %v3379 = vadd.f32 0.0, %v3378
      %v3380 = vpop.f32.mrb[0].mxu0
      %3381 = vdwg.mxu0
      %v3382 = vadd.f32 %v3221, %v3376
      %v3383 = vadd.f32 %v3222, %v3379
      %s3384 = scalar_lea.vmem %s4, 48
      %v3385 = vld [vmem:[%s3384] sm:$0xf]
      %v3386 = vld [vmem:[%s3384 + $0x4] sm:$0xf]
      %v3389 = vunpack.c.l.b16 %v3385
      %v3390 = vunpack.c.l.b16 %v3386
      %v3391 = vpack.c.b16 %v3390, %v3389
      %v3393 = vsel %vm2430, %v3391, 0
      %3395 = vmatprep.subr.bf16.mxu0 0
      %3396 = vmatpush1.bf16.msra.mxu0 %v2419
      %3397 = vmatprep.subr.bf16.mxu0 0
      %3398 = vmatpush1.bf16.msra.mxu0 %v2420
      %3399 = vmatprep.subr.bf16.mxu0 0
      %3400 = vmatpush1.bf16.msra.mxu0 %v2421
      %3401 = vmatprep.subr.bf16.mxu0 0
      %3402 = vmatpush1.bf16.msra.mxu0 %v2422
      %3403 = vmatprep.subr.bf16.mxu0 0
      %3404 = vmatpush1.bf16.msra.mxu0 0
      %3405 = vmatprep.subr.bf16.mxu0 0
      %3406 = vmatpush1.bf16.msra.mxu0 0
      %3407 = vmatprep.subr.bf16.mxu0 0
      %3408 = vmatpush1.bf16.msra.mxu0 0
      %3409 = vmatprep.subr.bf16.mxu0 0
      %3410 = vmatpush1.bf16.msra.mxu0 0
      %3411 = vmatprep.subr.bf16.mxu0 0
      %3412 = vmatpush1.bf16.msra.mxu0 0
      %3413 = vmatprep.subr.bf16.mxu0 0
      %3414 = vmatpush1.bf16.msra.mxu0 0
      %3415 = vmatprep.subr.bf16.mxu0 0
      %3416 = vmatpush1.bf16.msra.mxu0 0
      %3417 = vmatprep.subr.bf16.mxu0 0
      %3418 = vmatpush1.bf16.msra.mxu0 0
      %3419 = vmatprep.subr.bf16.mxu0 0
      %3420 = vmatpush1.bf16.msra.mxu0 0
      %3421 = vmatprep.subr.bf16.mxu0 0
      %3422 = vmatpush1.bf16.msra.mxu0 0
      %3423 = vmatprep.subr.bf16.mxu0 0
      %3424 = vmatpush1.bf16.msra.mxu0 0
      %3425 = vmatprep.subr.bf16.mxu0 0
      %3426 = vmatpush1.bf16.msra.mxu0 0
      %3427 = vmatprep.mubr.bf16.mxu0 0
      %3428 = vmatmul.mubr.bf16.gmra.mrb[0].mxu0 %v3393
      %v3429 = vpop.f32.mrb[0].mxu0
      %v3430 = vadd.f32 0.0, %v3429
      %v3431 = vpop.f32.mrb[0].mxu0
      %v3432 = vpop.f32.mrb[0].mxu0
      %v3433 = vadd.f32 0.0, %v3432
      %v3434 = vpop.f32.mrb[0].mxu0
      %3435 = vdwg.mxu0
      %v3436 = vpack.c.bf16 %v3433, %v3430
      %s3437 = scalar_lea.vmem %s5, 384
      %v3438 = vld [vmem:[%s3437] sm:$0xf]
      %v3439 = vld [vmem:[%s3437 + $0x4] sm:$0xf]
      %v3440 = vld [vmem:[%s3437 + $0x8] sm:$0xf]
      %v3441 = vld [vmem:[%s3437 + $0xc] sm:$0xf]
      %v3442 = vld [vmem:[%s3437 + $0x10] sm:$0xf]
      %v3443 = vld [vmem:[%s3437 + $0x14] sm:$0xf]
      %v3444 = vld [vmem:[%s3437 + $0x18] sm:$0xf]
      %v3445 = vld [vmem:[%s3437 + $0x1c] sm:$0xf]
      %v3446 = vld [vmem:[%s3437 + $0x20] sm:$0xf]
      %v3447 = vld [vmem:[%s3437 + $0x24] sm:$0xf]
      %v3448 = vld [vmem:[%s3437 + $0x28] sm:$0xf]
      %v3449 = vld [vmem:[%s3437 + $0x2c] sm:$0xf]
      %v3450 = vld [vmem:[%s3437 + $0x30] sm:$0xf]
      %v3451 = vld [vmem:[%s3437 + $0x34] sm:$0xf]
      %v3452 = vld [vmem:[%s3437 + $0x38] sm:$0xf]
      %v3453 = vld [vmem:[%s3437 + $0x3c] sm:$0xf]
      %v3470 = vunpack.c.l.b16 %v3438
      %v3471 = vunpack.c.l.b16 %v3439
      %v3472 = vunpack.c.l.b16 %v3440
      %v3473 = vunpack.c.l.b16 %v3441
      %v3474 = vunpack.c.l.b16 %v3442
      %v3475 = vunpack.c.l.b16 %v3443
      %v3476 = vunpack.c.l.b16 %v3444
      %v3477 = vunpack.c.l.b16 %v3445
      %v3478 = vunpack.c.l.b16 %v3446
      %v3479 = vunpack.c.l.b16 %v3447
      %v3480 = vunpack.c.l.b16 %v3448
      %v3481 = vunpack.c.l.b16 %v3449
      %v3482 = vunpack.c.l.b16 %v3450
      %v3483 = vunpack.c.l.b16 %v3451
      %v3484 = vunpack.c.l.b16 %v3452
      %v3485 = vunpack.c.l.b16 %v3453
      %v3486 = vpack.c.b16 %v3471, %v3470
      %v3487 = vpack.c.b16 %v3473, %v3472
      %v3488 = vpack.c.b16 %v3475, %v3474
      %v3489 = vpack.c.b16 %v3477, %v3476
      %v3490 = vpack.c.b16 %v3479, %v3478
      %v3491 = vpack.c.b16 %v3481, %v3480
      %v3492 = vpack.c.b16 %v3483, %v3482
      %v3493 = vpack.c.b16 %v3485, %v3484
      %3502 = vmatprep.subr.bf16.mxu0 0
      %3503 = vmatpush1.bf16.msra.mxu0 %v3486
      %3504 = vmatprep.subr.bf16.mxu0 0
      %3505 = vmatpush1.bf16.msra.mxu0 %v3487
      %3506 = vmatprep.subr.bf16.mxu0 0
      %3507 = vmatpush1.bf16.msra.mxu0 %v3488
      %3508 = vmatprep.subr.bf16.mxu0 0
      %3509 = vmatpush1.bf16.msra.mxu0 %v3489
      %3510 = vmatprep.subr.bf16.mxu0 0
      %3511 = vmatpush1.bf16.msra.mxu0 %v3490
      %3512 = vmatprep.subr.bf16.mxu0 0
      %3513 = vmatpush1.bf16.msra.mxu0 %v3491
      %3514 = vmatprep.subr.bf16.mxu0 0
      %3515 = vmatpush1.bf16.msra.mxu0 %v3492
      %3516 = vmatprep.subr.bf16.mxu0 0
      %3517 = vmatpush1.bf16.msra.mxu0 %v3493
      %3518 = vmatprep.subr.bf16.mxu0 0
      %3519 = vmatpush1.bf16.msra.mxu0 0
      %3520 = vmatprep.subr.bf16.mxu0 0
      %3521 = vmatpush1.bf16.msra.mxu0 0
      %3522 = vmatprep.subr.bf16.mxu0 0
      %3523 = vmatpush1.bf16.msra.mxu0 0
      %3524 = vmatprep.subr.bf16.mxu0 0
      %3525 = vmatpush1.bf16.msra.mxu0 0
      %3526 = vmatprep.subr.bf16.mxu0 0
      %3527 = vmatpush1.bf16.msra.mxu0 0
      %3528 = vmatprep.subr.bf16.mxu0 0
      %3529 = vmatpush1.bf16.msra.mxu0 0
      %3530 = vmatprep.subr.bf16.mxu0 0
      %3531 = vmatpush1.bf16.msra.mxu0 0
      %3532 = vmatprep.subr.bf16.mxu0 0
      %3533 = vmatpush1.bf16.msra.mxu0 0
      %3534 = vmatprep.mubr.bf16.mxu0 0
      %3535 = vmatmul.mubr.bf16.gmra.mrb[0].mxu0 %v3436
      %v3536 = vpop.f32.mrb[0].mxu0
      %v3537 = vadd.f32 0.0, %v3536
      %v3538 = vpop.f32.mrb[0].mxu0
      %v3539 = vpop.f32.mrb[0].mxu0
      %v3540 = vadd.f32 0.0, %v3539
      %v3541 = vpop.f32.mrb[0].mxu0
      %3542 = vdwg.mxu0
      %v3543 = vadd.f32 %v3382, %v3537
      %v3544 = vadd.f32 %v3383, %v3540
      %s3545 = scalar_lea.vmem %s4, 56
      %v3546 = vld [vmem:[%s3545] sm:$0xf]
      %v3547 = vld [vmem:[%s3545 + $0x4] sm:$0xf]
      %v3550 = vunpack.c.l.b16 %v3546
      %v3551 = vunpack.c.l.b16 %v3547
      %v3552 = vpack.c.b16 %v3551, %v3550
      %v3554 = vsel %vm2430, %v3552, 0
      %3556 = vmatprep.subr.bf16.mxu0 0
      %3557 = vmatpush1.bf16.msra.mxu0 %v2419
      %3558 = vmatprep.subr.bf16.mxu0 0
      %3559 = vmatpush1.bf16.msra.mxu0 %v2420
      %3560 = vmatprep.subr.bf16.mxu0 0
      %3561 = vmatpush1.bf16.msra.mxu0 %v2421
      %3562 = vmatprep.subr.bf16.mxu0 0
      %3563 = vmatpush1.bf16.msra.mxu0 %v2422
      %3564 = vmatprep.subr.bf16.mxu0 0
      %3565 = vmatpush1.bf16.msra.mxu0 0
      %3566 = vmatprep.subr.bf16.mxu0 0
      %3567 = vmatpush1.bf16.msra.mxu0 0
      %3568 = vmatprep.subr.bf16.mxu0 0
      %3569 = vmatpush1.bf16.msra.mxu0 0
      %3570 = vmatprep.subr.bf16.mxu0 0
      %3571 = vmatpush1.bf16.msra.mxu0 0
      %3572 = vmatprep.subr.bf16.mxu0 0
      %3573 = vmatpush1.bf16.msra.mxu0 0
      %3574 = vmatprep.subr.bf16.mxu0 0
      %3575 = vmatpush1.bf16.msra.mxu0 0
      %3576 = vmatprep.subr.bf16.mxu0 0
      %3577 = vmatpush1.bf16.msra.mxu0 0
      %3578 = vmatprep.subr.bf16.mxu0 0
      %3579 = vmatpush1.bf16.msra.mxu0 0
      %3580 = vmatprep.subr.bf16.mxu0 0
      %3581 = vmatpush1.bf16.msra.mxu0 0
      %3582 = vmatprep.subr.bf16.mxu0 0
      %3583 = vmatpush1.bf16.msra.mxu0 0
      %3584 = vmatprep.subr.bf16.mxu0 0
      %3585 = vmatpush1.bf16.msra.mxu0 0
      %3586 = vmatprep.subr.bf16.mxu0 0
      %3587 = vmatpush1.bf16.msra.mxu0 0
      %3588 = vmatprep.mubr.bf16.mxu0 0
      %3589 = vmatmul.mubr.bf16.gmra.mrb[0].mxu0 %v3554
      %v3590 = vpop.f32.mrb[0].mxu0
      %v3591 = vadd.f32 0.0, %v3590
      %v3592 = vpop.f32.mrb[0].mxu0
      %v3593 = vpop.f32.mrb[0].mxu0
      %v3594 = vadd.f32 0.0, %v3593
      %v3595 = vpop.f32.mrb[0].mxu0
      %3596 = vdwg.mxu0
      %v3597 = vpack.c.bf16 %v3594, %v3591
      %s3598 = scalar_lea.vmem %s5, 448
      %v3599 = vld [vmem:[%s3598] sm:$0xf]
      %v3600 = vld [vmem:[%s3598 + $0x4] sm:$0xf]
      %v3601 = vld [vmem:[%s3598 + $0x8] sm:$0xf]
      %v3602 = vld [vmem:[%s3598 + $0xc] sm:$0xf]
      %v3603 = vld [vmem:[%s3598 + $0x10] sm:$0xf]
      %v3604 = vld [vmem:[%s3598 + $0x14] sm:$0xf]
      %v3605 = vld [vmem:[%s3598 + $0x18] sm:$0xf]
      %v3606 = vld [vmem:[%s3598 + $0x1c] sm:$0xf]
      %v3607 = vld [vmem:[%s3598 + $0x20] sm:$0xf]
      %v3608 = vld [vmem:[%s3598 + $0x24] sm:$0xf]
      %v3609 = vld [vmem:[%s3598 + $0x28] sm:$0xf]
      %v3610 = vld [vmem:[%s3598 + $0x2c] sm:$0xf]
      %v3611 = vld [vmem:[%s3598 + $0x30] sm:$0xf]
      %v3612 = vld [vmem:[%s3598 + $0x34] sm:$0xf]
      %v3613 = vld [vmem:[%s3598 + $0x38] sm:$0xf]
      %v3614 = vld [vmem:[%s3598 + $0x3c] sm:$0xf]
      %v3631 = vunpack.c.l.b16 %v3599
      %v3632 = vunpack.c.l.b16 %v3600
      %v3633 = vunpack.c.l.b16 %v3601
      %v3634 = vunpack.c.l.b16 %v3602
      %v3635 = vunpack.c.l.b16 %v3603
      %v3636 = vunpack.c.l.b16 %v3604
      %v3637 = vunpack.c.l.b16 %v3605
      %v3638 = vunpack.c.l.b16 %v3606
      %v3639 = vunpack.c.l.b16 %v3607
      %v3640 = vunpack.c.l.b16 %v3608
      %v3641 = vunpack.c.l.b16 %v3609
      %v3642 = vunpack.c.l.b16 %v3610
      %v3643 = vunpack.c.l.b16 %v3611
      %v3644 = vunpack.c.l.b16 %v3612
      %v3645 = vunpack.c.l.b16 %v3613
      %v3646 = vunpack.c.l.b16 %v3614
      %v3647 = vpack.c.b16 %v3632, %v3631
      %v3648 = vpack.c.b16 %v3634, %v3633
      %v3649 = vpack.c.b16 %v3636, %v3635
      %v3650 = vpack.c.b16 %v3638, %v3637
      %v3651 = vpack.c.b16 %v3640, %v3639
      %v3652 = vpack.c.b16 %v3642, %v3641
      %v3653 = vpack.c.b16 %v3644, %v3643
      %v3654 = vpack.c.b16 %v3646, %v3645
      %3663 = vmatprep.subr.bf16.mxu0 0
      %3664 = vmatpush1.bf16.msra.mxu0 %v3647
      %3665 = vmatprep.subr.bf16.mxu0 0
      %3666 = vmatpush1.bf16.msra.mxu0 %v3648
      %3667 = vmatprep.subr.bf16.mxu0 0
      %3668 = vmatpush1.bf16.msra.mxu0 %v3649
      %3669 = vmatprep.subr.bf16.mxu0 0
      %3670 = vmatpush1.bf16.msra.mxu0 %v3650
      %3671 = vmatprep.subr.bf16.mxu0 0
      %3672 = vmatpush1.bf16.msra.mxu0 %v3651
      %3673 = vmatprep.subr.bf16.mxu0 0
      %3674 = vmatpush1.bf16.msra.mxu0 %v3652
      %3675 = vmatprep.subr.bf16.mxu0 0
      %3676 = vmatpush1.bf16.msra.mxu0 %v3653
      %3677 = vmatprep.subr.bf16.mxu0 0
      %3678 = vmatpush1.bf16.msra.mxu0 %v3654
      %3679 = vmatprep.subr.bf16.mxu0 0
      %3680 = vmatpush1.bf16.msra.mxu0 0
      %3681 = vmatprep.subr.bf16.mxu0 0
      %3682 = vmatpush1.bf16.msra.mxu0 0
      %3683 = vmatprep.subr.bf16.mxu0 0
      %3684 = vmatpush1.bf16.msra.mxu0 0
      %3685 = vmatprep.subr.bf16.mxu0 0
      %3686 = vmatpush1.bf16.msra.mxu0 0
      %3687 = vmatprep.subr.bf16.mxu0 0
      %3688 = vmatpush1.bf16.msra.mxu0 0
      %3689 = vmatprep.subr.bf16.mxu0 0
      %3690 = vmatpush1.bf16.msra.mxu0 0
      %3691 = vmatprep.subr.bf16.mxu0 0
      %3692 = vmatpush1.bf16.msra.mxu0 0
      %3693 = vmatprep.subr.bf16.mxu0 0
      %3694 = vmatpush1.bf16.msra.mxu0 0
      %3695 = vmatprep.mubr.bf16.mxu0 0
      %3696 = vmatmul.mubr.bf16.gmra.mrb[0].mxu0 %v3597
      %v3697 = vpop.f32.mrb[0].mxu0
      %v3698 = vadd.f32 0.0, %v3697
      %v3699 = vpop.f32.mrb[0].mxu0
      %v3700 = vpop.f32.mrb[0].mxu0
      %v3701 = vadd.f32 0.0, %v3700
      %v3702 = vpop.f32.mrb[0].mxu0
      %3703 = vdwg.mxu0
      %v3704 = vadd.f32 %v3543, %v3698
      %v3705 = vadd.f32 %v3544, %v3701
      %s3706 = scalar_lea.vmem %s4, 64
      %v3707 = vld [vmem:[%s3706] sm:$0xf]
      %v3708 = vld [vmem:[%s3706 + $0x4] sm:$0xf]
      %v3711 = vunpack.c.l.b16 %v3707
      %v3712 = vunpack.c.l.b16 %v3708
      %v3713 = vpack.c.b16 %v3712, %v3711
      %v3715 = vsel %vm2430, %v3713, 0
      %3717 = vmatprep.subr.bf16.mxu0 0
      %3718 = vmatpush1.bf16.msra.mxu0 %v2419
      %3719 = vmatprep.subr.bf16.mxu0 0
      %3720 = vmatpush1.bf16.msra.mxu0 %v2420
      %3721 = vmatprep.subr.bf16.mxu0 0
      %3722 = vmatpush1.bf16.msra.mxu0 %v2421
      %3723 = vmatprep.subr.bf16.mxu0 0
      %3724 = vmatpush1.bf16.msra.mxu0 %v2422
      %3725 = vmatprep.subr.bf16.mxu0 0
      %3726 = vmatpush1.bf16.msra.mxu0 0
      %3727 = vmatprep.subr.bf16.mxu0 0
      %3728 = vmatpush1.bf16.msra.mxu0 0
      %3729 = vmatprep.subr.bf16.mxu0 0
      %3730 = vmatpush1.bf16.msra.mxu0 0
      %3731 = vmatprep.subr.bf16.mxu0 0
      %3732 = vmatpush1.bf16.msra.mxu0 0
      %3733 = vmatprep.subr.bf16.mxu0 0
      %3734 = vmatpush1.bf16.msra.mxu0 0
      %3735 = vmatprep.subr.bf16.mxu0 0
      %3736 = vmatpush1.bf16.msra.mxu0 0
      %3737 = vmatprep.subr.bf16.mxu0 0
      %3738 = vmatpush1.bf16.msra.mxu0 0
      %3739 = vmatprep.subr.bf16.mxu0 0
      %3740 = vmatpush1.bf16.msra.mxu0 0
      %3741 = vmatprep.subr.bf16.mxu0 0
      %3742 = vmatpush1.bf16.msra.mxu0 0
      %3743 = vmatprep.subr.bf16.mxu0 0
      %3744 = vmatpush1.bf16.msra.mxu0 0
      %3745 = vmatprep.subr.bf16.mxu0 0
      %3746 = vmatpush1.bf16.msra.mxu0 0
      %3747 = vmatprep.subr.bf16.mxu0 0
      %3748 = vmatpush1.bf16.msra.mxu0 0
      %3749 = vmatprep.mubr.bf16.mxu0 0
      %3750 = vmatmul.mubr.bf16.gmra.mrb[0].mxu0 %v3715
      %v3751 = vpop.f32.mrb[0].mxu0
      %v3752 = vadd.f32 0.0, %v3751
      %v3753 = vpop.f32.mrb[0].mxu0
      %v3754 = vpop.f32.mrb[0].mxu0
      %v3755 = vadd.f32 0.0, %v3754
      %v3756 = vpop.f32.mrb[0].mxu0
      %3757 = vdwg.mxu0
      %v3758 = vpack.c.bf16 %v3755, %v3752
      %s3759 = scalar_lea.vmem %s5, 512
      %v3760 = vld [vmem:[%s3759] sm:$0xf]
      %v3761 = vld [vmem:[%s3759 + $0x4] sm:$0xf]
      %v3762 = vld [vmem:[%s3759 + $0x8] sm:$0xf]
      %v3763 = vld [vmem:[%s3759 + $0xc] sm:$0xf]
      %v3764 = vld [vmem:[%s3759 + $0x10] sm:$0xf]
      %v3765 = vld [vmem:[%s3759 + $0x14] sm:$0xf]
      %v3766 = vld [vmem:[%s3759 + $0x18] sm:$0xf]
      %v3767 = vld [vmem:[%s3759 + $0x1c] sm:$0xf]
      %v3768 = vld [vmem:[%s3759 + $0x20] sm:$0xf]
      %v3769 = vld [vmem:[%s3759 + $0x24] sm:$0xf]
      %v3770 = vld [vmem:[%s3759 + $0x28] sm:$0xf]
      %v3771 = vld [vmem:[%s3759 + $0x2c] sm:$0xf]
      %v3772 = vld [vmem:[%s3759 + $0x30] sm:$0xf]
      %v3773 = vld [vmem:[%s3759 + $0x34] sm:$0xf]
      %v3774 = vld [vmem:[%s3759 + $0x38] sm:$0xf]
      %v3775 = vld [vmem:[%s3759 + $0x3c] sm:$0xf]
      %v3792 = vunpack.c.l.b16 %v3760
      %v3793 = vunpack.c.l.b16 %v3761
      %v3794 = vunpack.c.l.b16 %v3762
      %v3795 = vunpack.c.l.b16 %v3763
      %v3796 = vunpack.c.l.b16 %v3764
      %v3797 = vunpack.c.l.b16 %v3765
      %v3798 = vunpack.c.l.b16 %v3766
      %v3799 = vunpack.c.l.b16 %v3767
      %v3800 = vunpack.c.l.b16 %v3768
      %v3801 = vunpack.c.l.b16 %v3769
      %v3802 = vunpack.c.l.b16 %v3770
      %v3803 = vunpack.c.l.b16 %v3771
      %v3804 = vunpack.c.l.b16 %v3772
      %v3805 = vunpack.c.l.b16 %v3773
      %v3806 = vunpack.c.l.b16 %v3774
      %v3807 = vunpack.c.l.b16 %v3775
      %v3808 = vpack.c.b16 %v3793, %v3792
      %v3809 = vpack.c.b16 %v3795, %v3794
      %v3810 = vpack.c.b16 %v3797, %v3796
      %v3811 = vpack.c.b16 %v3799, %v3798
      %v3812 = vpack.c.b16 %v3801, %v3800
      %v3813 = vpack.c.b16 %v3803, %v3802
      %v3814 = vpack.c.b16 %v3805, %v3804
      %v3815 = vpack.c.b16 %v3807, %v3806
      %3824 = vmatprep.subr.bf16.mxu0 0
      %3825 = vmatpush1.bf16.msra.mxu0 %v3808
      %3826 = vmatprep.subr.bf16.mxu0 0
      %3827 = vmatpush1.bf16.msra.mxu0 %v3809
      %3828 = vmatprep.subr.bf16.mxu0 0
      %3829 = vmatpush1.bf16.msra.mxu0 %v3810
      %3830 = vmatprep.subr.bf16.mxu0 0
      %3831 = vmatpush1.bf16.msra.mxu0 %v3811
      %3832 = vmatprep.subr.bf16.mxu0 0
      %3833 = vmatpush1.bf16.msra.mxu0 %v3812
      %3834 = vmatprep.subr.bf16.mxu0 0
      %3835 = vmatpush1.bf16.msra.mxu0 %v3813
      %3836 = vmatprep.subr.bf16.mxu0 0
      %3837 = vmatpush1.bf16.msra.mxu0 %v3814
      %3838 = vmatprep.subr.bf16.mxu0 0
      %3839 = vmatpush1.bf16.msra.mxu0 %v3815
      %3840 = vmatprep.subr.bf16.mxu0 0
      %3841 = vmatpush1.bf16.msra.mxu0 0
      %3842 = vmatprep.subr.bf16.mxu0 0
      %3843 = vmatpush1.bf16.msra.mxu0 0
      %3844 = vmatprep.subr.bf16.mxu0 0
      %3845 = vmatpush1.bf16.msra.mxu0 0
      %3846 = vmatprep.subr.bf16.mxu0 0
      %3847 = vmatpush1.bf16.msra.mxu0 0
      %3848 = vmatprep.subr.bf16.mxu0 0
      %3849 = vmatpush1.bf16.msra.mxu0 0
      %3850 = vmatprep.subr.bf16.mxu0 0
      %3851 = vmatpush1.bf16.msra.mxu0 0
      %3852 = vmatprep.subr.bf16.mxu0 0
      %3853 = vmatpush1.bf16.msra.mxu0 0
      %3854 = vmatprep.subr.bf16.mxu0 0
      %3855 = vmatpush1.bf16.msra.mxu0 0
      %3856 = vmatprep.mubr.bf16.mxu0 0
      %3857 = vmatmul.mubr.bf16.gmra.mrb[0].mxu0 %v3758
      %v3858 = vpop.f32.mrb[0].mxu0
      %v3859 = vadd.f32 0.0, %v3858
      %v3860 = vpop.f32.mrb[0].mxu0
      %v3861 = vpop.f32.mrb[0].mxu0
      %v3862 = vadd.f32 0.0, %v3861
      %v3863 = vpop.f32.mrb[0].mxu0
      %3864 = vdwg.mxu0
      %v3865 = vadd.f32 %v3704, %v3859
      %v3866 = vadd.f32 %v3705, %v3862
      %v3867 = vld [vmem:[%s6] sm:$0x1]
      %v3869 = vlaneseq
      %v3870 = vshrl.u32 %v3869, 7
      %v3871 = vsub.s32 0, %v3870
      %v3872 = vrot.slane %v3867, %v3871
      %v3874 = vadd.f32 %v3865, %v3872
      %v3875 = vadd.f32 %v3866, %v3872
      %v3876 = vpack.c.bf16 %v3875, %v3874
      %v3877 = vld [vmem:[%s7] sm:$0xf]
      %v3878 = vld [vmem:[%s7 + $0x4] sm:$0xf]
      %v3879 = vld [vmem:[%s7 + $0x8] sm:$0xf]
      %v3880 = vld [vmem:[%s7 + $0xc] sm:$0xf]
      %v3881 = vld [vmem:[%s7 + $0x10] sm:$0xf]
      %v3882 = vld [vmem:[%s7 + $0x14] sm:$0xf]
      %v3883 = vld [vmem:[%s7 + $0x18] sm:$0xf]
      %v3884 = vld [vmem:[%s7 + $0x1c] sm:$0xf]
      %v3885 = vld [vmem:[%s7 + $0x20] sm:$0xf]
      %v3886 = vld [vmem:[%s7 + $0x24] sm:$0xf]
      %v3887 = vld [vmem:[%s7 + $0x28] sm:$0xf]
      %v3888 = vld [vmem:[%s7 + $0x2c] sm:$0xf]
      %v3889 = vld [vmem:[%s7 + $0x30] sm:$0xf]
      %v3890 = vld [vmem:[%s7 + $0x34] sm:$0xf]
      %v3891 = vld [vmem:[%s7 + $0x38] sm:$0xf]
      %v3892 = vld [vmem:[%s7 + $0x3c] sm:$0xf]
      %v3909 = vunpack.c.l.b16 %v3877
      %v3910 = vunpack.c.l.b16 %v3878
      %v3911 = vunpack.c.l.b16 %v3879
      %v3912 = vunpack.c.l.b16 %v3880
      %v3913 = vunpack.c.l.b16 %v3881
      %v3914 = vunpack.c.l.b16 %v3882
      %v3915 = vunpack.c.l.b16 %v3883
      %v3916 = vunpack.c.l.b16 %v3884
      %v3917 = vunpack.c.l.b16 %v3885
      %v3918 = vunpack.c.l.b16 %v3886
      %v3919 = vunpack.c.l.b16 %v3887
      %v3920 = vunpack.c.l.b16 %v3888
      %v3921 = vunpack.c.l.b16 %v3889
      %v3922 = vunpack.c.l.b16 %v3890
      %v3923 = vunpack.c.l.b16 %v3891
      %v3924 = vunpack.c.l.b16 %v3892
      %v3925 = vpack.c.b16 %v3910, %v3909
      %v3926 = vpack.c.b16 %v3912, %v3911
      %v3927 = vpack.c.b16 %v3914, %v3913
      %v3928 = vpack.c.b16 %v3916, %v3915
      %v3929 = vpack.c.b16 %v3918, %v3917
      %v3930 = vpack.c.b16 %v3920, %v3919
      %v3931 = vpack.c.b16 %v3922, %v3921
      %v3932 = vpack.c.b16 %v3924, %v3923
      %3941 = vmatprep.subr.bf16.mxu0 0
      %3942 = vmatpush1.bf16.msra.mxu0 %v3925
      %3943 = vmatprep.subr.bf16.mxu0 0
      %3944 = vmatpush1.bf16.msra.mxu0 %v3926
      %3945 = vmatprep.subr.bf16.mxu0 0
      %3946 = vmatpush1.bf16.msra.mxu0 %v3927
      %3947 = vmatprep.subr.bf16.mxu0 0
      %3948 = vmatpush1.bf16.msra.mxu0 %v3928
      %3949 = vmatprep.subr.bf16.mxu0 0
      %3950 = vmatpush1.bf16.msra.mxu0 %v3929
      %3951 = vmatprep.subr.bf16.mxu0 0
      %3952 = vmatpush1.bf16.msra.mxu0 %v3930
      %3953 = vmatprep.subr.bf16.mxu0 0
      %3954 = vmatpush1.bf16.msra.mxu0 %v3931
      %3955 = vmatprep.subr.bf16.mxu0 0
      %3956 = vmatpush1.bf16.msra.mxu0 %v3932
      %3957 = vmatprep.subr.bf16.mxu0 0
      %3958 = vmatpush1.bf16.msra.mxu0 0
      %3959 = vmatprep.subr.bf16.mxu0 0
      %3960 = vmatpush1.bf16.msra.mxu0 0
      %3961 = vmatprep.subr.bf16.mxu0 0
      %3962 = vmatpush1.bf16.msra.mxu0 0
      %3963 = vmatprep.subr.bf16.mxu0 0
      %3964 = vmatpush1.bf16.msra.mxu0 0
      %3965 = vmatprep.subr.bf16.mxu0 0
      %3966 = vmatpush1.bf16.msra.mxu0 0
      %3967 = vmatprep.subr.bf16.mxu0 0
      %3968 = vmatpush1.bf16.msra.mxu0 0
      %3969 = vmatprep.subr.bf16.mxu0 0
      %3970 = vmatpush1.bf16.msra.mxu0 0
      %3971 = vmatprep.subr.bf16.mxu0 0
      %3972 = vmatpush1.bf16.msra.mxu0 0
      %3973 = vmatprep.mubr.bf16.mxu0 0
      %3974 = vmatmul.mubr.bf16.gmra.mrb[0].mxu0 %v3876
      %v3975 = vpop.f32.mrb[0].mxu0
      %v3976 = vadd.f32 0.0, %v3975
      %v3977 = vpop.f32.mrb[0].mxu0
      %v3978 = vpop.f32.mrb[0].mxu0
      %v3979 = vadd.f32 0.0, %v3978
      %v3980 = vpop.f32.mrb[0].mxu0
      %3981 = vdwg.mxu0
      %v3982 = vld [vmem:[%s9] sm:$0x1]
      %v3983 = vmul.f32 %v3976, 2.0
      %v3984 = vmul.f32 %v3979, 2.0
      %v3986 = vlaneseq
      %v3987 = vshrl.u32 %v3986, 7
      %v3988 = vsub.s32 0, %v3987
      %v3989 = vrot.slane %v3982, %v3988
      %v3991 = vsub.f32 %v3989, %v3983
      %v3992 = vsub.f32 %v3989, %v3984
      %3993 = vmin.xlane.f32.xlu0 %v3991
      %v3994 = vpop.xlane.xlu0 %3993
      %3995 = vmin.xlane.f32.xlu0 %v3992
      %v3996 = vpop.xlane.xlu0 %3995
      %v3997 = vlaneseq
      %v3998 = vand.u32 %v3997, 127
      %vm3999 = vcmp.le.f32.partialorder %v3991, %v3994
      %vm4000 = vcmp.le.f32.partialorder %v3992, %v3996
      %v4001 = vsel %vm3999, %v3998, 128
      %v4002 = vsel %vm4000, %v3998, 128
      %v4003 = vand.u32 %v4001, 65535
      %v4004 = vshra.s32 %v4001, 16
      %v4005 = vcvt.s32.f32 %v4003
      %v4006 = vcvt.s32.f32 %v4004
      %4007 = vmin.xlane.f32.xlu0 %v4006
      %v4008 = vpop.xlane.xlu0 %4007
      %vm4009 = vcmp.eq.f32.partialorder %v4006, %v4008
      %v4010 = vsel %vm4009, %v4005, inf
      %4011 = vmin.xlane.f32.xlu0 %v4010
      %v4012 = vpop.xlane.xlu0 %4011
      %v4013 = vcvt.f32.s32 %v4012
      %v4014 = vcvt.f32.s32 %v4008
      %v4015 = vshll.u32 %v4014, 16
      %v4016 = vadd.s32 %v4015, %v4013
      %v4017 = vand.u32 %v4002, 65535
      %v4018 = vshra.s32 %v4002, 16
      %v4019 = vcvt.s32.f32 %v4017
      %v4020 = vcvt.s32.f32 %v4018
      %4021 = vmin.xlane.f32.xlu0 %v4020
      %v4022 = vpop.xlane.xlu0 %4021
      %vm4023 = vcmp.eq.f32.partialorder %v4020, %v4022
      %v4024 = vsel %vm4023, %v4019, inf
      %4025 = vmin.xlane.f32.xlu0 %v4024
      %v4026 = vpop.xlane.xlu0 %4025
      %v4027 = vcvt.f32.s32 %v4026
      %v4028 = vcvt.f32.s32 %v4022
      %v4029 = vshll.u32 %v4028, 16
      %v4030 = vadd.s32 %v4029, %v4027
      %vm4031 = vcmp.eq.s32.totalorder %v3998, %v4016
      %vm4032 = vcmp.eq.s32.totalorder %v3998, %v4030
      %v4033 = vsel %vm4031, 1, 0
      %v4034 = vsel %vm4032, 1, 0
      %v4035 = vcvt.s32.f32 %v4033
      %v4036 = vcvt.s32.f32 %v4034
      %v4037 = vld [vmem:[%s8] sm:$0xff]
      %v4038 = vld [vmem:[%s8 + $0x8] sm:$0xff]
      %v4039 = vld [vmem:[%s8 + $0x10] sm:$0xff]
      %v4040 = vld [vmem:[%s8 + $0x18] sm:$0xff]
      %v4041 = vld [vmem:[%s8 + $0x20] sm:$0xff]
      %v4042 = vld [vmem:[%s8 + $0x28] sm:$0xff]
      %v4043 = vld [vmem:[%s8 + $0x30] sm:$0xff]
      %v4044 = vld [vmem:[%s8 + $0x38] sm:$0xff]
      %v4045 = vld [vmem:[%s8 + $0x40] sm:$0xff]
      %v4046 = vld [vmem:[%s8 + $0x48] sm:$0xff]
      %v4047 = vld [vmem:[%s8 + $0x50] sm:$0xff]
      %v4048 = vld [vmem:[%s8 + $0x58] sm:$0xff]
      %v4049 = vld [vmem:[%s8 + $0x60] sm:$0xff]
      %v4050 = vld [vmem:[%s8 + $0x68] sm:$0xff]
      %v4051 = vld [vmem:[%s8 + $0x70] sm:$0xff]
      %v4052 = vld [vmem:[%s8 + $0x78] sm:$0xff]
      %4053 = vmatprep.subr.mxu0 0.0
      %4054 = vmatpush1.msra.mxu0 %v4037
      %4055 = vmatprep.subr.mxu0 0.0
      %4056 = vmatpush1.msra.mxu0 %v4038
      %4057 = vmatprep.subr.mxu0 0.0
      %4058 = vmatpush1.msra.mxu0 %v4039
      %4059 = vmatprep.subr.mxu0 0.0
      %4060 = vmatpush1.msra.mxu0 %v4040
      %4061 = vmatprep.subr.mxu0 0.0
      %4062 = vmatpush1.msra.mxu0 %v4041
      %4063 = vmatprep.subr.mxu0 0.0
      %4064 = vmatpush1.msra.mxu0 %v4042
      %4065 = vmatprep.subr.mxu0 0.0
      %4066 = vmatpush1.msra.mxu0 %v4043
      %4067 = vmatprep.subr.mxu0 0.0
      %4068 = vmatpush1.msra.mxu0 %v4044
      %4069 = vmatprep.subr.mxu0 0.0
      %4070 = vmatpush1.msra.mxu0 %v4045
      %4071 = vmatprep.subr.mxu0 0.0
      %4072 = vmatpush1.msra.mxu0 %v4046
      %4073 = vmatprep.subr.mxu0 0.0
      %4074 = vmatpush1.msra.mxu0 %v4047
      %4075 = vmatprep.subr.mxu0 0.0
      %4076 = vmatpush1.msra.mxu0 %v4048
      %4077 = vmatprep.subr.mxu0 0.0
      %4078 = vmatpush1.msra.mxu0 %v4049
      %4079 = vmatprep.subr.mxu0 0.0
      %4080 = vmatpush1.msra.mxu0 %v4050
      %4081 = vmatprep.subr.mxu0 0.0
      %4082 = vmatpush1.msra.mxu0 %v4051
      %4083 = vmatprep.subr.mxu0 0.0
      %4084 = vmatpush1.msra.mxu0 %v4052
      %4085 = vmatprep.subr.mxu0 0.0
      %4086 = vmatpush1.msra.mxu0 0.0
      %4087 = vmatprep.subr.mxu0 0.0
      %4088 = vmatpush1.msra.mxu0 0.0
      %4089 = vmatprep.subr.mxu0 0.0
      %4090 = vmatpush1.msra.mxu0 0.0
      %4091 = vmatprep.subr.mxu0 0.0
      %4092 = vmatpush1.msra.mxu0 0.0
      %4093 = vmatprep.subr.mxu0 0.0
      %4094 = vmatpush1.msra.mxu0 0.0
      %4095 = vmatprep.subr.mxu0 0.0
      %4096 = vmatpush1.msra.mxu0 0.0
      %4097 = vmatprep.subr.mxu0 0.0
      %4098 = vmatpush1.msra.mxu0 0.0
      %4099 = vmatprep.subr.mxu0 0.0
      %4100 = vmatpush1.msra.mxu0 0.0
      %4101 = vmatprep.subr.mxu0 0.0
      %4102 = vmatpush1.msra.mxu0 0.0
      %4103 = vmatprep.subr.mxu0 0.0
      %4104 = vmatpush1.msra.mxu0 0.0
      %4105 = vmatprep.subr.mxu0 0.0
      %4106 = vmatpush1.msra.mxu0 0.0
      %4107 = vmatprep.subr.mxu0 0.0
      %4108 = vmatpush1.msra.mxu0 0.0
      %4109 = vmatprep.subr.mxu0 0.0
      %4110 = vmatpush1.msra.mxu0 0.0
      %4111 = vmatprep.subr.mxu0 0.0
      %4112 = vmatpush1.msra.mxu0 0.0
      %4113 = vmatprep.subr.mxu0 0.0
      %4114 = vmatpush1.msra.mxu0 0.0
      %4115 = vmatprep.subr.mxu0 0.0
      %4116 = vmatpush1.msra.mxu0 0.0
      %4117 = vmatprep.mubr.f32.mxu0 0.0
      %4118 = vmatmul.mubr.f32.gmra.mrb[0].mxu0 %v4035
      %v4119 = vpop.f32.mrb[0].mxu0
      %v4120 = vadd.f32 0.0, %v4119
      %v4121 = vpop.f32.mrb[0].mxu0
      %4122 = vmatprep.mubr.f32.mxu0 0.0
      %4123 = vmatmul.mubr.f32.gmra.mrb[0].mxu0 %v4036
      %v4124 = vpop.f32.mrb[0].mxu0
      %v4125 = vadd.f32 0.0, %v4124
      %v4126 = vpop.f32.mrb[0].mxu0
      %4127 = vdwg.mxu0
      %4128 = vst [vmem:[%s359] sm:$0xff] %v4120
      %4129 = vst [vmem:[%s359 + $0x8] sm:$0xff] %v4125
      %p4130 = scmp.lt.s32.totalorder %s21, 1
      %s4131 = scalar_select %p4130, %s21, 1
      %s4132 = smul.addr %s4131, 2
      %s4133 = smul.addr %s4132, 8
      %s4134 = scalar_lea.vmem %s10, %s4133
      // Predicated region
      $region61: #{feature_extractor_forward.1} parent=59 // pred_check
        %p4135 = pneg %p254
      $region62: #{feature_extractor_forward.1} parent=59 // pred_check_branch
        %4137 = sbr.rel (%p4135) target = $region64
      $region63: #{feature_extractor_forward.1} parent=59 // pred_region
        _
      $region64: #{feature_extractor_forward.1} parent=59 // pred_fallthru
        _
    $region60: #{feature_extractor_forward.1} parent=5 // pred_fallthru
      _
    %p4138 = scmp.le.s32.totalorder 2, %s16
    // Predicated region
    $region65: #{feature_extractor_forward.1} parent=5 // pred_check
      %p4139 = pneg %p4138
    $region66: #{feature_extractor_forward.1} parent=5 // pred_check_branch
      %4141 = sbr.rel (%p4139) target = $region68
    $region67: #{feature_extractor_forward.1} parent=5 // pred_region
      %s4142 = ssub.s32 %s16, 2
      // Predicated region
      $region69: #{feature_extractor_forward.1} parent=67 // pred_check
        %p4143 = pneg %p260
      $region70: #{feature_extractor_forward.1} parent=67 // pred_check_branch
        %4145 = sbr.rel (%p4143) target = $region72
      $region71: #{feature_extractor_forward.1} parent=67 // pred_region
        %p4146 = scmp.lt.s32.totalorder %s22, 1
        %s4147 = scalar_select %p4146, %s22, 1
        %s4148 = smul.addr %s4147, 2
        %s4149 = smul.addr %s4148, 8
        %s4150 = scalar_lea.vmem %s10, %s4149
      $region72: #{feature_extractor_forward.1} parent=67 // pred_fallthru
        _
    $region68: #{feature_extractor_forward.1} parent=5 // pred_fallthru
      _
  $region6: #{feature_extractor_forward.1} parent=0 // loop_footer
    %s20 = sadd.s32 1, %s16
  $region7: #{feature_extractor_forward.1} parent=0 // loop_footer_branch
    %15 = sbr.rel target = $region3
  $region8: #{feature_extractor_forward.1} parent=0 // loop_exit
    _

</llo_original>
